<compile_context>
chip_gen: v7x
topology: tpu7x:2x2x1
jax: 0.10.0
libtpu: 0.0.40
codegen_flags: <defaults>
</compile_context>

<pallas_src>
import numpy as np
import jax
import jax.numpy as jnp
from jax import lax
from jax.experimental import pallas as pl
from jax.experimental.pallas import tpu as pltpu


# ----------------------- StagerNet hyper-parameters (small) -----------------
BATCH = 2
N_CHANNELS = 4            # EEG channels
SFREQ = 32.0              # small sampling frequency -> small shapes
N_CONV_CHS = 8
N_CLASSES = 5

TIME_CONV_SIZE = int(np.ceil(0.25 * SFREQ))   # 8
MAX_POOL_SIZE = int(np.ceil(0.05 * SFREQ))    # 2
PAD_SIZE = int(np.ceil(0.125 * SFREQ))        # 4
INPUT_SIZE = int(np.ceil(5.0 * SFREQ))        # 160

# Derived feature-extractor output sizes (identical to torch's shape math).
_TP1 = INPUT_SIZE + 2 * PAD_SIZE                          # 168 padded length, conv1
_T1 = _TP1 - TIME_CONV_SIZE + 1                           # 161
_T1P = _T1 // MAX_POOL_SIZE                               # 80
_TP2 = _T1P + 2 * PAD_SIZE                                # 88  padded length, conv2
_T2 = _TP2 - TIME_CONV_SIZE + 1                           # 81
_T2P = _T2 // MAX_POOL_SIZE                               # 40
LEN_LAST_LAYER = N_CONV_CHS * N_CHANNELS * _T2P           # 1280

# Fused-kernel layout constants.
ROWS0 = BATCH * N_CHANNELS                                # 8  rows after spatial conv
ROW_GRP = N_CONV_CHS * N_CHANNELS                         # 32 rows per batch element
ROWS = BATCH * ROW_GRP                                    # 64 rows after conv1/conv2
FC_COLS = N_CLASSES * ROW_GRP                             # 160 = (class, row) columns
FC_PAD = 128                                              # lane-dense padded class dim


# ------------------------- in-kernel selector helpers ------------------------
def _pool_selectors(t_in, t_out):
    """0/1 matrices selecting even / odd time positions (maxpool by 2)."""
    rows = lax.broadcasted_iota(jnp.int32, (t_in, t_out), 0)
    cols = lax.broadcasted_iota(jnp.int32, (t_in, t_out), 1)
    even = jnp.where(rows == 2 * cols, 1.0, 0.0).astype(jnp.float32)
    odd = jnp.where(rows == 2 * cols + 1, 1.0, 0.0).astype(jnp.float32)
    return even, odd


def _block_eye(shape, group, groups_on_rows):
    """sel[i, j] = 1 iff (i // group == j)  [groups_on_rows]
                 or (j // group == i)       [otherwise]."""
    r = lax.broadcasted_iota(jnp.int32, shape, 0)
    c = lax.broadcasted_iota(jnp.int32, shape, 1)
    if groups_on_rows:
        cond = jnp.logical_and(r >= c * group, r < (c + 1) * group)
    else:
        cond = jnp.logical_and(c >= r * group, c < (r + 1) * group)
    return jnp.where(cond, 1.0, 0.0).astype(jnp.float32)


def _mod_diag_mask(shape, group):
    """mask[i, j] = 1 iff (i % group == j % group); group is a power of 2."""
    r = lax.broadcasted_iota(jnp.int32, shape, 0)
    c = lax.broadcasted_iota(jnp.int32, shape, 1)
    cond = jnp.bitwise_and(r, group - 1) == jnp.bitwise_and(c, group - 1)
    return jnp.where(cond, 1.0, 0.0).astype(jnp.float32)


# --------------------------------- kernel ------------------------------------
def stagernet_fused_kernel(x_ref, wsp_ref, bsp_ref, w1_ref, b1_ref,
                           w2_ref, b2_ref, wfc_ref, bfc_ref,
                           o_ref, h0pad_ref, h1pad_ref):
    f32 = jnp.float32

    # ---- 1) spatial conv: channel mixing as a single MXU matmul -------------
    # x_ref: (B*C, T); wsp_ref: (B*C, B*C) = I_B (x) W_sp; bsp_ref: (B*C, 1)
    h0 = jnp.dot(wsp_ref[...], x_ref[...], preferred_element_type=f32) + bsp_ref[...]

    # ---- 2) zero-pad in time inside VMEM (no HBM round trip) ----------------
    h0pad_ref[...] = jnp.zeros_like(h0pad_ref)
    h0pad_ref[:, PAD_SIZE:PAD_SIZE + INPUT_SIZE] = h0

    # ---- 3) temporal conv1 as K accumulated MXU matmuls ---------------------
    # w1_ref[k]: (B*F*C, B*C) = I_B (x) w1[:, 0, k] (x) I_C
    acc1 = jnp.zeros((ROWS, _T1), f32)
    for k in range(TIME_CONV_SIZE):
        acc1 = acc1 + jnp.dot(w1_ref[k], h0pad_ref[:, k:k + _T1],
                              preferred_element_type=f32)
    h1 = jnp.maximum(acc1 + b1_ref[...], 0.0)                      # bias + ReLU

    # ---- 4) maxpool(2) via even/odd selection matmuls (no lane-split) -------
    s1e, s1o = _pool_selectors(_T1, _T1P)
    h1p = jnp.maximum(jnp.dot(h1, s1e, preferred_element_type=f32),
                      jnp.dot(h1, s1o, preferred_element_type=f32))  # (64, 80)

    # ---- 5) pad pooled activations for conv2 --------------------------------
    h1pad_ref[...] = jnp.zeros_like(h1pad_ref)
    h1pad_ref[:, PAD_SIZE:PAD_SIZE + _T1P] = h1p

    # ---- 6) temporal conv2: K accumulated (64,64)@(64,81) MXU matmuls -------
    # w2_ref[k]: (B*F*C, B*F*C) = I_B (x) w2[:, :, k] (x) I_C
    acc2 = jnp.zeros((ROWS, _T2), f32)
    for k in range(TIME_CONV_SIZE):
        acc2 = acc2 + jnp.dot(w2_ref[k], h1pad_ref[:, k:k + _T2],
                              preferred_element_type=f32)
    h2 = jnp.maximum(acc2 + b2_ref[...], 0.0)
    s2e, s2o = _pool_selectors(_T2, _T2P)
    h2p = jnp.maximum(jnp.dot(h2, s2e, preferred_element_type=f32),
                      jnp.dot(h2, s2o, preferred_element_type=f32))  # (64, 40)

    # ---- 7) final linear without in-kernel flatten ---------------------------
    # h2p rows are (b, f, c) = b*32 + r with r = f*C + c; flatten order matches
    # torch's (F, C, T) flatten.  wfc_ref: (T2P, n*32 + r) rearranged FC weight.
    m = jnp.dot(h2p, wfc_ref[...], preferred_element_type=f32)       # (64, 160)
    e = m * _mod_diag_mask((ROWS, FC_COLS), ROW_GRP)                 # keep r == r'
    a_sel = _block_eye((BATCH, ROWS), ROW_GRP, groups_on_rows=False)  # (2, 64)
    c_sel = _block_eye((FC_COLS, FC_PAD), ROW_GRP, groups_on_rows=True)  # (160, 128)
    logits = jnp.dot(jnp.dot(a_sel, e, preferred_element_type=f32),
                     c_sel, preferred_element_type=f32) + bfc_ref[...]
    o_ref[...] = logits.astype(o_ref.dtype)                          # (B, 128)


# ------------------------------- wrappers ------------------------------------
def prepare_params(p):
    """Host-side (one-time) repack of the torch-layout weights for the fused kernel."""
    f32 = jnp.float32
    eye_b = jnp.eye(BATCH, dtype=f32)
    eye_c = jnp.eye(N_CHANNELS, dtype=f32)
    w_sp_big = jnp.kron(eye_b, p["w_sp"])                                  # (8, 8)
    b_sp_big = jnp.tile(p["b_sp"], (BATCH, 1))                             # (8, 1)
    w1_big = jnp.stack([jnp.kron(eye_b, jnp.kron(p["w1"][:, 0, k:k + 1], eye_c))
                        for k in range(TIME_CONV_SIZE)])                   # (K, 64, 8)
    b1_big = jnp.tile(jnp.kron(p["b1"], jnp.ones((N_CHANNELS, 1), f32)),
                      (BATCH, 1))                                          # (64, 1)
    w2_big = jnp.stack([jnp.kron(eye_b, jnp.kron(p["w2"][:, :, k], eye_c))
                        for k in range(TIME_CONV_SIZE)])                   # (K, 64, 64)
    b2_big = jnp.tile(jnp.kron(p["b2"], jnp.ones((N_CHANNELS, 1), f32)),
                      (BATCH, 1))                                          # (64, 1)
    # FC weight: (D, n_cls) with D = (f*C + c)*T2P + t  ->  (T2P, n*32 + r)
    w_fc = p["w_fc_t"].reshape(ROW_GRP, _T2P, N_CLASSES)
    w_fc_T = jnp.transpose(w_fc, (1, 2, 0)).reshape(_T2P, FC_COLS)         # (40, 160)
    b_fc_pad = jnp.pad(p["b_fc"], ((0, 0), (0, FC_PAD - N_CLASSES)))       # (1, 128)
    return dict(w_sp_big=w_sp_big, b_sp_big=b_sp_big, w1_big=w1_big, b1_big=b1_big,
                w2_big=w2_big, b2_big=b2_big, w_fc_T=w_fc_T, b_fc_pad=b_fc_pad)


@jax.jit
def stagernet_forward(x, packed):
    """x: (B, n_channels, n_times) -> logits (B, n_classes). One fused pallas_call."""
    B = x.shape[0]
    x2d = x.reshape(B * N_CHANNELS, INPUT_SIZE)      # row = b*C + c (free HBM reshape)
    out = pl.pallas_call(
        stagernet_fused_kernel,
        out_shape=jax.ShapeDtypeStruct((B, FC_PAD), jnp.float32),
        grid=(1,),                                   # single step: whole batch in VMEM
        in_specs=[
            pl.BlockSpec((B * N_CHANNELS, INPUT_SIZE), lambda i: (0, 0)),
            pl.BlockSpec((ROWS0, ROWS0), lambda i: (0, 0)),
            pl.BlockSpec((ROWS0, 1), lambda i: (0, 0)),
            pl.BlockSpec((TIME_CONV_SIZE, ROWS, ROWS0), lambda i: (0, 0, 0)),
            pl.BlockSpec((ROWS, 1), lambda i: (0, 0)),
            pl.BlockSpec((TIME_CONV_SIZE, ROWS, ROWS), lambda i: (0, 0, 0)),
            pl.BlockSpec((ROWS, 1), lambda i: (0, 0)),
            pl.BlockSpec((_T2P, FC_COLS), lambda i: (0, 0)),
            pl.BlockSpec((1, FC_PAD), lambda i: (0, 0)),
        ],
        out_specs=pl.BlockSpec((B, FC_PAD), lambda i: (0, 0)),
        scratch_shapes=[
            pltpu.VMEM((ROWS0, _TP1), jnp.float32),   # padded spatial-conv output
            pltpu.VMEM((ROWS, _TP2), jnp.float32),    # padded pooled conv1 output
        ],
        compiler_params=pltpu.CompilerParams(dimension_semantics=("arbitrary",)),
    )(x2d, packed["w_sp_big"], packed["b_sp_big"], packed["w1_big"],
      packed["b1_big"], packed["w2_big"], packed["b2_big"],
      packed["w_fc_T"], packed["b_fc_pad"])
    # TODO(synk): nn.Dropout(p=0.5) is stochastic; treated as identity (inference mode).
    return out[:, :N_CLASSES]                        # drop lane-padding of the classes


# ------------------------- pure-JAX reference (check) ------------------------
def reference_forward(x, params):
    prec = jax.lax.Precision.HIGHEST
    B, C, T = x.shape
    x4 = x[:, None, :, :]
    w_sp4 = params["w_sp"][:, None, :, None]                       # (C,1,C,1)
    y = jax.lax.conv_general_dilated(
        x4, w_sp4, (1, 1), "VALID",
        dimension_numbers=("NCHW", "OIHW", "NCHW"), precision=prec)
    y = y + params["b_sp"].reshape(1, C, 1, 1)
    y = jnp.transpose(y, (0, 2, 1, 3))                             # (B,1,C,T)

    def conv_block(h, w, b):
        F = w.shape[0]
        w4 = w[:, :, None, :]                                      # (F,G,1,K)
        h = jax.lax.conv_general_dilated(
            h, w4, (1, 1), [(0, 0), (PAD_SIZE, PAD_SIZE)],
            dimension_numbers=("NCHW", "OIHW", "NCHW"), precision=prec)
        h = jnp.maximum(h + b.reshape(1, F, 1, 1), 0.0)
        Tc = h.shape[-1]
        Tp = Tc // MAX_POOL_SIZE
        h = h[..., : Tp * MAX_POOL_SIZE].reshape(
            h.shape[0], F, h.shape[2], Tp, MAX_POOL_SIZE)
        return jnp.max(h, axis=-1)

    h = conv_block(y, params["w1"], params["b1"])
    h = conv_block(h, params["w2"], params["b2"])
    feats = h.reshape(B, -1)
    return jnp.dot(feats, params["w_fc_t"], precision=prec) + params["b_fc"]


# ---------------------------------- main -------------------------------------
if __name__ == "__main__":
    key = jax.random.PRNGKey(0)
    ks = jax.random.split(key, 9)
    params = dict(
        # spatial_conv: Conv2d(1, C, (C,1)) -> weight (C,1,C,1) stored as (C,C)
        w_sp=jax.random.normal(ks[0], (N_CHANNELS, N_CHANNELS), jnp.float32) * 0.5,
        b_sp=jax.random.normal(ks[1], (N_CHANNELS, 1), jnp.float32) * 0.1,
        # conv1: Conv2d(1, F, (1,K)) -> weight (F,1,1,K) stored as (F,1,K)
        w1=jax.random.normal(ks[2], (N_CONV_CHS, 1, TIME_CONV_SIZE), jnp.float32) * 0.5,
        b1=jax.random.normal(ks[3], (N_CONV_CHS, 1), jnp.float32) * 0.1,
        # conv2: Conv2d(F, F, (1,K)) -> weight (F,F,1,K) stored as (F,F,K)
        w2=jax.random.normal(ks[4], (N_CONV_CHS, N_CONV_CHS, TIME_CONV_SIZE),
                             jnp.float32) * 0.5,
        b2=jax.random.normal(ks[5], (N_CONV_CHS, 1), jnp.float32) * 0.1,
        # fc: Linear(len_last_layer, n_classes) -> stored transposed (D, n_classes)
        w_fc_t=jax.random.normal(ks[6], (LEN_LAST_LAYER, N_CLASSES), jnp.float32) * 0.05,
        b_fc=jax.random.normal(ks[7], (1, N_CLASSES), jnp.float32) * 0.1,
    )
    x = jax.random.normal(ks[8], (BATCH, N_CHANNELS, INPUT_SIZE), jnp.float32)

    packed = prepare_params(params)                     # one-time weight repack
    out = jax.block_until_ready(stagernet_forward(x, packed))
    ref = jax.block_until_ready(reference_forward(x, params))

    assert out.shape == (BATCH, N_CLASSES), out.shape
    np.testing.assert_allclose(np.asarray(out), np.asarray(ref), rtol=1e-3, atol=1e-3)
    print("KERNEL_OK")
</pallas_src>

<mosaic_0001>
module attributes {stable_mosaic.version = 11 : i64} {
  func.func @stagernet_fused_kernel(%arg0: i32, %arg1: memref<8x160xf32, #tpu.memory_space<vmem>>, %arg2: memref<8x8xf32, #tpu.memory_space<vmem>>, %arg3: memref<8x1xf32, #tpu.memory_space<vmem>>, %arg4: memref<8x64x8xf32, #tpu.memory_space<vmem>>, %arg5: memref<64x1xf32, #tpu.memory_space<vmem>>, %arg6: memref<8x64x64xf32, #tpu.memory_space<vmem>>, %arg7: memref<64x1xf32, #tpu.memory_space<vmem>>, %arg8: memref<40x160xf32, #tpu.memory_space<vmem>>, %arg9: memref<1x128xf32, #tpu.memory_space<vmem>>, %arg10: memref<2x128xf32, #tpu.memory_space<vmem>>, %arg11: memref<8x168xf32, #tpu.memory_space<vmem>>, %arg12: memref<64x88xf32, #tpu.memory_space<vmem>>) attributes {dimension_semantics = [#tpu.dimension_semantics<arbitrary>], iteration_bounds = array<i64: 1>, scalar_prefetch = 0 : i64, scratch_operands = 2 : i64, tpu.core_type = #tpu.core_type<tc>, window_params = [{pipeline_mode = #tpu.pipeline_mode<synchronous>, transform_indices = @transform_0, window_bounds = array<i64: 8, 160>}, {pipeline_mode = #tpu.pipeline_mode<synchronous>, transform_indices = @transform_1, window_bounds = array<i64: 8, 8>}, {pipeline_mode = #tpu.pipeline_mode<synchronous>, transform_indices = @transform_2, window_bounds = array<i64: 8, 1>}, {pipeline_mode = #tpu.pipeline_mode<synchronous>, transform_indices = @transform_3, window_bounds = array<i64: 8, 64, 8>}, {pipeline_mode = #tpu.pipeline_mode<synchronous>, transform_indices = @transform_4, window_bounds = array<i64: 64, 1>}, {pipeline_mode = #tpu.pipeline_mode<synchronous>, transform_indices = @transform_5, window_bounds = array<i64: 8, 64, 64>}, {pipeline_mode = #tpu.pipeline_mode<synchronous>, transform_indices = @transform_6, window_bounds = array<i64: 64, 1>}, {pipeline_mode = #tpu.pipeline_mode<synchronous>, transform_indices = @transform_7, window_bounds = array<i64: 40, 160>}, {pipeline_mode = #tpu.pipeline_mode<synchronous>, transform_indices = @transform_8, window_bounds = array<i64: 1, 128>}, {pipeline_mode = #tpu.pipeline_mode<synchronous>, transform_indices = @transform_9, window_bounds = array<i64: 2, 128>}]} {
    %c0 = arith.constant 0 : index
    %c0_0 = arith.constant 0 : index
    %0 = vector.load %arg2[%c0, %c0_0] : memref<8x8xf32, #tpu.memory_space<vmem>>, vector<8x8xf32>
    %c0_1 = arith.constant 0 : index
    %c0_2 = arith.constant 0 : index
    %1 = vector.load %arg1[%c0_1, %c0_2] : memref<8x160xf32, #tpu.memory_space<vmem>>, vector<8x160xf32>
    %cst = arith.constant dense<0.000000e+00> : vector<8x160xf32>
    %2 = tpu.matmul %0, %1, %cst {dimension_numbers = #tpu.dot_dimension_numbers<[1], [0], [0], [1], [0, 0, 1, 1], [], []>} : vector<8x8xf32>, vector<8x160xf32>, vector<8x160xf32> -> vector<8x160xf32>
    %c0_3 = arith.constant 0 : index
    %c0_4 = arith.constant 0 : index
    %3 = vector.load %arg3[%c0_3, %c0_4] : memref<8x1xf32, #tpu.memory_space<vmem>>, vector<8x1xf32>
    %4 = vector.broadcast %3 : vector<8x1xf32> to vector<8x160xf32>
    %5 = arith.addf %2, %4 : vector<8x160xf32>
    %cst_5 = arith.constant 0.000000e+00 : f32
    %6 = vector.broadcast %cst_5 : f32 to vector<8x168xf32>
    %c0_6 = arith.constant 0 : index
    %c0_7 = arith.constant 0 : index
    %7 = vector.load %arg11[%c0_6, %c0_7] : memref<8x168xf32, #tpu.memory_space<vmem>>, vector<8x168xf32>
    tpu.vector_store %arg11[%c0_6, %c0_7], %6 {strides = array<i32>} : memref<8x168xf32, #tpu.memory_space<vmem>>, vector<8x168xf32>,
    %c0_8 = arith.constant 0 : index
    %c4 = arith.constant 4 : index
    %8 = vector.load %arg11[%c0_8, %c4] : memref<8x168xf32, #tpu.memory_space<vmem>>, vector<8x160xf32>
    tpu.vector_store %arg11[%c0_8, %c4], %5 {strides = array<i32>} : memref<8x168xf32, #tpu.memory_space<vmem>>, vector<8x160xf32>,
    %cst_9 = arith.constant 0.000000e+00 : f32
    %9 = vector.broadcast %cst_9 : f32 to vector<64x161xf32>
    %c0_10 = arith.constant 0 : index
    %c0_11 = arith.constant 0 : index
    %c0_12 = arith.constant 0 : index
    %10 = vector.load %arg4[%c0_10, %c0_11, %c0_12] : memref<8x64x8xf32, #tpu.memory_space<vmem>>, vector<1x64x8xf32>
    %11 = vector.shape_cast %10 : vector<1x64x8xf32> to vector<64x8xf32>
    %c0_13 = arith.constant 0 : index
    %c0_14 = arith.constant 0 : index
    %12 = vector.load %arg11[%c0_13, %c0_14] : memref<8x168xf32, #tpu.memory_space<vmem>>, vector<8x161xf32>
    %cst_15 = arith.constant dense<0.000000e+00> : vector<64x161xf32>
    %13 = tpu.matmul %11, %12, %cst_15 {dimension_numbers = #tpu.dot_dimension_numbers<[1], [0], [0], [1], [0, 0, 1, 1], [], []>} : vector<64x8xf32>, vector<8x161xf32>, vector<64x161xf32> -> vector<64x161xf32>
    %14 = arith.addf %9, %13 : vector<64x161xf32>
    %c1 = arith.constant 1 : index
    %c0_16 = arith.constant 0 : index
    %c0_17 = arith.constant 0 : index
    %15 = vector.load %arg4[%c1, %c0_16, %c0_17] : memref<8x64x8xf32, #tpu.memory_space<vmem>>, vector<1x64x8xf32>
    %16 = vector.shape_cast %15 : vector<1x64x8xf32> to vector<64x8xf32>
    %c0_18 = arith.constant 0 : index
    %c1_19 = arith.constant 1 : index
    %17 = vector.load %arg11[%c0_18, %c1_19] : memref<8x168xf32, #tpu.memory_space<vmem>>, vector<8x161xf32>
    %cst_20 = arith.constant dense<0.000000e+00> : vector<64x161xf32>
    %18 = tpu.matmul %16, %17, %cst_20 {dimension_numbers = #tpu.dot_dimension_numbers<[1], [0], [0], [1], [0, 0, 1, 1], [], []>} : vector<64x8xf32>, vector<8x161xf32>, vector<64x161xf32> -> vector<64x161xf32>
    %19 = arith.addf %14, %18 : vector<64x161xf32>
    %c2 = arith.constant 2 : index
    %c0_21 = arith.constant 0 : index
    %c0_22 = arith.constant 0 : index
    %20 = vector.load %arg4[%c2, %c0_21, %c0_22] : memref<8x64x8xf32, #tpu.memory_space<vmem>>, vector<1x64x8xf32>
    %21 = vector.shape_cast %20 : vector<1x64x8xf32> to vector<64x8xf32>
    %c0_23 = arith.constant 0 : index
    %c2_24 = arith.constant 2 : index
    %22 = vector.load %arg11[%c0_23, %c2_24] : memref<8x168xf32, #tpu.memory_space<vmem>>, vector<8x161xf32>
    %cst_25 = arith.constant dense<0.000000e+00> : vector<64x161xf32>
    %23 = tpu.matmul %21, %22, %cst_25 {dimension_numbers = #tpu.dot_dimension_numbers<[1], [0], [0], [1], [0, 0, 1, 1], [], []>} : vector<64x8xf32>, vector<8x161xf32>, vector<64x161xf32> -> vector<64x161xf32>
    %24 = arith.addf %19, %23 : vector<64x161xf32>
    %c3 = arith.constant 3 : index
    %c0_26 = arith.constant 0 : index
    %c0_27 = arith.constant 0 : index
    %25 = vector.load %arg4[%c3, %c0_26, %c0_27] : memref<8x64x8xf32, #tpu.memory_space<vmem>>, vector<1x64x8xf32>
    %26 = vector.shape_cast %25 : vector<1x64x8xf32> to vector<64x8xf32>
    %c0_28 = arith.constant 0 : index
    %c3_29 = arith.constant 3 : index
    %27 = vector.load %arg11[%c0_28, %c3_29] : memref<8x168xf32, #tpu.memory_space<vmem>>, vector<8x161xf32>
    %cst_30 = arith.constant dense<0.000000e+00> : vector<64x161xf32>
    %28 = tpu.matmul %26, %27, %cst_30 {dimension_numbers = #tpu.dot_dimension_numbers<[1], [0], [0], [1], [0, 0, 1, 1], [], []>} : vector<64x8xf32>, vector<8x161xf32>, vector<64x161xf32> -> vector<64x161xf32>
    %29 = arith.addf %24, %28 : vector<64x161xf32>
    %c4_31 = arith.constant 4 : index
    %c0_32 = arith.constant 0 : index
    %c0_33 = arith.constant 0 : index
    %30 = vector.load %arg4[%c4_31, %c0_32, %c0_33] : memref<8x64x8xf32, #tpu.memory_space<vmem>>, vector<1x64x8xf32>
    %31 = vector.shape_cast %30 : vector<1x64x8xf32> to vector<64x8xf32>
    %c0_34 = arith.constant 0 : index
    %c4_35 = arith.constant 4 : index
    %32 = vector.load %arg11[%c0_34, %c4_35] : memref<8x168xf32, #tpu.memory_space<vmem>>, vector<8x161xf32>
    %cst_36 = arith.constant dense<0.000000e+00> : vector<64x161xf32>
    %33 = tpu.matmul %31, %32, %cst_36 {dimension_numbers = #tpu.dot_dimension_numbers<[1], [0], [0], [1], [0, 0, 1, 1], [], []>} : vector<64x8xf32>, vector<8x161xf32>, vector<64x161xf32> -> vector<64x161xf32>
    %34 = arith.addf %29, %33 : vector<64x161xf32>
    %c5 = arith.constant 5 : index
    %c0_37 = arith.constant 0 : index
    %c0_38 = arith.constant 0 : index
    %35 = vector.load %arg4[%c5, %c0_37, %c0_38] : memref<8x64x8xf32, #tpu.memory_space<vmem>>, vector<1x64x8xf32>
    %36 = vector.shape_cast %35 : vector<1x64x8xf32> to vector<64x8xf32>
    %c0_39 = arith.constant 0 : index
    %c5_40 = arith.constant 5 : index
    %37 = vector.load %arg11[%c0_39, %c5_40] : memref<8x168xf32, #tpu.memory_space<vmem>>, vector<8x161xf32>
    %cst_41 = arith.constant dense<0.000000e+00> : vector<64x161xf32>
    %38 = tpu.matmul %36, %37, %cst_41 {dimension_numbers = #tpu.dot_dimension_numbers<[1], [0], [0], [1], [0, 0, 1, 1], [], []>} : vector<64x8xf32>, vector<8x161xf32>, vector<64x161xf32> -> vector<64x161xf32>
    %39 = arith.addf %34, %38 : vector<64x161xf32>
    %c6 = arith.constant 6 : index
    %c0_42 = arith.constant 0 : index
    %c0_43 = arith.constant 0 : index
    %40 = vector.load %arg4[%c6, %c0_42, %c0_43] : memref<8x64x8xf32, #tpu.memory_space<vmem>>, vector<1x64x8xf32>
    %41 = vector.shape_cast %40 : vector<1x64x8xf32> to vector<64x8xf32>
    %c0_44 = arith.constant 0 : index
    %c6_45 = arith.constant 6 : index
    %42 = vector.load %arg11[%c0_44, %c6_45] : memref<8x168xf32, #tpu.memory_space<vmem>>, vector<8x161xf32>
    %cst_46 = arith.constant dense<0.000000e+00> : vector<64x161xf32>
    %43 = tpu.matmul %41, %42, %cst_46 {dimension_numbers = #tpu.dot_dimension_numbers<[1], [0], [0], [1], [0, 0, 1, 1], [], []>} : vector<64x8xf32>, vector<8x161xf32>, vector<64x161xf32> -> vector<64x161xf32>
    %44 = arith.addf %39, %43 : vector<64x161xf32>
    %c7 = arith.constant 7 : index
    %c0_47 = arith.constant 0 : index
    %c0_48 = arith.constant 0 : index
    %45 = vector.load %arg4[%c7, %c0_47, %c0_48] : memref<8x64x8xf32, #tpu.memory_space<vmem>>, vector<1x64x8xf32>
    %46 = vector.shape_cast %45 : vector<1x64x8xf32> to vector<64x8xf32>
    %c0_49 = arith.constant 0 : index
    %c7_50 = arith.constant 7 : index
    %47 = vector.load %arg11[%c0_49, %c7_50] : memref<8x168xf32, #tpu.memory_space<vmem>>, vector<8x161xf32>
    %cst_51 = arith.constant dense<0.000000e+00> : vector<64x161xf32>
    %48 = tpu.matmul %46, %47, %cst_51 {dimension_numbers = #tpu.dot_dimension_numbers<[1], [0], [0], [1], [0, 0, 1, 1], [], []>} : vector<64x8xf32>, vector<8x161xf32>, vector<64x161xf32> -> vector<64x161xf32>
    %49 = arith.addf %44, %48 : vector<64x161xf32>
    %c0_52 = arith.constant 0 : index
    %c0_53 = arith.constant 0 : index
    %50 = vector.load %arg5[%c0_52, %c0_53] : memref<64x1xf32, #tpu.memory_space<vmem>>, vector<64x1xf32>
    %51 = vector.broadcast %50 : vector<64x1xf32> to vector<64x161xf32>
    %52 = arith.addf %49, %51 : vector<64x161xf32>
    %cst_54 = arith.constant 0.000000e+00 : f32
    %53 = vector.broadcast %cst_54 : f32 to vector<64x161xf32>
    %54 = arith.maximumf %52, %53 : vector<64x161xf32>
    %55 = tpu.iota {dimensions = array<i32: 0>} : vector<161x80xi32>
    %56 = tpu.iota {dimensions = array<i32: 1>} : vector<161x80xi32>
    %c2_i32 = arith.constant 2 : i32
    %57 = vector.broadcast %c2_i32 : i32 to vector<161x80xi32>
    %58 = arith.muli %57, %56 : vector<161x80xi32>
    %59 = arith.cmpi eq, %55, %58 : vector<161x80xi32>
    %cst_55 = arith.constant 1.000000e+00 : f32
    %cst_56 = arith.constant 0.000000e+00 : f32
    %60 = vector.broadcast %cst_55 : f32 to vector<161x80xf32>
    %61 = vector.broadcast %cst_56 : f32 to vector<161x80xf32>
    %62 = arith.select %59, %60, %61 : vector<161x80xi1>, vector<161x80xf32>
    %c2_i32_57 = arith.constant 2 : i32
    %63 = vector.broadcast %c2_i32_57 : i32 to vector<161x80xi32>
    %64 = arith.muli %63, %56 : vector<161x80xi32>
    %c1_i32 = arith.constant 1 : i32
    %65 = vector.broadcast %c1_i32 : i32 to vector<161x80xi32>
    %66 = arith.addi %64, %65 : vector<161x80xi32>
    %67 = arith.cmpi eq, %55, %66 : vector<161x80xi32>
    %cst_58 = arith.constant 1.000000e+00 : f32
    %cst_59 = arith.constant 0.000000e+00 : f32
    %68 = vector.broadcast %cst_58 : f32 to vector<161x80xf32>
    %69 = vector.broadcast %cst_59 : f32 to vector<161x80xf32>
    %70 = arith.select %67, %68, %69 : vector<161x80xi1>, vector<161x80xf32>
    %cst_60 = arith.constant dense<0.000000e+00> : vector<64x80xf32>
    %71 = tpu.matmul %54, %62, %cst_60 {dimension_numbers = #tpu.dot_dimension_numbers<[1], [0], [0], [1], [0, 0, 1, 1], [], []>} : vector<64x161xf32>, vector<161x80xf32>, vector<64x80xf32> -> vector<64x80xf32>
    %cst_61 = arith.constant dense<0.000000e+00> : vector<64x80xf32>
    %72 = tpu.matmul %54, %70, %cst_61 {dimension_numbers = #tpu.dot_dimension_numbers<[1], [0], [0], [1], [0, 0, 1, 1], [], []>} : vector<64x161xf32>, vector<161x80xf32>, vector<64x80xf32> -> vector<64x80xf32>
    %73 = arith.maximumf %71, %72 : vector<64x80xf32>
    %cst_62 = arith.constant 0.000000e+00 : f32
    %74 = vector.broadcast %cst_62 : f32 to vector<64x88xf32>
    %c0_63 = arith.constant 0 : index
    %c0_64 = arith.constant 0 : index
    %75 = vector.load %arg12[%c0_63, %c0_64] : memref<64x88xf32, #tpu.memory_space<vmem>>, vector<64x88xf32>
    tpu.vector_store %arg12[%c0_63, %c0_64], %74 {strides = array<i32>} : memref<64x88xf32, #tpu.memory_space<vmem>>, vector<64x88xf32>,
    %c0_65 = arith.constant 0 : index
    %c4_66 = arith.constant 4 : index
    %76 = vector.load %arg12[%c0_65, %c4_66] : memref<64x88xf32, #tpu.memory_space<vmem>>, vector<64x80xf32>
    tpu.vector_store %arg12[%c0_65, %c4_66], %73 {strides = array<i32>} : memref<64x88xf32, #tpu.memory_space<vmem>>, vector<64x80xf32>,
    %cst_67 = arith.constant 0.000000e+00 : f32
    %77 = vector.broadcast %cst_67 : f32 to vector<64x81xf32>
    %c0_68 = arith.constant 0 : index
    %c0_69 = arith.constant 0 : index
    %c0_70 = arith.constant 0 : index
    %78 = vector.load %arg6[%c0_68, %c0_69, %c0_70] : memref<8x64x64xf32, #tpu.memory_space<vmem>>, vector<1x64x64xf32>
    %79 = vector.shape_cast %78 : vector<1x64x64xf32> to vector<64x64xf32>
    %c0_71 = arith.constant 0 : index
    %c0_72 = arith.constant 0 : index
    %80 = vector.load %arg12[%c0_71, %c0_72] : memref<64x88xf32, #tpu.memory_space<vmem>>, vector<64x81xf32>
    %cst_73 = arith.constant dense<0.000000e+00> : vector<64x81xf32>
    %81 = tpu.matmul %79, %80, %cst_73 {dimension_numbers = #tpu.dot_dimension_numbers<[1], [0], [0], [1], [0, 0, 1, 1], [], []>} : vector<64x64xf32>, vector<64x81xf32>, vector<64x81xf32> -> vector<64x81xf32>
    %82 = arith.addf %77, %81 : vector<64x81xf32>
    %c1_74 = arith.constant 1 : index
    %c0_75 = arith.constant 0 : index
    %c0_76 = arith.constant 0 : index
    %83 = vector.load %arg6[%c1_74, %c0_75, %c0_76] : memref<8x64x64xf32, #tpu.memory_space<vmem>>, vector<1x64x64xf32>
    %84 = vector.shape_cast %83 : vector<1x64x64xf32> to vector<64x64xf32>
    %c0_77 = arith.constant 0 : index
    %c1_78 = arith.constant 1 : index
    %85 = vector.load %arg12[%c0_77, %c1_78] : memref<64x88xf32, #tpu.memory_space<vmem>>, vector<64x81xf32>
    %cst_79 = arith.constant dense<0.000000e+00> : vector<64x81xf32>
    %86 = tpu.matmul %84, %85, %cst_79 {dimension_numbers = #tpu.dot_dimension_numbers<[1], [0], [0], [1], [0, 0, 1, 1], [], []>} : vector<64x64xf32>, vector<64x81xf32>, vector<64x81xf32> -> vector<64x81xf32>
    %87 = arith.addf %82, %86 : vector<64x81xf32>
    %c2_80 = arith.constant 2 : index
    %c0_81 = arith.constant 0 : index
    %c0_82 = arith.constant 0 : index
    %88 = vector.load %arg6[%c2_80, %c0_81, %c0_82] : memref<8x64x64xf32, #tpu.memory_space<vmem>>, vector<1x64x64xf32>
    %89 = vector.shape_cast %88 : vector<1x64x64xf32> to vector<64x64xf32>
    %c0_83 = arith.constant 0 : index
    %c2_84 = arith.constant 2 : index
    %90 = vector.load %arg12[%c0_83, %c2_84] : memref<64x88xf32, #tpu.memory_space<vmem>>, vector<64x81xf32>
    %cst_85 = arith.constant dense<0.000000e+00> : vector<64x81xf32>
    %91 = tpu.matmul %89, %90, %cst_85 {dimension_numbers = #tpu.dot_dimension_numbers<[1], [0], [0], [1], [0, 0, 1, 1], [], []>} : vector<64x64xf32>, vector<64x81xf32>, vector<64x81xf32> -> vector<64x81xf32>
    %92 = arith.addf %87, %91 : vector<64x81xf32>
    %c3_86 = arith.constant 3 : index
    %c0_87 = arith.constant 0 : index
    %c0_88 = arith.constant 0 : index
    %93 = vector.load %arg6[%c3_86, %c0_87, %c0_88] : memref<8x64x64xf32, #tpu.memory_space<vmem>>, vector<1x64x64xf32>
    %94 = vector.shape_cast %93 : vector<1x64x64xf32> to vector<64x64xf32>
    %c0_89 = arith.constant 0 : index
    %c3_90 = arith.constant 3 : index
    %95 = vector.load %arg12[%c0_89, %c3_90] : memref<64x88xf32, #tpu.memory_space<vmem>>, vector<64x81xf32>
    %cst_91 = arith.constant dense<0.000000e+00> : vector<64x81xf32>
    %96 = tpu.matmul %94, %95, %cst_91 {dimension_numbers = #tpu.dot_dimension_numbers<[1], [0], [0], [1], [0, 0, 1, 1], [], []>} : vector<64x64xf32>, vector<64x81xf32>, vector<64x81xf32> -> vector<64x81xf32>
    %97 = arith.addf %92, %96 : vector<64x81xf32>
    %c4_92 = arith.constant 4 : index
    %c0_93 = arith.constant 0 : index
    %c0_94 = arith.constant 0 : index
    %98 = vector.load %arg6[%c4_92, %c0_93, %c0_94] : memref<8x64x64xf32, #tpu.memory_space<vmem>>, vector<1x64x64xf32>
    %99 = vector.shape_cast %98 : vector<1x64x64xf32> to vector<64x64xf32>
    %c0_95 = arith.constant 0 : index
    %c4_96 = arith.constant 4 : index
    %100 = vector.load %arg12[%c0_95, %c4_96] : memref<64x88xf32, #tpu.memory_space<vmem>>, vector<64x81xf32>
    %cst_97 = arith.constant dense<0.000000e+00> : vector<64x81xf32>
    %101 = tpu.matmul %99, %100, %cst_97 {dimension_numbers = #tpu.dot_dimension_numbers<[1], [0], [0], [1], [0, 0, 1, 1], [], []>} : vector<64x64xf32>, vector<64x81xf32>, vector<64x81xf32> -> vector<64x81xf32>
    %102 = arith.addf %97, %101 : vector<64x81xf32>
    %c5_98 = arith.constant 5 : index
    %c0_99 = arith.constant 0 : index
    %c0_100 = arith.constant 0 : index
    %103 = vector.load %arg6[%c5_98, %c0_99, %c0_100] : memref<8x64x64xf32, #tpu.memory_space<vmem>>, vector<1x64x64xf32>
    %104 = vector.shape_cast %103 : vector<1x64x64xf32> to vector<64x64xf32>
    %c0_101 = arith.constant 0 : index
    %c5_102 = arith.constant 5 : index
    %105 = vector.load %arg12[%c0_101, %c5_102] : memref<64x88xf32, #tpu.memory_space<vmem>>, vector<64x81xf32>
    %cst_103 = arith.constant dense<0.000000e+00> : vector<64x81xf32>
    %106 = tpu.matmul %104, %105, %cst_103 {dimension_numbers = #tpu.dot_dimension_numbers<[1], [0], [0], [1], [0, 0, 1, 1], [], []>} : vector<64x64xf32>, vector<64x81xf32>, vector<64x81xf32> -> vector<64x81xf32>
    %107 = arith.addf %102, %106 : vector<64x81xf32>
    %c6_104 = arith.constant 6 : index
    %c0_105 = arith.constant 0 : index
    %c0_106 = arith.constant 0 : index
    %108 = vector.load %arg6[%c6_104, %c0_105, %c0_106] : memref<8x64x64xf32, #tpu.memory_space<vmem>>, vector<1x64x64xf32>
    %109 = vector.shape_cast %108 : vector<1x64x64xf32> to vector<64x64xf32>
    %c0_107 = arith.constant 0 : index
    %c6_108 = arith.constant 6 : index
    %110 = vector.load %arg12[%c0_107, %c6_108] : memref<64x88xf32, #tpu.memory_space<vmem>>, vector<64x81xf32>
    %cst_109 = arith.constant dense<0.000000e+00> : vector<64x81xf32>
    %111 = tpu.matmul %109, %110, %cst_109 {dimension_numbers = #tpu.dot_dimension_numbers<[1], [0], [0], [1], [0, 0, 1, 1], [], []>} : vector<64x64xf32>, vector<64x81xf32>, vector<64x81xf32> -> vector<64x81xf32>
    %112 = arith.addf %107, %111 : vector<64x81xf32>
    %c7_110 = arith.constant 7 : index
    %c0_111 = arith.constant 0 : index
    %c0_112 = arith.constant 0 : index
    %113 = vector.load %arg6[%c7_110, %c0_111, %c0_112] : memref<8x64x64xf32, #tpu.memory_space<vmem>>, vector<1x64x64xf32>
    %114 = vector.shape_cast %113 : vector<1x64x64xf32> to vector<64x64xf32>
    %c0_113 = arith.constant 0 : index
    %c7_114 = arith.constant 7 : index
    %115 = vector.load %arg12[%c0_113, %c7_114] : memref<64x88xf32, #tpu.memory_space<vmem>>, vector<64x81xf32>
    %cst_115 = arith.constant dense<0.000000e+00> : vector<64x81xf32>
    %116 = tpu.matmul %114, %115, %cst_115 {dimension_numbers = #tpu.dot_dimension_numbers<[1], [0], [0], [1], [0, 0, 1, 1], [], []>} : vector<64x64xf32>, vector<64x81xf32>, vector<64x81xf32> -> vector<64x81xf32>
    %117 = arith.addf %112, %116 : vector<64x81xf32>
    %c0_116 = arith.constant 0 : index
    %c0_117 = arith.constant 0 : index
    %118 = vector.load %arg7[%c0_116, %c0_117] : memref<64x1xf32, #tpu.memory_space<vmem>>, vector<64x1xf32>
    %119 = vector.broadcast %118 : vector<64x1xf32> to vector<64x81xf32>
    %120 = arith.addf %117, %119 : vector<64x81xf32>
    %cst_118 = arith.constant 0.000000e+00 : f32
    %121 = vector.broadcast %cst_118 : f32 to vector<64x81xf32>
    %122 = arith.maximumf %120, %121 : vector<64x81xf32>
    %123 = tpu.iota {dimensions = array<i32: 0>} : vector<81x40xi32>
    %124 = tpu.iota {dimensions = array<i32: 1>} : vector<81x40xi32>
    %c2_i32_119 = arith.constant 2 : i32
    %125 = vector.broadcast %c2_i32_119 : i32 to vector<81x40xi32>
    %126 = arith.muli %125, %124 : vector<81x40xi32>
    %127 = arith.cmpi eq, %123, %126 : vector<81x40xi32>
    %cst_120 = arith.constant 1.000000e+00 : f32
    %cst_121 = arith.constant 0.000000e+00 : f32
    %128 = vector.broadcast %cst_120 : f32 to vector<81x40xf32>
    %129 = vector.broadcast %cst_121 : f32 to vector<81x40xf32>
    %130 = arith.select %127, %128, %129 : vector<81x40xi1>, vector<81x40xf32>
    %c2_i32_122 = arith.constant 2 : i32
    %131 = vector.broadcast %c2_i32_122 : i32 to vector<81x40xi32>
    %132 = arith.muli %131, %124 : vector<81x40xi32>
    %c1_i32_123 = arith.constant 1 : i32
    %133 = vector.broadcast %c1_i32_123 : i32 to vector<81x40xi32>
    %134 = arith.addi %132, %133 : vector<81x40xi32>
    %135 = arith.cmpi eq, %123, %134 : vector<81x40xi32>
    %cst_124 = arith.constant 1.000000e+00 : f32
    %cst_125 = arith.constant 0.000000e+00 : f32
    %136 = vector.broadcast %cst_124 : f32 to vector<81x40xf32>
    %137 = vector.broadcast %cst_125 : f32 to vector<81x40xf32>
    %138 = arith.select %135, %136, %137 : vector<81x40xi1>, vector<81x40xf32>
    %cst_126 = arith.constant dense<0.000000e+00> : vector<64x40xf32>
    %139 = tpu.matmul %122, %130, %cst_126 {dimension_numbers = #tpu.dot_dimension_numbers<[1], [0], [0], [1], [0, 0, 1, 1], [], []>} : vector<64x81xf32>, vector<81x40xf32>, vector<64x40xf32> -> vector<64x40xf32>
    %cst_127 = arith.constant dense<0.000000e+00> : vector<64x40xf32>
    %140 = tpu.matmul %122, %138, %cst_127 {dimension_numbers = #tpu.dot_dimension_numbers<[1], [0], [0], [1], [0, 0, 1, 1], [], []>} : vector<64x81xf32>, vector<81x40xf32>, vector<64x40xf32> -> vector<64x40xf32>
    %141 = arith.maximumf %139, %140 : vector<64x40xf32>
    %c0_128 = arith.constant 0 : index
    %c0_129 = arith.constant 0 : index
    %142 = vector.load %arg8[%c0_128, %c0_129] : memref<40x160xf32, #tpu.memory_space<vmem>>, vector<40x160xf32>
    %cst_130 = arith.constant dense<0.000000e+00> : vector<64x160xf32>
    %143 = tpu.matmul %141, %142, %cst_130 {dimension_numbers = #tpu.dot_dimension_numbers<[1], [0], [0], [1], [0, 0, 1, 1], [], []>} : vector<64x40xf32>, vector<40x160xf32>, vector<64x160xf32> -> vector<64x160xf32>
    %144 = tpu.iota {dimensions = array<i32: 0>} : vector<64x160xi32>
    %145 = tpu.iota {dimensions = array<i32: 1>} : vector<64x160xi32>
    %c31_i32 = arith.constant 31 : i32
    %146 = vector.broadcast %c31_i32 : i32 to vector<64x160xi32>
    %147 = arith.andi %144, %146 : vector<64x160xi32>
    %c31_i32_131 = arith.constant 31 : i32
    %148 = vector.broadcast %c31_i32_131 : i32 to vector<64x160xi32>
    %149 = arith.andi %145, %148 : vector<64x160xi32>
    %150 = arith.cmpi eq, %147, %149 : vector<64x160xi32>
    %cst_132 = arith.constant 1.000000e+00 : f32
    %cst_133 = arith.constant 0.000000e+00 : f32
    %151 = vector.broadcast %cst_132 : f32 to vector<64x160xf32>
    %152 = vector.broadcast %cst_133 : f32 to vector<64x160xf32>
    %153 = arith.select %150, %151, %152 : vector<64x160xi1>, vector<64x160xf32>
    %154 = arith.mulf %143, %153 : vector<64x160xf32>
    %155 = tpu.iota {dimensions = array<i32: 0>} : vector<2x64xi32>
    %156 = tpu.iota {dimensions = array<i32: 1>} : vector<2x64xi32>
    %c32_i32 = arith.constant 32 : i32
    %157 = vector.broadcast %c32_i32 : i32 to vector<2x64xi32>
    %158 = arith.muli %155, %157 : vector<2x64xi32>
    %159 = arith.cmpi sge, %156, %158 : vector<2x64xi32>
    %c1_i32_134 = arith.constant 1 : i32
    %160 = vector.broadcast %c1_i32_134 : i32 to vector<2x64xi32>
    %161 = arith.addi %155, %160 : vector<2x64xi32>
    %c32_i32_135 = arith.constant 32 : i32
    %162 = vector.broadcast %c32_i32_135 : i32 to vector<2x64xi32>
    %163 = arith.muli %161, %162 : vector<2x64xi32>
    %164 = arith.cmpi slt, %156, %163 : vector<2x64xi32>
    %165 = arith.andi %159, %164 : vector<2x64xi1>
    %cst_136 = arith.constant 1.000000e+00 : f32
    %cst_137 = arith.constant 0.000000e+00 : f32
    %166 = vector.broadcast %cst_136 : f32 to vector<2x64xf32>
    %167 = vector.broadcast %cst_137 : f32 to vector<2x64xf32>
    %168 = arith.select %165, %166, %167 : vector<2x64xi1>, vector<2x64xf32>
    %169 = tpu.iota {dimensions = array<i32: 0>} : vector<160x128xi32>
    %170 = tpu.iota {dimensions = array<i32: 1>} : vector<160x128xi32>
    %c32_i32_138 = arith.constant 32 : i32
    %171 = vector.broadcast %c32_i32_138 : i32 to vector<160x128xi32>
    %172 = arith.muli %170, %171 : vector<160x128xi32>
    %173 = arith.cmpi sge, %169, %172 : vector<160x128xi32>
    %c1_i32_139 = arith.constant 1 : i32
    %174 = vector.broadcast %c1_i32_139 : i32 to vector<160x128xi32>
    %175 = arith.addi %170, %174 : vector<160x128xi32>
    %c32_i32_140 = arith.constant 32 : i32
    %176 = vector.broadcast %c32_i32_140 : i32 to vector<160x128xi32>
    %177 = arith.muli %175, %176 : vector<160x128xi32>
    %178 = arith.cmpi slt, %169, %177 : vector<160x128xi32>
    %179 = arith.andi %173, %178 : vector<160x128xi1>
    %cst_141 = arith.constant 1.000000e+00 : f32
    %cst_142 = arith.constant 0.000000e+00 : f32
    %180 = vector.broadcast %cst_141 : f32 to vector<160x128xf32>
    %181 = vector.broadcast %cst_142 : f32 to vector<160x128xf32>
    %182 = arith.select %179, %180, %181 : vector<160x128xi1>, vector<160x128xf32>
    %cst_143 = arith.constant dense<0.000000e+00> : vector<2x160xf32>
    %183 = tpu.matmul %168, %154, %cst_143 {dimension_numbers = #tpu.dot_dimension_numbers<[1], [0], [0], [1], [0, 0, 1, 1], [], []>} : vector<2x64xf32>, vector<64x160xf32>, vector<2x160xf32> -> vector<2x160xf32>
    %cst_144 = arith.constant dense<0.000000e+00> : vector<2x128xf32>
    %184 = tpu.matmul %183, %182, %cst_144 {dimension_numbers = #tpu.dot_dimension_numbers<[1], [0], [0], [1], [0, 0, 1, 1], [], []>} : vector<2x160xf32>, vector<160x128xf32>, vector<2x128xf32> -> vector<2x128xf32>
    %c0_145 = arith.constant 0 : index
    %c0_146 = arith.constant 0 : index
    %185 = vector.load %arg9[%c0_145, %c0_146] : memref<1x128xf32, #tpu.memory_space<vmem>>, vector<1x128xf32>
    %186 = vector.broadcast %185 : vector<1x128xf32> to vector<2x128xf32>
    %187 = arith.addf %184, %186 : vector<2x128xf32>
    %c0_147 = arith.constant 0 : index
    %c0_148 = arith.constant 0 : index
    %188 = vector.load %arg10[%c0_147, %c0_148] : memref<2x128xf32, #tpu.memory_space<vmem>>, vector<2x128xf32>
    tpu.vector_store %arg10[%c0_147, %c0_148], %187 {strides = array<i32>} : memref<2x128xf32, #tpu.memory_space<vmem>>, vector<2x128xf32>,
    return
  }
  func.func @transform_0(%arg0: i32) -> (i32, i32) {
    %c0_i32 = arith.constant 0 : i32
    %c0_i32_0 = arith.constant 0 : i32
    %c0_i32_1 = arith.constant 0 : i32
    return %c0_i32, %c0_i32_0 : i32, i32
  }
  func.func @transform_1(%arg0: i32) -> (i32, i32) {
    %c0_i32 = arith.constant 0 : i32
    %c0_i32_0 = arith.constant 0 : i32
    %c0_i32_1 = arith.constant 0 : i32
    return %c0_i32, %c0_i32_0 : i32, i32
  }
  func.func @transform_2(%arg0: i32) -> (i32, i32) {
    %c0_i32 = arith.constant 0 : i32
    %c0_i32_0 = arith.constant 0 : i32
    %c0_i32_1 = arith.constant 0 : i32
    return %c0_i32, %c0_i32_0 : i32, i32
  }
  func.func @transform_3(%arg0: i32) -> (i32, i32, i32) {
    %c0_i32 = arith.constant 0 : i32
    %c0_i32_0 = arith.constant 0 : i32
    %c0_i32_1 = arith.constant 0 : i32
    %c0_i32_2 = arith.constant 0 : i32
    return %c0_i32, %c0_i32_0, %c0_i32_1 : i32, i32, i32
  }
  func.func @transform_4(%arg0: i32) -> (i32, i32) {
    %c0_i32 = arith.constant 0 : i32
    %c0_i32_0 = arith.constant 0 : i32
    %c0_i32_1 = arith.constant 0 : i32
    return %c0_i32, %c0_i32_0 : i32, i32
  }
  func.func @transform_5(%arg0: i32) -> (i32, i32, i32) {
    %c0_i32 = arith.constant 0 : i32
    %c0_i32_0 = arith.constant 0 : i32
    %c0_i32_1 = arith.constant 0 : i32
    %c0_i32_2 = arith.constant 0 : i32
    return %c0_i32, %c0_i32_0, %c0_i32_1 : i32, i32, i32
  }
  func.func @transform_6(%arg0: i32) -> (i32, i32) {
    %c0_i32 = arith.constant 0 : i32
    %c0_i32_0 = arith.constant 0 : i32
    %c0_i32_1 = arith.constant 0 : i32
    return %c0_i32, %c0_i32_0 : i32, i32
  }
  func.func @transform_7(%arg0: i32) -> (i32, i32) {
    %c0_i32 = arith.constant 0 : i32
    %c0_i32_0 = arith.constant 0 : i32
    %c0_i32_1 = arith.constant 0 : i32
    return %c0_i32, %c0_i32_0 : i32, i32
  }
  func.func @transform_8(%arg0: i32) -> (i32, i32) {
    %c0_i32 = arith.constant 0 : i32
    %c0_i32_0 = arith.constant 0 : i32
    %c0_i32_1 = arith.constant 0 : i32
    return %c0_i32, %c0_i32_0 : i32, i32
  }
  func.func @transform_9(%arg0: i32) -> (i32, i32) {
    %c0_i32 = arith.constant 0 : i32
    %c0_i32_0 = arith.constant 0 : i32
    %c0_i32_1 = arith.constant 0 : i32
    return %c0_i32, %c0_i32_0 : i32, i32
  }
}

</mosaic_0001>

<llo_original>
// kernel: stagernet_forward.1
$region0: #{stagernet_forward.1}
  #allocation0 [shape = 'u32[]', space=smem, size = 0x4, offset = 0x4, fixed_abs, tag = 'smem constant byte address 0x4 - core index']
  #allocation1 [shape = 'u32[144,128]{1,0:T(1,128)}', space=vmem, size = 0x12000, scoped, tag = 'internal scratch']
  #allocation2 [shape = 'f32[8,168]{1,0:T(8,128)}', space=vmem, size = 0x2000, scoped, tag = 'scratch operand']
  #allocation3 [shape = 'f32[64,88]{1,0:T(8,128)}', space=vmem, size = 0x8000, scoped, tag = 'scratch operand']
  %s0 = inlined_call_operand.vmem [shape: f32[8,160], index: 0, kind: input, shape index: {}]
  %s1 = inlined_call_operand.vmem [shape: f32[8,8], index: 1, kind: input, shape index: {}]
  %s2 = inlined_call_operand.vmem [shape: f32[8,1], index: 2, kind: input, shape index: {}]
  %s3 = inlined_call_operand.vmem [shape: f32[8,64,8], index: 3, kind: input, shape index: {}]
  %s4 = inlined_call_operand.vmem [shape: f32[64,1], index: 4, kind: input, shape index: {}]
  %s5 = inlined_call_operand.vmem [shape: f32[8,64,64], index: 5, kind: input, shape index: {}]
  %s6 = inlined_call_operand.vmem [shape: f32[64,1], index: 6, kind: input, shape index: {}]
  %s7 = inlined_call_operand.vmem [shape: f32[40,160], index: 7, kind: input, shape index: {}]
  %s8 = inlined_call_operand.vmem [shape: f32[1,128], index: 8, kind: input, shape index: {}]
  %s9 = inlined_call_operand.hbm [shape: f32[2,128], index: 9, kind: output, shape index: {}]
  %s10 = sld [smem:[#allocation0]]
  $region46: #{stagernet_forward.1} parent=0
    _
  %s12 = ssub.s32 1, %s10
  %s13 = scalar_select 0, %s12, %s10
  $region1: #{stagernet_forward.1} parent=0
    #allocation4 [shape = 'u8[1024]{0}', space=vmem, size = 0x400, scoped, tag = 'output window, operand 0, single buffered']
    #allocation5 [shape = 's32[1]{0}', space=sflag, size = 0x4, scoped, tag = 'scoped memory for stagernet_forward.1']
    %14 = vsyncpa [#allocation5], 0
    // Predicated region
    $region2: #{stagernet_forward.1} parent=1 // pred_check
      _
    $region3: #{stagernet_forward.1} parent=1 // pred_check_branch
      %16 = sbr.rel (0) target = $region5
    $region4: #{stagernet_forward.1} parent=1 // pred_region
      _
    $region5: #{stagernet_forward.1} parent=1 // pred_fallthru
      _
    // Predicated region
    $region6: #{stagernet_forward.1} parent=1 // pred_check
      _
    $region7: #{stagernet_forward.1} parent=1 // pred_check_branch
      %18 = sbr.rel (0) target = $region9
    $region8: #{stagernet_forward.1} parent=1 // pred_region
      _
    $region9: #{stagernet_forward.1} parent=1 // pred_fallthru
      _
    // Predicated region
    $region10: #{stagernet_forward.1} parent=1 // pred_check
      _
    $region11: #{stagernet_forward.1} parent=1 // pred_check_branch
      %20 = sbr.rel (0) target = $region13
    $region12: #{stagernet_forward.1} parent=1 // pred_region
      _
    $region13: #{stagernet_forward.1} parent=1 // pred_fallthru
      _
    // Predicated region
    $region14: #{stagernet_forward.1} parent=1 // pred_check
      _
    $region15: #{stagernet_forward.1} parent=1 // pred_check_branch
      %22 = sbr.rel (0) target = $region17
    $region16: #{stagernet_forward.1} parent=1 // pred_region
      _
    $region17: #{stagernet_forward.1} parent=1 // pred_fallthru
      _
    // Predicated region
    $region18: #{stagernet_forward.1} parent=1 // pred_check
      _
    $region19: #{stagernet_forward.1} parent=1 // pred_check_branch
      %24 = sbr.rel (0) target = $region21
    $region20: #{stagernet_forward.1} parent=1 // pred_region
      _
    $region21: #{stagernet_forward.1} parent=1 // pred_fallthru
      _
    // Predicated region
    $region22: #{stagernet_forward.1} parent=1 // pred_check
      _
    $region23: #{stagernet_forward.1} parent=1 // pred_check_branch
      %26 = sbr.rel (0) target = $region25
    $region24: #{stagernet_forward.1} parent=1 // pred_region
      _
    $region25: #{stagernet_forward.1} parent=1 // pred_fallthru
      _
    // Predicated region
    $region26: #{stagernet_forward.1} parent=1 // pred_check
      _
    $region27: #{stagernet_forward.1} parent=1 // pred_check_branch
      %28 = sbr.rel (0) target = $region29
    $region28: #{stagernet_forward.1} parent=1 // pred_region
      _
    $region29: #{stagernet_forward.1} parent=1 // pred_fallthru
      _
    // Predicated region
    $region30: #{stagernet_forward.1} parent=1 // pred_check
      _
    $region31: #{stagernet_forward.1} parent=1 // pred_check_branch
      %30 = sbr.rel (0) target = $region33
    $region32: #{stagernet_forward.1} parent=1 // pred_region
      _
    $region33: #{stagernet_forward.1} parent=1 // pred_fallthru
      _
    // Predicated region
    $region34: #{stagernet_forward.1} parent=1 // pred_check
      _
    $region35: #{stagernet_forward.1} parent=1 // pred_check_branch
      %32 = sbr.rel (0) target = $region37
    $region36: #{stagernet_forward.1} parent=1 // pred_region
      _
    $region37: #{stagernet_forward.1} parent=1 // pred_fallthru
      _
    %v33 = vld [vmem:[%s1] sm:$0xff]
    %v34 = vld [vmem:[%s0] sm:$0xff]
    %v35 = vld [vmem:[%s0 + $0x8] sm:$0xff]
    %v36 = vld [vmem:[%s2] sm:$0xff]
    %38 = vset.pattern.permute.xlu0 0
    %39 = vperm.xlu0 %38, %v36
    %v40 = vpop.permute.xlu0 %39
    %vm42 = vcmask 64512
    %v44 = vsel %vm42, %v33, 0
    %46 = vmatprep.subr.mxu0 %v35
    %47 = vmatpush1.msra.mxu0 %v34
    %48 = vmatprep.subr.mxu0 0.0
    %49 = vmatpush1.msra.mxu0 0.0
    %50 = vmatprep.subr.mxu0 0.0
    %51 = vmatpush1.msra.mxu0 0.0
    %52 = vmatprep.subr.mxu0 0.0
    %53 = vmatpush1.msra.mxu0 0.0
    %54 = vmatprep.subr.mxu0 0.0
    %55 = vmatpush1.msra.mxu0 0.0
    %56 = vmatprep.subr.mxu0 0.0
    %57 = vmatpush1.msra.mxu0 0.0
    %58 = vmatprep.subr.mxu0 0.0
    %59 = vmatpush1.msra.mxu0 0.0
    %60 = vmatprep.subr.mxu0 0.0
    %61 = vmatpush1.msra.mxu0 0.0
    %62 = vmatprep.subr.mxu0 0.0
    %63 = vmatpush1.msra.mxu0 0.0
    %64 = vmatprep.subr.mxu0 0.0
    %65 = vmatpush1.msra.mxu0 0.0
    %66 = vmatprep.subr.mxu0 0.0
    %67 = vmatpush1.msra.mxu0 0.0
    %68 = vmatprep.subr.mxu0 0.0
    %69 = vmatpush1.msra.mxu0 0.0
    %70 = vmatprep.subr.mxu0 0.0
    %71 = vmatpush1.msra.mxu0 0.0
    %72 = vmatprep.subr.mxu0 0.0
    %73 = vmatpush1.msra.mxu0 0.0
    %74 = vmatprep.subr.mxu0 0.0
    %75 = vmatpush1.msra.mxu0 0.0
    %76 = vmatprep.subr.mxu0 0.0
    %77 = vmatpush1.msra.mxu0 0.0
    %78 = vmatprep.subr.mxu0 0.0
    %79 = vmatpush1.msra.mxu0 0.0
    %80 = vmatprep.subr.mxu0 0.0
    %81 = vmatpush1.msra.mxu0 0.0
    %82 = vmatprep.subr.mxu0 0.0
    %83 = vmatpush1.msra.mxu0 0.0
    %84 = vmatprep.subr.mxu0 0.0
    %85 = vmatpush1.msra.mxu0 0.0
    %86 = vmatprep.subr.mxu0 0.0
    %87 = vmatpush1.msra.mxu0 0.0
    %88 = vmatprep.subr.mxu0 0.0
    %89 = vmatpush1.msra.mxu0 0.0
    %90 = vmatprep.subr.mxu0 0.0
    %91 = vmatpush1.msra.mxu0 0.0
    %92 = vmatprep.subr.mxu0 0.0
    %93 = vmatpush1.msra.mxu0 0.0
    %94 = vmatprep.subr.mxu0 0.0
    %95 = vmatpush1.msra.mxu0 0.0
    %96 = vmatprep.subr.mxu0 0.0
    %97 = vmatpush1.msra.mxu0 0.0
    %98 = vmatprep.subr.mxu0 0.0
    %99 = vmatpush1.msra.mxu0 0.0
    %100 = vmatprep.subr.mxu0 0.0
    %101 = vmatpush1.msra.mxu0 0.0
    %102 = vmatprep.subr.mxu0 0.0
    %103 = vmatpush1.msra.mxu0 0.0
    %104 = vmatprep.subr.mxu0 0.0
    %105 = vmatpush1.msra.mxu0 0.0
    %106 = vmatprep.subr.mxu0 0.0
    %107 = vmatpush1.msra.mxu0 0.0
    %108 = vmatprep.subr.mxu0 0.0
    %109 = vmatpush1.msra.mxu0 0.0
    %110 = vmatprep.mubr.f32.mxu0 0.0
    %111 = vmatmul.mubr.f32.gmra.mrb[0].mxu0 %v44
    %v112 = vpop.f32.mrb[0].mxu0
    %v113 = vadd.f32 %v40, %v112
    %v114 = vpop.f32.mrb[0].mxu0
    %v115 = vadd.f32 %v40, %v114
    %116 = vdwg.mxu0
    %117 = vst [vmem:[#allocation2] sm:$0xff] 0.0
    %vm118 = vcmask 326656
    %119 = vst.msk [vmem:[#allocation2 + $0x8] sm:$0xff] %vm118, 0.0
    %122 = vrot.lane.b32.xlu0 %v113, 4
    %v123 = vpop.permute.xlu0 %122
    %124 = vrot.lane.b32.xlu0 %v115, 4
    %v125 = vpop.permute.xlu0 %124
    %vm126 = vcmask 31744
    %v127 = vsel %vm126, %v123, %v125
    %vm130 = vcmask 1047584
    %131 = vst.msk [vmem:[#allocation2] sm:$0xff] %vm130, %v123
    %vm132 = vcmask 293888
    %133 = vst.msk [vmem:[#allocation2 + $0x8] sm:$0xff] %vm132, %v127
    %v134 = vld [vmem:[%s3] sm:$0xff]
    %v135 = vld [vmem:[%s3 + $0x8] sm:$0xff]
    %v136 = vld [vmem:[%s3 + $0x10] sm:$0xff]
    %v137 = vld [vmem:[%s3 + $0x18] sm:$0xff]
    %v138 = vld [vmem:[%s3 + $0x20] sm:$0xff]
    %v139 = vld [vmem:[%s3 + $0x28] sm:$0xff]
    %v140 = vld [vmem:[%s3 + $0x30] sm:$0xff]
    %v141 = vld [vmem:[%s3 + $0x38] sm:$0xff]
    %v142 = vld [vmem:[#allocation2] sm:$0xff]
    %v143 = vld [vmem:[#allocation2 + $0x8] sm:$0xff]
    %s144 = scalar_lea.vmem %s3, 64
    %v145 = vld [vmem:[%s144] sm:$0xff]
    %v146 = vld [vmem:[%s144 + $0x8] sm:$0xff]
    %v147 = vld [vmem:[%s144 + $0x10] sm:$0xff]
    %v148 = vld [vmem:[%s144 + $0x18] sm:$0xff]
    %v149 = vld [vmem:[%s144 + $0x20] sm:$0xff]
    %v150 = vld [vmem:[%s144 + $0x28] sm:$0xff]
    %v151 = vld [vmem:[%s144 + $0x30] sm:$0xff]
    %v152 = vld [vmem:[%s144 + $0x38] sm:$0xff]
    %155 = vrot.lane.b32.xlu0 %v142, 127
    %v156 = vpop.permute.xlu0 %155
    %157 = vrot.lane.b32.xlu0 %v143, 127
    %v158 = vpop.permute.xlu0 %157
    %vm159 = vcmask 1039360
    %v160 = vsel %vm159, %v156, %v158
    %v164 = vsel %vm42, %v145, 0
    %v167 = vsel %vm42, %v146, 0
    %v170 = vsel %vm42, %v147, 0
    %v173 = vsel %vm42, %v148, 0
    %v176 = vsel %vm42, %v149, 0
    %v179 = vsel %vm42, %v150, 0
    %v182 = vsel %vm42, %v151, 0
    %v185 = vsel %vm42, %v152, 0
    %187 = vmatprep.subr.mxu0 %v158
    %188 = vmatpush1.msra.mxu0 %v160
    %189 = vmatprep.subr.mxu0 0.0
    %190 = vmatpush1.msra.mxu0 0.0
    %191 = vmatprep.subr.mxu0 0.0
    %192 = vmatpush1.msra.mxu0 0.0
    %193 = vmatprep.subr.mxu0 0.0
    %194 = vmatpush1.msra.mxu0 0.0
    %195 = vmatprep.subr.mxu0 0.0
    %196 = vmatpush1.msra.mxu0 0.0
    %197 = vmatprep.subr.mxu0 0.0
    %198 = vmatpush1.msra.mxu0 0.0
    %199 = vmatprep.subr.mxu0 0.0
    %200 = vmatpush1.msra.mxu0 0.0
    %201 = vmatprep.subr.mxu0 0.0
    %202 = vmatpush1.msra.mxu0 0.0
    %203 = vmatprep.subr.mxu0 0.0
    %204 = vmatpush1.msra.mxu0 0.0
    %205 = vmatprep.subr.mxu0 0.0
    %206 = vmatpush1.msra.mxu0 0.0
    %207 = vmatprep.subr.mxu0 0.0
    %208 = vmatpush1.msra.mxu0 0.0
    %209 = vmatprep.subr.mxu0 0.0
    %210 = vmatpush1.msra.mxu0 0.0
    %211 = vmatprep.subr.mxu0 0.0
    %212 = vmatpush1.msra.mxu0 0.0
    %213 = vmatprep.subr.mxu0 0.0
    %214 = vmatpush1.msra.mxu0 0.0
    %215 = vmatprep.subr.mxu0 0.0
    %216 = vmatpush1.msra.mxu0 0.0
    %217 = vmatprep.subr.mxu0 0.0
    %218 = vmatpush1.msra.mxu0 0.0
    %219 = vmatprep.subr.mxu0 0.0
    %220 = vmatpush1.msra.mxu0 0.0
    %221 = vmatprep.subr.mxu0 0.0
    %222 = vmatpush1.msra.mxu0 0.0
    %223 = vmatprep.subr.mxu0 0.0
    %224 = vmatpush1.msra.mxu0 0.0
    %225 = vmatprep.subr.mxu0 0.0
    %226 = vmatpush1.msra.mxu0 0.0
    %227 = vmatprep.subr.mxu0 0.0
    %228 = vmatpush1.msra.mxu0 0.0
    %229 = vmatprep.subr.mxu0 0.0
    %230 = vmatpush1.msra.mxu0 0.0
    %231 = vmatprep.subr.mxu0 0.0
    %232 = vmatpush1.msra.mxu0 0.0
    %233 = vmatprep.subr.mxu0 0.0
    %234 = vmatpush1.msra.mxu0 0.0
    %235 = vmatprep.subr.mxu0 0.0
    %236 = vmatpush1.msra.mxu0 0.0
    %237 = vmatprep.subr.mxu0 0.0
    %238 = vmatpush1.msra.mxu0 0.0
    %239 = vmatprep.subr.mxu0 0.0
    %240 = vmatpush1.msra.mxu0 0.0
    %241 = vmatprep.subr.mxu0 0.0
    %242 = vmatpush1.msra.mxu0 0.0
    %243 = vmatprep.subr.mxu0 0.0
    %244 = vmatpush1.msra.mxu0 0.0
    %245 = vmatprep.subr.mxu0 0.0
    %246 = vmatpush1.msra.mxu0 0.0
    %247 = vmatprep.subr.mxu0 0.0
    %248 = vmatpush1.msra.mxu0 0.0
    %249 = vmatprep.subr.mxu0 0.0
    %250 = vmatpush1.msra.mxu0 0.0
    %251 = vmatprep.mubr.f32.mxu0 0.0
    %252 = vmatmul.mubr.f32.gmra.mrb[0].mxu0 %v164
    %v253 = vpop.f32.mrb[0].mxu0
    %v254 = vadd.f32 0.0, %v253
    %v255 = vpop.f32.mrb[0].mxu0
    %v256 = vadd.f32 0.0, %v255
    %257 = vmatprep.mubr.f32.mxu0 0.0
    %258 = vmatmul.mubr.f32.gmra.mrb[0].mxu0 %v167
    %v259 = vpop.f32.mrb[0].mxu0
    %v260 = vadd.f32 0.0, %v259
    %v261 = vpop.f32.mrb[0].mxu0
    %v262 = vadd.f32 0.0, %v261
    %263 = vmatprep.mubr.f32.mxu0 0.0
    %264 = vmatmul.mubr.f32.gmra.mrb[0].mxu0 %v170
    %v265 = vpop.f32.mrb[0].mxu0
    %v266 = vadd.f32 0.0, %v265
    %v267 = vpop.f32.mrb[0].mxu0
    %v268 = vadd.f32 0.0, %v267
    %269 = vmatprep.mubr.f32.mxu0 0.0
    %270 = vmatmul.mubr.f32.gmra.mrb[0].mxu0 %v173
    %v271 = vpop.f32.mrb[0].mxu0
    %v272 = vadd.f32 0.0, %v271
    %v273 = vpop.f32.mrb[0].mxu0
    %v274 = vadd.f32 0.0, %v273
    %275 = vmatprep.mubr.f32.mxu0 0.0
    %276 = vmatmul.mubr.f32.gmra.mrb[0].mxu0 %v176
    %v277 = vpop.f32.mrb[0].mxu0
    %v278 = vadd.f32 0.0, %v277
    %v279 = vpop.f32.mrb[0].mxu0
    %v280 = vadd.f32 0.0, %v279
    %281 = vmatprep.mubr.f32.mxu0 0.0
    %282 = vmatmul.mubr.f32.gmra.mrb[0].mxu0 %v179
    %v283 = vpop.f32.mrb[0].mxu0
    %v284 = vadd.f32 0.0, %v283
    %v285 = vpop.f32.mrb[0].mxu0
    %v286 = vadd.f32 0.0, %v285
    %287 = vmatprep.mubr.f32.mxu0 0.0
    %288 = vmatmul.mubr.f32.gmra.mrb[0].mxu0 %v182
    %v289 = vpop.f32.mrb[0].mxu0
    %v290 = vadd.f32 0.0, %v289
    %v291 = vpop.f32.mrb[0].mxu0
    %v292 = vadd.f32 0.0, %v291
    %293 = vmatprep.mubr.f32.mxu0 0.0
    %294 = vmatmul.mubr.f32.gmra.mrb[0].mxu0 %v185
    %v295 = vpop.f32.mrb[0].mxu0
    %v296 = vadd.f32 0.0, %v295
    %v297 = vpop.f32.mrb[0].mxu0
    %v298 = vadd.f32 0.0, %v297
    %299 = vdwg.mxu0
    %v301 = vsel %vm42, %v134, 0
    %v304 = vsel %vm42, %v135, 0
    %v307 = vsel %vm42, %v136, 0
    %v310 = vsel %vm42, %v137, 0
    %v313 = vsel %vm42, %v138, 0
    %v316 = vsel %vm42, %v139, 0
    %v319 = vsel %vm42, %v140, 0
    %v322 = vsel %vm42, %v141, 0
    %324 = vmatprep.subr.mxu0 %v143
    %325 = vmatpush1.msra.mxu0 %v142
    %326 = vmatprep.subr.mxu0 0.0
    %327 = vmatpush1.msra.mxu0 0.0
    %328 = vmatprep.subr.mxu0 0.0
    %329 = vmatpush1.msra.mxu0 0.0
    %330 = vmatprep.subr.mxu0 0.0
    %331 = vmatpush1.msra.mxu0 0.0
    %332 = vmatprep.subr.mxu0 0.0
    %333 = vmatpush1.msra.mxu0 0.0
    %334 = vmatprep.subr.mxu0 0.0
    %335 = vmatpush1.msra.mxu0 0.0
    %336 = vmatprep.subr.mxu0 0.0
    %337 = vmatpush1.msra.mxu0 0.0
    %338 = vmatprep.subr.mxu0 0.0
    %339 = vmatpush1.msra.mxu0 0.0
    %340 = vmatprep.subr.mxu0 0.0
    %341 = vmatpush1.msra.mxu0 0.0
    %342 = vmatprep.subr.mxu0 0.0
    %343 = vmatpush1.msra.mxu0 0.0
    %344 = vmatprep.subr.mxu0 0.0
    %345 = vmatpush1.msra.mxu0 0.0
    %346 = vmatprep.subr.mxu0 0.0
    %347 = vmatpush1.msra.mxu0 0.0
    %348 = vmatprep.subr.mxu0 0.0
    %349 = vmatpush1.msra.mxu0 0.0
    %350 = vmatprep.subr.mxu0 0.0
    %351 = vmatpush1.msra.mxu0 0.0
    %352 = vmatprep.subr.mxu0 0.0
    %353 = vmatpush1.msra.mxu0 0.0
    %354 = vmatprep.subr.mxu0 0.0
    %355 = vmatpush1.msra.mxu0 0.0
    %356 = vmatprep.subr.mxu0 0.0
    %357 = vmatpush1.msra.mxu0 0.0
    %358 = vmatprep.subr.mxu0 0.0
    %359 = vmatpush1.msra.mxu0 0.0
    %360 = vmatprep.subr.mxu0 0.0
    %361 = vmatpush1.msra.mxu0 0.0
    %362 = vmatprep.subr.mxu0 0.0
    %363 = vmatpush1.msra.mxu0 0.0
    %364 = vmatprep.subr.mxu0 0.0
    %365 = vmatpush1.msra.mxu0 0.0
    %366 = vmatprep.subr.mxu0 0.0
    %367 = vmatpush1.msra.mxu0 0.0
    %368 = vmatprep.subr.mxu0 0.0
    %369 = vmatpush1.msra.mxu0 0.0
    %370 = vmatprep.subr.mxu0 0.0
    %371 = vmatpush1.msra.mxu0 0.0
    %372 = vmatprep.subr.mxu0 0.0
    %373 = vmatpush1.msra.mxu0 0.0
    %374 = vmatprep.subr.mxu0 0.0
    %375 = vmatpush1.msra.mxu0 0.0
    %376 = vmatprep.subr.mxu0 0.0
    %377 = vmatpush1.msra.mxu0 0.0
    %378 = vmatprep.subr.mxu0 0.0
    %379 = vmatpush1.msra.mxu0 0.0
    %380 = vmatprep.subr.mxu0 0.0
    %381 = vmatpush1.msra.mxu0 0.0
    %382 = vmatprep.subr.mxu0 0.0
    %383 = vmatpush1.msra.mxu0 0.0
    %384 = vmatprep.subr.mxu0 0.0
    %385 = vmatpush1.msra.mxu0 0.0
    %386 = vmatprep.subr.mxu0 0.0
    %387 = vmatpush1.msra.mxu0 0.0
    %388 = vmatprep.mubr.f32.mxu0 0.0
    %389 = vmatmul.mubr.f32.gmra.mrb[0].mxu0 %v301
    %v390 = vpop.f32.mrb[0].mxu0
    %v391 = vadd.f32 %v254, %v390
    %v392 = vpop.f32.mrb[0].mxu0
    %v393 = vadd.f32 %v256, %v392
    %394 = vmatprep.mubr.f32.mxu0 0.0
    %395 = vmatmul.mubr.f32.gmra.mrb[0].mxu0 %v304
    %v396 = vpop.f32.mrb[0].mxu0
    %v397 = vadd.f32 %v260, %v396
    %v398 = vpop.f32.mrb[0].mxu0
    %v399 = vadd.f32 %v262, %v398
    %400 = vmatprep.mubr.f32.mxu0 0.0
    %401 = vmatmul.mubr.f32.gmra.mrb[0].mxu0 %v307
    %v402 = vpop.f32.mrb[0].mxu0
    %v403 = vadd.f32 %v266, %v402
    %v404 = vpop.f32.mrb[0].mxu0
    %v405 = vadd.f32 %v268, %v404
    %406 = vmatprep.mubr.f32.mxu0 0.0
    %407 = vmatmul.mubr.f32.gmra.mrb[0].mxu0 %v310
    %v408 = vpop.f32.mrb[0].mxu0
    %v409 = vadd.f32 %v272, %v408
    %v410 = vpop.f32.mrb[0].mxu0
    %v411 = vadd.f32 %v274, %v410
    %412 = vmatprep.mubr.f32.mxu0 0.0
    %413 = vmatmul.mubr.f32.gmra.mrb[0].mxu0 %v313
    %v414 = vpop.f32.mrb[0].mxu0
    %v415 = vadd.f32 %v278, %v414
    %v416 = vpop.f32.mrb[0].mxu0
    %v417 = vadd.f32 %v280, %v416
    %418 = vmatprep.mubr.f32.mxu0 0.0
    %419 = vmatmul.mubr.f32.gmra.mrb[0].mxu0 %v316
    %v420 = vpop.f32.mrb[0].mxu0
    %v421 = vadd.f32 %v284, %v420
    %v422 = vpop.f32.mrb[0].mxu0
    %v423 = vadd.f32 %v286, %v422
    %424 = vmatprep.mubr.f32.mxu0 0.0
    %425 = vmatmul.mubr.f32.gmra.mrb[0].mxu0 %v319
    %v426 = vpop.f32.mrb[0].mxu0
    %v427 = vadd.f32 %v290, %v426
    %v428 = vpop.f32.mrb[0].mxu0
    %v429 = vadd.f32 %v292, %v428
    %430 = vmatprep.mubr.f32.mxu0 0.0
    %431 = vmatmul.mubr.f32.gmra.mrb[0].mxu0 %v322
    %v432 = vpop.f32.mrb[0].mxu0
    %v433 = vadd.f32 %v296, %v432
    %v434 = vpop.f32.mrb[0].mxu0
    %v435 = vadd.f32 %v298, %v434
    %436 = vdwg.mxu0
    %s437 = scalar_lea.vmem %s3, 128
    %v438 = vld [vmem:[%s437] sm:$0xff]
    %v439 = vld [vmem:[%s437 + $0x8] sm:$0xff]
    %v440 = vld [vmem:[%s437 + $0x10] sm:$0xff]
    %v441 = vld [vmem:[%s437 + $0x18] sm:$0xff]
    %v442 = vld [vmem:[%s437 + $0x20] sm:$0xff]
    %v443 = vld [vmem:[%s437 + $0x28] sm:$0xff]
    %v444 = vld [vmem:[%s437 + $0x30] sm:$0xff]
    %v445 = vld [vmem:[%s437 + $0x38] sm:$0xff]
    %446 = vrot.lane.b32.xlu0 %v142, 126
    %v447 = vpop.permute.xlu0 %446
    %448 = vrot.lane.b32.xlu0 %v143, 126
    %v449 = vpop.permute.xlu0 %448
    %vm450 = vcmask 1031168
    %v451 = vsel %vm450, %v447, %v449
    %v455 = vsel %vm42, %v438, 0
    %v458 = vsel %vm42, %v439, 0
    %v461 = vsel %vm42, %v440, 0
    %v464 = vsel %vm42, %v441, 0
    %v467 = vsel %vm42, %v442, 0
    %v470 = vsel %vm42, %v443, 0
    %v473 = vsel %vm42, %v444, 0
    %v476 = vsel %vm42, %v445, 0
    %478 = vmatprep.subr.mxu0 %v449
    %479 = vmatpush1.msra.mxu0 %v451
    %480 = vmatprep.subr.mxu0 0.0
    %481 = vmatpush1.msra.mxu0 0.0
    %482 = vmatprep.subr.mxu0 0.0
    %483 = vmatpush1.msra.mxu0 0.0
    %484 = vmatprep.subr.mxu0 0.0
    %485 = vmatpush1.msra.mxu0 0.0
    %486 = vmatprep.subr.mxu0 0.0
    %487 = vmatpush1.msra.mxu0 0.0
    %488 = vmatprep.subr.mxu0 0.0
    %489 = vmatpush1.msra.mxu0 0.0
    %490 = vmatprep.subr.mxu0 0.0
    %491 = vmatpush1.msra.mxu0 0.0
    %492 = vmatprep.subr.mxu0 0.0
    %493 = vmatpush1.msra.mxu0 0.0
    %494 = vmatprep.subr.mxu0 0.0
    %495 = vmatpush1.msra.mxu0 0.0
    %496 = vmatprep.subr.mxu0 0.0
    %497 = vmatpush1.msra.mxu0 0.0
    %498 = vmatprep.subr.mxu0 0.0
    %499 = vmatpush1.msra.mxu0 0.0
    %500 = vmatprep.subr.mxu0 0.0
    %501 = vmatpush1.msra.mxu0 0.0
    %502 = vmatprep.subr.mxu0 0.0
    %503 = vmatpush1.msra.mxu0 0.0
    %504 = vmatprep.subr.mxu0 0.0
    %505 = vmatpush1.msra.mxu0 0.0
    %506 = vmatprep.subr.mxu0 0.0
    %507 = vmatpush1.msra.mxu0 0.0
    %508 = vmatprep.subr.mxu0 0.0
    %509 = vmatpush1.msra.mxu0 0.0
    %510 = vmatprep.subr.mxu0 0.0
    %511 = vmatpush1.msra.mxu0 0.0
    %512 = vmatprep.subr.mxu0 0.0
    %513 = vmatpush1.msra.mxu0 0.0
    %514 = vmatprep.subr.mxu0 0.0
    %515 = vmatpush1.msra.mxu0 0.0
    %516 = vmatprep.subr.mxu0 0.0
    %517 = vmatpush1.msra.mxu0 0.0
    %518 = vmatprep.subr.mxu0 0.0
    %519 = vmatpush1.msra.mxu0 0.0
    %520 = vmatprep.subr.mxu0 0.0
    %521 = vmatpush1.msra.mxu0 0.0
    %522 = vmatprep.subr.mxu0 0.0
    %523 = vmatpush1.msra.mxu0 0.0
    %524 = vmatprep.subr.mxu0 0.0
    %525 = vmatpush1.msra.mxu0 0.0
    %526 = vmatprep.subr.mxu0 0.0
    %527 = vmatpush1.msra.mxu0 0.0
    %528 = vmatprep.subr.mxu0 0.0
    %529 = vmatpush1.msra.mxu0 0.0
    %530 = vmatprep.subr.mxu0 0.0
    %531 = vmatpush1.msra.mxu0 0.0
    %532 = vmatprep.subr.mxu0 0.0
    %533 = vmatpush1.msra.mxu0 0.0
    %534 = vmatprep.subr.mxu0 0.0
    %535 = vmatpush1.msra.mxu0 0.0
    %536 = vmatprep.subr.mxu0 0.0
    %537 = vmatpush1.msra.mxu0 0.0
    %538 = vmatprep.subr.mxu0 0.0
    %539 = vmatpush1.msra.mxu0 0.0
    %540 = vmatprep.subr.mxu0 0.0
    %541 = vmatpush1.msra.mxu0 0.0
    %542 = vmatprep.mubr.f32.mxu0 0.0
    %543 = vmatmul.mubr.f32.gmra.mrb[0].mxu0 %v455
    %v544 = vpop.f32.mrb[0].mxu0
    %v545 = vadd.f32 0.0, %v544
    %v546 = vpop.f32.mrb[0].mxu0
    %v547 = vadd.f32 0.0, %v546
    %548 = vmatprep.mubr.f32.mxu0 0.0
    %549 = vmatmul.mubr.f32.gmra.mrb[0].mxu0 %v458
    %v550 = vpop.f32.mrb[0].mxu0
    %v551 = vadd.f32 0.0, %v550
    %v552 = vpop.f32.mrb[0].mxu0
    %v553 = vadd.f32 0.0, %v552
    %554 = vmatprep.mubr.f32.mxu0 0.0
    %555 = vmatmul.mubr.f32.gmra.mrb[0].mxu0 %v461
    %v556 = vpop.f32.mrb[0].mxu0
    %v557 = vadd.f32 0.0, %v556
    %v558 = vpop.f32.mrb[0].mxu0
    %v559 = vadd.f32 0.0, %v558
    %560 = vmatprep.mubr.f32.mxu0 0.0
    %561 = vmatmul.mubr.f32.gmra.mrb[0].mxu0 %v464
    %v562 = vpop.f32.mrb[0].mxu0
    %v563 = vadd.f32 0.0, %v562
    %v564 = vpop.f32.mrb[0].mxu0
    %v565 = vadd.f32 0.0, %v564
    %566 = vmatprep.mubr.f32.mxu0 0.0
    %567 = vmatmul.mubr.f32.gmra.mrb[0].mxu0 %v467
    %v568 = vpop.f32.mrb[0].mxu0
    %v569 = vadd.f32 0.0, %v568
    %v570 = vpop.f32.mrb[0].mxu0
    %v571 = vadd.f32 0.0, %v570
    %572 = vmatprep.mubr.f32.mxu0 0.0
    %573 = vmatmul.mubr.f32.gmra.mrb[0].mxu0 %v470
    %v574 = vpop.f32.mrb[0].mxu0
    %v575 = vadd.f32 0.0, %v574
    %v576 = vpop.f32.mrb[0].mxu0
    %v577 = vadd.f32 0.0, %v576
    %578 = vmatprep.mubr.f32.mxu0 0.0
    %579 = vmatmul.mubr.f32.gmra.mrb[0].mxu0 %v473
    %v580 = vpop.f32.mrb[0].mxu0
    %v581 = vadd.f32 0.0, %v580
    %v582 = vpop.f32.mrb[0].mxu0
    %v583 = vadd.f32 0.0, %v582
    %584 = vmatprep.mubr.f32.mxu0 0.0
    %585 = vmatmul.mubr.f32.gmra.mrb[0].mxu0 %v476
    %v586 = vpop.f32.mrb[0].mxu0
    %v587 = vadd.f32 0.0, %v586
    %v588 = vpop.f32.mrb[0].mxu0
    %v589 = vadd.f32 0.0, %v588
    %590 = vdwg.mxu0
    %v591 = vadd.f32 %v391, %v545
    %v592 = vadd.f32 %v393, %v547
    %v593 = vadd.f32 %v397, %v551
    %v594 = vadd.f32 %v399, %v553
    %v595 = vadd.f32 %v403, %v557
    %v596 = vadd.f32 %v405, %v559
    %v597 = vadd.f32 %v409, %v563
    %v598 = vadd.f32 %v411, %v565
    %v599 = vadd.f32 %v415, %v569
    %v600 = vadd.f32 %v417, %v571
    %v601 = vadd.f32 %v421, %v575
    %v602 = vadd.f32 %v423, %v577
    %v603 = vadd.f32 %v427, %v581
    %v604 = vadd.f32 %v429, %v583
    %v605 = vadd.f32 %v433, %v587
    %v606 = vadd.f32 %v435, %v589
    %s607 = scalar_lea.vmem %s3, 192
    %v608 = vld [vmem:[%s607] sm:$0xff]
    %v609 = vld [vmem:[%s607 + $0x8] sm:$0xff]
    %v610 = vld [vmem:[%s607 + $0x10] sm:$0xff]
    %v611 = vld [vmem:[%s607 + $0x18] sm:$0xff]
    %v612 = vld [vmem:[%s607 + $0x20] sm:$0xff]
    %v613 = vld [vmem:[%s607 + $0x28] sm:$0xff]
    %v614 = vld [vmem:[%s607 + $0x30] sm:$0xff]
    %v615 = vld [vmem:[%s607 + $0x38] sm:$0xff]
    %616 = vrot.lane.b32.xlu0 %v142, 125
    %v617 = vpop.permute.xlu0 %616
    %618 = vrot.lane.b32.xlu0 %v143, 125
    %v619 = vpop.permute.xlu0 %618
    %vm620 = vcmask 1022976
    %v621 = vsel %vm620, %v617, %v619
    %v625 = vsel %vm42, %v608, 0
    %v628 = vsel %vm42, %v609, 0
    %v631 = vsel %vm42, %v610, 0
    %v634 = vsel %vm42, %v611, 0
    %v637 = vsel %vm42, %v612, 0
    %v640 = vsel %vm42, %v613, 0
    %v643 = vsel %vm42, %v614, 0
    %v646 = vsel %vm42, %v615, 0
    %648 = vmatprep.subr.mxu0 %v619
    %649 = vmatpush1.msra.mxu0 %v621
    %650 = vmatprep.subr.mxu0 0.0
    %651 = vmatpush1.msra.mxu0 0.0
    %652 = vmatprep.subr.mxu0 0.0
    %653 = vmatpush1.msra.mxu0 0.0
    %654 = vmatprep.subr.mxu0 0.0
    %655 = vmatpush1.msra.mxu0 0.0
    %656 = vmatprep.subr.mxu0 0.0
    %657 = vmatpush1.msra.mxu0 0.0
    %658 = vmatprep.subr.mxu0 0.0
    %659 = vmatpush1.msra.mxu0 0.0
    %660 = vmatprep.subr.mxu0 0.0
    %661 = vmatpush1.msra.mxu0 0.0
    %662 = vmatprep.subr.mxu0 0.0
    %663 = vmatpush1.msra.mxu0 0.0
    %664 = vmatprep.subr.mxu0 0.0
    %665 = vmatpush1.msra.mxu0 0.0
    %666 = vmatprep.subr.mxu0 0.0
    %667 = vmatpush1.msra.mxu0 0.0
    %668 = vmatprep.subr.mxu0 0.0
    %669 = vmatpush1.msra.mxu0 0.0
    %670 = vmatprep.subr.mxu0 0.0
    %671 = vmatpush1.msra.mxu0 0.0
    %672 = vmatprep.subr.mxu0 0.0
    %673 = vmatpush1.msra.mxu0 0.0
    %674 = vmatprep.subr.mxu0 0.0
    %675 = vmatpush1.msra.mxu0 0.0
    %676 = vmatprep.subr.mxu0 0.0
    %677 = vmatpush1.msra.mxu0 0.0
    %678 = vmatprep.subr.mxu0 0.0
    %679 = vmatpush1.msra.mxu0 0.0
    %680 = vmatprep.subr.mxu0 0.0
    %681 = vmatpush1.msra.mxu0 0.0
    %682 = vmatprep.subr.mxu0 0.0
    %683 = vmatpush1.msra.mxu0 0.0
    %684 = vmatprep.subr.mxu0 0.0
    %685 = vmatpush1.msra.mxu0 0.0
    %686 = vmatprep.subr.mxu0 0.0
    %687 = vmatpush1.msra.mxu0 0.0
    %688 = vmatprep.subr.mxu0 0.0
    %689 = vmatpush1.msra.mxu0 0.0
    %690 = vmatprep.subr.mxu0 0.0
    %691 = vmatpush1.msra.mxu0 0.0
    %692 = vmatprep.subr.mxu0 0.0
    %693 = vmatpush1.msra.mxu0 0.0
    %694 = vmatprep.subr.mxu0 0.0
    %695 = vmatpush1.msra.mxu0 0.0
    %696 = vmatprep.subr.mxu0 0.0
    %697 = vmatpush1.msra.mxu0 0.0
    %698 = vmatprep.subr.mxu0 0.0
    %699 = vmatpush1.msra.mxu0 0.0
    %700 = vmatprep.subr.mxu0 0.0
    %701 = vmatpush1.msra.mxu0 0.0
    %702 = vmatprep.subr.mxu0 0.0
    %703 = vmatpush1.msra.mxu0 0.0
    %704 = vmatprep.subr.mxu0 0.0
    %705 = vmatpush1.msra.mxu0 0.0
    %706 = vmatprep.subr.mxu0 0.0
    %707 = vmatpush1.msra.mxu0 0.0
    %708 = vmatprep.subr.mxu0 0.0
    %709 = vmatpush1.msra.mxu0 0.0
    %710 = vmatprep.subr.mxu0 0.0
    %711 = vmatpush1.msra.mxu0 0.0
    %712 = vmatprep.mubr.f32.mxu0 0.0
    %713 = vmatmul.mubr.f32.gmra.mrb[0].mxu0 %v625
    %v714 = vpop.f32.mrb[0].mxu0
    %v715 = vadd.f32 0.0, %v714
    %v716 = vpop.f32.mrb[0].mxu0
    %v717 = vadd.f32 0.0, %v716
    %718 = vmatprep.mubr.f32.mxu0 0.0
    %719 = vmatmul.mubr.f32.gmra.mrb[0].mxu0 %v628
    %v720 = vpop.f32.mrb[0].mxu0
    %v721 = vadd.f32 0.0, %v720
    %v722 = vpop.f32.mrb[0].mxu0
    %v723 = vadd.f32 0.0, %v722
    %724 = vmatprep.mubr.f32.mxu0 0.0
    %725 = vmatmul.mubr.f32.gmra.mrb[0].mxu0 %v631
    %v726 = vpop.f32.mrb[0].mxu0
    %v727 = vadd.f32 0.0, %v726
    %v728 = vpop.f32.mrb[0].mxu0
    %v729 = vadd.f32 0.0, %v728
    %730 = vmatprep.mubr.f32.mxu0 0.0
    %731 = vmatmul.mubr.f32.gmra.mrb[0].mxu0 %v634
    %v732 = vpop.f32.mrb[0].mxu0
    %v733 = vadd.f32 0.0, %v732
    %v734 = vpop.f32.mrb[0].mxu0
    %v735 = vadd.f32 0.0, %v734
    %736 = vmatprep.mubr.f32.mxu0 0.0
    %737 = vmatmul.mubr.f32.gmra.mrb[0].mxu0 %v637
    %v738 = vpop.f32.mrb[0].mxu0
    %v739 = vadd.f32 0.0, %v738
    %v740 = vpop.f32.mrb[0].mxu0
    %v741 = vadd.f32 0.0, %v740
    %742 = vmatprep.mubr.f32.mxu0 0.0
    %743 = vmatmul.mubr.f32.gmra.mrb[0].mxu0 %v640
    %v744 = vpop.f32.mrb[0].mxu0
    %v745 = vadd.f32 0.0, %v744
    %v746 = vpop.f32.mrb[0].mxu0
    %v747 = vadd.f32 0.0, %v746
    %748 = vmatprep.mubr.f32.mxu0 0.0
    %749 = vmatmul.mubr.f32.gmra.mrb[0].mxu0 %v643
    %v750 = vpop.f32.mrb[0].mxu0
    %v751 = vadd.f32 0.0, %v750
    %v752 = vpop.f32.mrb[0].mxu0
    %v753 = vadd.f32 0.0, %v752
    %754 = vmatprep.mubr.f32.mxu0 0.0
    %755 = vmatmul.mubr.f32.gmra.mrb[0].mxu0 %v646
    %v756 = vpop.f32.mrb[0].mxu0
    %v757 = vadd.f32 0.0, %v756
    %v758 = vpop.f32.mrb[0].mxu0
    %v759 = vadd.f32 0.0, %v758
    %760 = vdwg.mxu0
    %v761 = vadd.f32 %v591, %v715
    %v762 = vadd.f32 %v592, %v717
    %v763 = vadd.f32 %v593, %v721
    %v764 = vadd.f32 %v594, %v723
    %v765 = vadd.f32 %v595, %v727
    %v766 = vadd.f32 %v596, %v729
    %v767 = vadd.f32 %v597, %v733
    %v768 = vadd.f32 %v598, %v735
    %v769 = vadd.f32 %v599, %v739
    %v770 = vadd.f32 %v600, %v741
    %v771 = vadd.f32 %v601, %v745
    %v772 = vadd.f32 %v602, %v747
    %v773 = vadd.f32 %v603, %v751
    %v774 = vadd.f32 %v604, %v753
    %v775 = vadd.f32 %v605, %v757
    %v776 = vadd.f32 %v606, %v759
    %s777 = scalar_lea.vmem %s3, 256
    %v778 = vld [vmem:[%s777] sm:$0xff]
    %v779 = vld [vmem:[%s777 + $0x8] sm:$0xff]
    %v780 = vld [vmem:[%s777 + $0x10] sm:$0xff]
    %v781 = vld [vmem:[%s777 + $0x18] sm:$0xff]
    %v782 = vld [vmem:[%s777 + $0x20] sm:$0xff]
    %v783 = vld [vmem:[%s777 + $0x28] sm:$0xff]
    %v784 = vld [vmem:[%s777 + $0x30] sm:$0xff]
    %v785 = vld [vmem:[%s777 + $0x38] sm:$0xff]
    %786 = vrot.lane.b32.xlu0 %v142, 124
    %v787 = vpop.permute.xlu0 %786
    %788 = vrot.lane.b32.xlu0 %v143, 124
    %v789 = vpop.permute.xlu0 %788
    %vm790 = vcmask 1014784
    %v791 = vsel %vm790, %v787, %v789
    %v795 = vsel %vm42, %v778, 0
    %v798 = vsel %vm42, %v779, 0
    %v801 = vsel %vm42, %v780, 0
    %v804 = vsel %vm42, %v781, 0
    %v807 = vsel %vm42, %v782, 0
    %v810 = vsel %vm42, %v783, 0
    %v813 = vsel %vm42, %v784, 0
    %v816 = vsel %vm42, %v785, 0
    %818 = vmatprep.subr.mxu0 %v789
    %819 = vmatpush1.msra.mxu0 %v791
    %820 = vmatprep.subr.mxu0 0.0
    %821 = vmatpush1.msra.mxu0 0.0
    %822 = vmatprep.subr.mxu0 0.0
    %823 = vmatpush1.msra.mxu0 0.0
    %824 = vmatprep.subr.mxu0 0.0
    %825 = vmatpush1.msra.mxu0 0.0
    %826 = vmatprep.subr.mxu0 0.0
    %827 = vmatpush1.msra.mxu0 0.0
    %828 = vmatprep.subr.mxu0 0.0
    %829 = vmatpush1.msra.mxu0 0.0
    %830 = vmatprep.subr.mxu0 0.0
    %831 = vmatpush1.msra.mxu0 0.0
    %832 = vmatprep.subr.mxu0 0.0
    %833 = vmatpush1.msra.mxu0 0.0
    %834 = vmatprep.subr.mxu0 0.0
    %835 = vmatpush1.msra.mxu0 0.0
    %836 = vmatprep.subr.mxu0 0.0
    %837 = vmatpush1.msra.mxu0 0.0
    %838 = vmatprep.subr.mxu0 0.0
    %839 = vmatpush1.msra.mxu0 0.0
    %840 = vmatprep.subr.mxu0 0.0
    %841 = vmatpush1.msra.mxu0 0.0
    %842 = vmatprep.subr.mxu0 0.0
    %843 = vmatpush1.msra.mxu0 0.0
    %844 = vmatprep.subr.mxu0 0.0
    %845 = vmatpush1.msra.mxu0 0.0
    %846 = vmatprep.subr.mxu0 0.0
    %847 = vmatpush1.msra.mxu0 0.0
    %848 = vmatprep.subr.mxu0 0.0
    %849 = vmatpush1.msra.mxu0 0.0
    %850 = vmatprep.subr.mxu0 0.0
    %851 = vmatpush1.msra.mxu0 0.0
    %852 = vmatprep.subr.mxu0 0.0
    %853 = vmatpush1.msra.mxu0 0.0
    %854 = vmatprep.subr.mxu0 0.0
    %855 = vmatpush1.msra.mxu0 0.0
    %856 = vmatprep.subr.mxu0 0.0
    %857 = vmatpush1.msra.mxu0 0.0
    %858 = vmatprep.subr.mxu0 0.0
    %859 = vmatpush1.msra.mxu0 0.0
    %860 = vmatprep.subr.mxu0 0.0
    %861 = vmatpush1.msra.mxu0 0.0
    %862 = vmatprep.subr.mxu0 0.0
    %863 = vmatpush1.msra.mxu0 0.0
    %864 = vmatprep.subr.mxu0 0.0
    %865 = vmatpush1.msra.mxu0 0.0
    %866 = vmatprep.subr.mxu0 0.0
    %867 = vmatpush1.msra.mxu0 0.0
    %868 = vmatprep.subr.mxu0 0.0
    %869 = vmatpush1.msra.mxu0 0.0
    %870 = vmatprep.subr.mxu0 0.0
    %871 = vmatpush1.msra.mxu0 0.0
    %872 = vmatprep.subr.mxu0 0.0
    %873 = vmatpush1.msra.mxu0 0.0
    %874 = vmatprep.subr.mxu0 0.0
    %875 = vmatpush1.msra.mxu0 0.0
    %876 = vmatprep.subr.mxu0 0.0
    %877 = vmatpush1.msra.mxu0 0.0
    %878 = vmatprep.subr.mxu0 0.0
    %879 = vmatpush1.msra.mxu0 0.0
    %880 = vmatprep.subr.mxu0 0.0
    %881 = vmatpush1.msra.mxu0 0.0
    %882 = vmatprep.mubr.f32.mxu0 0.0
    %883 = vmatmul.mubr.f32.gmra.mrb[0].mxu0 %v795
    %v884 = vpop.f32.mrb[0].mxu0
    %v885 = vadd.f32 0.0, %v884
    %v886 = vpop.f32.mrb[0].mxu0
    %v887 = vadd.f32 0.0, %v886
    %888 = vmatprep.mubr.f32.mxu0 0.0
    %889 = vmatmul.mubr.f32.gmra.mrb[0].mxu0 %v798
    %v890 = vpop.f32.mrb[0].mxu0
    %v891 = vadd.f32 0.0, %v890
    %v892 = vpop.f32.mrb[0].mxu0
    %v893 = vadd.f32 0.0, %v892
    %894 = vmatprep.mubr.f32.mxu0 0.0
    %895 = vmatmul.mubr.f32.gmra.mrb[0].mxu0 %v801
    %v896 = vpop.f32.mrb[0].mxu0
    %v897 = vadd.f32 0.0, %v896
    %v898 = vpop.f32.mrb[0].mxu0
    %v899 = vadd.f32 0.0, %v898
    %900 = vmatprep.mubr.f32.mxu0 0.0
    %901 = vmatmul.mubr.f32.gmra.mrb[0].mxu0 %v804
    %v902 = vpop.f32.mrb[0].mxu0
    %v903 = vadd.f32 0.0, %v902
    %v904 = vpop.f32.mrb[0].mxu0
    %v905 = vadd.f32 0.0, %v904
    %906 = vmatprep.mubr.f32.mxu0 0.0
    %907 = vmatmul.mubr.f32.gmra.mrb[0].mxu0 %v807
    %v908 = vpop.f32.mrb[0].mxu0
    %v909 = vadd.f32 0.0, %v908
    %v910 = vpop.f32.mrb[0].mxu0
    %v911 = vadd.f32 0.0, %v910
    %912 = vmatprep.mubr.f32.mxu0 0.0
    %913 = vmatmul.mubr.f32.gmra.mrb[0].mxu0 %v810
    %v914 = vpop.f32.mrb[0].mxu0
    %v915 = vadd.f32 0.0, %v914
    %v916 = vpop.f32.mrb[0].mxu0
    %v917 = vadd.f32 0.0, %v916
    %918 = vmatprep.mubr.f32.mxu0 0.0
    %919 = vmatmul.mubr.f32.gmra.mrb[0].mxu0 %v813
    %v920 = vpop.f32.mrb[0].mxu0
    %v921 = vadd.f32 0.0, %v920
    %v922 = vpop.f32.mrb[0].mxu0
    %v923 = vadd.f32 0.0, %v922
    %924 = vmatprep.mubr.f32.mxu0 0.0
    %925 = vmatmul.mubr.f32.gmra.mrb[0].mxu0 %v816
    %v926 = vpop.f32.mrb[0].mxu0
    %v927 = vadd.f32 0.0, %v926
    %v928 = vpop.f32.mrb[0].mxu0
    %v929 = vadd.f32 0.0, %v928
    %930 = vdwg.mxu0
    %v931 = vadd.f32 %v761, %v885
    %v932 = vadd.f32 %v762, %v887
    %v933 = vadd.f32 %v763, %v891
    %v934 = vadd.f32 %v764, %v893
    %v935 = vadd.f32 %v765, %v897
    %v936 = vadd.f32 %v766, %v899
    %v937 = vadd.f32 %v767, %v903
    %v938 = vadd.f32 %v768, %v905
    %v939 = vadd.f32 %v769, %v909
    %v940 = vadd.f32 %v770, %v911
    %v941 = vadd.f32 %v771, %v915
    %v942 = vadd.f32 %v772, %v917
    %v943 = vadd.f32 %v773, %v921
    %v944 = vadd.f32 %v774, %v923
    %v945 = vadd.f32 %v775, %v927
    %v946 = vadd.f32 %v776, %v929
    %s947 = scalar_lea.vmem %s3, 320
    %v948 = vld [vmem:[%s947] sm:$0xff]
    %v949 = vld [vmem:[%s947 + $0x8] sm:$0xff]
    %v950 = vld [vmem:[%s947 + $0x10] sm:$0xff]
    %v951 = vld [vmem:[%s947 + $0x18] sm:$0xff]
    %v952 = vld [vmem:[%s947 + $0x20] sm:$0xff]
    %v953 = vld [vmem:[%s947 + $0x28] sm:$0xff]
    %v954 = vld [vmem:[%s947 + $0x30] sm:$0xff]
    %v955 = vld [vmem:[%s947 + $0x38] sm:$0xff]
    %956 = vrot.lane.b32.xlu0 %v142, 123
    %v957 = vpop.permute.xlu0 %956
    %958 = vrot.lane.b32.xlu0 %v143, 123
    %v959 = vpop.permute.xlu0 %958
    %vm960 = vcmask 1006592
    %v961 = vsel %vm960, %v957, %v959
    %v965 = vsel %vm42, %v948, 0
    %v968 = vsel %vm42, %v949, 0
    %v971 = vsel %vm42, %v950, 0
    %v974 = vsel %vm42, %v951, 0
    %v977 = vsel %vm42, %v952, 0
    %v980 = vsel %vm42, %v953, 0
    %v983 = vsel %vm42, %v954, 0
    %v986 = vsel %vm42, %v955, 0
    %988 = vmatprep.subr.mxu0 %v959
    %989 = vmatpush1.msra.mxu0 %v961
    %990 = vmatprep.subr.mxu0 0.0
    %991 = vmatpush1.msra.mxu0 0.0
    %992 = vmatprep.subr.mxu0 0.0
    %993 = vmatpush1.msra.mxu0 0.0
    %994 = vmatprep.subr.mxu0 0.0
    %995 = vmatpush1.msra.mxu0 0.0
    %996 = vmatprep.subr.mxu0 0.0
    %997 = vmatpush1.msra.mxu0 0.0
    %998 = vmatprep.subr.mxu0 0.0
    %999 = vmatpush1.msra.mxu0 0.0
    %1000 = vmatprep.subr.mxu0 0.0
    %1001 = vmatpush1.msra.mxu0 0.0
    %1002 = vmatprep.subr.mxu0 0.0
    %1003 = vmatpush1.msra.mxu0 0.0
    %1004 = vmatprep.subr.mxu0 0.0
    %1005 = vmatpush1.msra.mxu0 0.0
    %1006 = vmatprep.subr.mxu0 0.0
    %1007 = vmatpush1.msra.mxu0 0.0
    %1008 = vmatprep.subr.mxu0 0.0
    %1009 = vmatpush1.msra.mxu0 0.0
    %1010 = vmatprep.subr.mxu0 0.0
    %1011 = vmatpush1.msra.mxu0 0.0
    %1012 = vmatprep.subr.mxu0 0.0
    %1013 = vmatpush1.msra.mxu0 0.0
    %1014 = vmatprep.subr.mxu0 0.0
    %1015 = vmatpush1.msra.mxu0 0.0
    %1016 = vmatprep.subr.mxu0 0.0
    %1017 = vmatpush1.msra.mxu0 0.0
    %1018 = vmatprep.subr.mxu0 0.0
    %1019 = vmatpush1.msra.mxu0 0.0
    %1020 = vmatprep.subr.mxu0 0.0
    %1021 = vmatpush1.msra.mxu0 0.0
    %1022 = vmatprep.subr.mxu0 0.0
    %1023 = vmatpush1.msra.mxu0 0.0
    %1024 = vmatprep.subr.mxu0 0.0
    %1025 = vmatpush1.msra.mxu0 0.0
    %1026 = vmatprep.subr.mxu0 0.0
    %1027 = vmatpush1.msra.mxu0 0.0
    %1028 = vmatprep.subr.mxu0 0.0
    %1029 = vmatpush1.msra.mxu0 0.0
    %1030 = vmatprep.subr.mxu0 0.0
    %1031 = vmatpush1.msra.mxu0 0.0
    %1032 = vmatprep.subr.mxu0 0.0
    %1033 = vmatpush1.msra.mxu0 0.0
    %1034 = vmatprep.subr.mxu0 0.0
    %1035 = vmatpush1.msra.mxu0 0.0
    %1036 = vmatprep.subr.mxu0 0.0
    %1037 = vmatpush1.msra.mxu0 0.0
    %1038 = vmatprep.subr.mxu0 0.0
    %1039 = vmatpush1.msra.mxu0 0.0
    %1040 = vmatprep.subr.mxu0 0.0
    %1041 = vmatpush1.msra.mxu0 0.0
    %1042 = vmatprep.subr.mxu0 0.0
    %1043 = vmatpush1.msra.mxu0 0.0
    %1044 = vmatprep.subr.mxu0 0.0
    %1045 = vmatpush1.msra.mxu0 0.0
    %1046 = vmatprep.subr.mxu0 0.0
    %1047 = vmatpush1.msra.mxu0 0.0
    %1048 = vmatprep.subr.mxu0 0.0
    %1049 = vmatpush1.msra.mxu0 0.0
    %1050 = vmatprep.subr.mxu0 0.0
    %1051 = vmatpush1.msra.mxu0 0.0
    %1052 = vmatprep.mubr.f32.mxu0 0.0
    %1053 = vmatmul.mubr.f32.gmra.mrb[0].mxu0 %v965
    %v1054 = vpop.f32.mrb[0].mxu0
    %v1055 = vadd.f32 0.0, %v1054
    %v1056 = vpop.f32.mrb[0].mxu0
    %v1057 = vadd.f32 0.0, %v1056
    %1058 = vmatprep.mubr.f32.mxu0 0.0
    %1059 = vmatmul.mubr.f32.gmra.mrb[0].mxu0 %v968
    %v1060 = vpop.f32.mrb[0].mxu0
    %v1061 = vadd.f32 0.0, %v1060
    %v1062 = vpop.f32.mrb[0].mxu0
    %v1063 = vadd.f32 0.0, %v1062
    %1064 = vmatprep.mubr.f32.mxu0 0.0
    %1065 = vmatmul.mubr.f32.gmra.mrb[0].mxu0 %v971
    %v1066 = vpop.f32.mrb[0].mxu0
    %v1067 = vadd.f32 0.0, %v1066
    %v1068 = vpop.f32.mrb[0].mxu0
    %v1069 = vadd.f32 0.0, %v1068
    %1070 = vmatprep.mubr.f32.mxu0 0.0
    %1071 = vmatmul.mubr.f32.gmra.mrb[0].mxu0 %v974
    %v1072 = vpop.f32.mrb[0].mxu0
    %v1073 = vadd.f32 0.0, %v1072
    %v1074 = vpop.f32.mrb[0].mxu0
    %v1075 = vadd.f32 0.0, %v1074
    %1076 = vmatprep.mubr.f32.mxu0 0.0
    %1077 = vmatmul.mubr.f32.gmra.mrb[0].mxu0 %v977
    %v1078 = vpop.f32.mrb[0].mxu0
    %v1079 = vadd.f32 0.0, %v1078
    %v1080 = vpop.f32.mrb[0].mxu0
    %v1081 = vadd.f32 0.0, %v1080
    %1082 = vmatprep.mubr.f32.mxu0 0.0
    %1083 = vmatmul.mubr.f32.gmra.mrb[0].mxu0 %v980
    %v1084 = vpop.f32.mrb[0].mxu0
    %v1085 = vadd.f32 0.0, %v1084
    %v1086 = vpop.f32.mrb[0].mxu0
    %v1087 = vadd.f32 0.0, %v1086
    %1088 = vmatprep.mubr.f32.mxu0 0.0
    %1089 = vmatmul.mubr.f32.gmra.mrb[0].mxu0 %v983
    %v1090 = vpop.f32.mrb[0].mxu0
    %v1091 = vadd.f32 0.0, %v1090
    %v1092 = vpop.f32.mrb[0].mxu0
    %v1093 = vadd.f32 0.0, %v1092
    %1094 = vmatprep.mubr.f32.mxu0 0.0
    %1095 = vmatmul.mubr.f32.gmra.mrb[0].mxu0 %v986
    %v1096 = vpop.f32.mrb[0].mxu0
    %v1097 = vadd.f32 0.0, %v1096
    %v1098 = vpop.f32.mrb[0].mxu0
    %v1099 = vadd.f32 0.0, %v1098
    %1100 = vdwg.mxu0
    %v1101 = vadd.f32 %v931, %v1055
    %v1102 = vadd.f32 %v932, %v1057
    %v1103 = vadd.f32 %v933, %v1061
    %v1104 = vadd.f32 %v934, %v1063
    %v1105 = vadd.f32 %v935, %v1067
    %v1106 = vadd.f32 %v936, %v1069
    %v1107 = vadd.f32 %v937, %v1073
    %v1108 = vadd.f32 %v938, %v1075
    %v1109 = vadd.f32 %v939, %v1079
    %v1110 = vadd.f32 %v940, %v1081
    %v1111 = vadd.f32 %v941, %v1085
    %v1112 = vadd.f32 %v942, %v1087
    %v1113 = vadd.f32 %v943, %v1091
    %v1114 = vadd.f32 %v944, %v1093
    %v1115 = vadd.f32 %v945, %v1097
    %v1116 = vadd.f32 %v946, %v1099
    %s1117 = scalar_lea.vmem %s3, 384
    %v1118 = vld [vmem:[%s1117] sm:$0xff]
    %v1119 = vld [vmem:[%s1117 + $0x8] sm:$0xff]
    %v1120 = vld [vmem:[%s1117 + $0x10] sm:$0xff]
    %v1121 = vld [vmem:[%s1117 + $0x18] sm:$0xff]
    %v1122 = vld [vmem:[%s1117 + $0x20] sm:$0xff]
    %v1123 = vld [vmem:[%s1117 + $0x28] sm:$0xff]
    %v1124 = vld [vmem:[%s1117 + $0x30] sm:$0xff]
    %v1125 = vld [vmem:[%s1117 + $0x38] sm:$0xff]
    %1126 = vrot.lane.b32.xlu0 %v142, 122
    %v1127 = vpop.permute.xlu0 %1126
    %1128 = vrot.lane.b32.xlu0 %v143, 122
    %v1129 = vpop.permute.xlu0 %1128
    %vm1130 = vcmask 998400
    %v1131 = vsel %vm1130, %v1127, %v1129
    %v1135 = vsel %vm42, %v1118, 0
    %v1138 = vsel %vm42, %v1119, 0
    %v1141 = vsel %vm42, %v1120, 0
    %v1144 = vsel %vm42, %v1121, 0
    %v1147 = vsel %vm42, %v1122, 0
    %v1150 = vsel %vm42, %v1123, 0
    %v1153 = vsel %vm42, %v1124, 0
    %v1156 = vsel %vm42, %v1125, 0
    %1158 = vmatprep.subr.mxu0 %v1129
    %1159 = vmatpush1.msra.mxu0 %v1131
    %1160 = vmatprep.subr.mxu0 0.0
    %1161 = vmatpush1.msra.mxu0 0.0
    %1162 = vmatprep.subr.mxu0 0.0
    %1163 = vmatpush1.msra.mxu0 0.0
    %1164 = vmatprep.subr.mxu0 0.0
    %1165 = vmatpush1.msra.mxu0 0.0
    %1166 = vmatprep.subr.mxu0 0.0
    %1167 = vmatpush1.msra.mxu0 0.0
    %1168 = vmatprep.subr.mxu0 0.0
    %1169 = vmatpush1.msra.mxu0 0.0
    %1170 = vmatprep.subr.mxu0 0.0
    %1171 = vmatpush1.msra.mxu0 0.0
    %1172 = vmatprep.subr.mxu0 0.0
    %1173 = vmatpush1.msra.mxu0 0.0
    %1174 = vmatprep.subr.mxu0 0.0
    %1175 = vmatpush1.msra.mxu0 0.0
    %1176 = vmatprep.subr.mxu0 0.0
    %1177 = vmatpush1.msra.mxu0 0.0
    %1178 = vmatprep.subr.mxu0 0.0
    %1179 = vmatpush1.msra.mxu0 0.0
    %1180 = vmatprep.subr.mxu0 0.0
    %1181 = vmatpush1.msra.mxu0 0.0
    %1182 = vmatprep.subr.mxu0 0.0
    %1183 = vmatpush1.msra.mxu0 0.0
    %1184 = vmatprep.subr.mxu0 0.0
    %1185 = vmatpush1.msra.mxu0 0.0
    %1186 = vmatprep.subr.mxu0 0.0
    %1187 = vmatpush1.msra.mxu0 0.0
    %1188 = vmatprep.subr.mxu0 0.0
    %1189 = vmatpush1.msra.mxu0 0.0
    %1190 = vmatprep.subr.mxu0 0.0
    %1191 = vmatpush1.msra.mxu0 0.0
    %1192 = vmatprep.subr.mxu0 0.0
    %1193 = vmatpush1.msra.mxu0 0.0
    %1194 = vmatprep.subr.mxu0 0.0
    %1195 = vmatpush1.msra.mxu0 0.0
    %1196 = vmatprep.subr.mxu0 0.0
    %1197 = vmatpush1.msra.mxu0 0.0
    %1198 = vmatprep.subr.mxu0 0.0
    %1199 = vmatpush1.msra.mxu0 0.0
    %1200 = vmatprep.subr.mxu0 0.0
    %1201 = vmatpush1.msra.mxu0 0.0
    %1202 = vmatprep.subr.mxu0 0.0
    %1203 = vmatpush1.msra.mxu0 0.0
    %1204 = vmatprep.subr.mxu0 0.0
    %1205 = vmatpush1.msra.mxu0 0.0
    %1206 = vmatprep.subr.mxu0 0.0
    %1207 = vmatpush1.msra.mxu0 0.0
    %1208 = vmatprep.subr.mxu0 0.0
    %1209 = vmatpush1.msra.mxu0 0.0
    %1210 = vmatprep.subr.mxu0 0.0
    %1211 = vmatpush1.msra.mxu0 0.0
    %1212 = vmatprep.subr.mxu0 0.0
    %1213 = vmatpush1.msra.mxu0 0.0
    %1214 = vmatprep.subr.mxu0 0.0
    %1215 = vmatpush1.msra.mxu0 0.0
    %1216 = vmatprep.subr.mxu0 0.0
    %1217 = vmatpush1.msra.mxu0 0.0
    %1218 = vmatprep.subr.mxu0 0.0
    %1219 = vmatpush1.msra.mxu0 0.0
    %1220 = vmatprep.subr.mxu0 0.0
    %1221 = vmatpush1.msra.mxu0 0.0
    %1222 = vmatprep.mubr.f32.mxu0 0.0
    %1223 = vmatmul.mubr.f32.gmra.mrb[0].mxu0 %v1135
    %v1224 = vpop.f32.mrb[0].mxu0
    %v1225 = vadd.f32 0.0, %v1224
    %v1226 = vpop.f32.mrb[0].mxu0
    %v1227 = vadd.f32 0.0, %v1226
    %1228 = vmatprep.mubr.f32.mxu0 0.0
    %1229 = vmatmul.mubr.f32.gmra.mrb[0].mxu0 %v1138
    %v1230 = vpop.f32.mrb[0].mxu0
    %v1231 = vadd.f32 0.0, %v1230
    %v1232 = vpop.f32.mrb[0].mxu0
    %v1233 = vadd.f32 0.0, %v1232
    %1234 = vmatprep.mubr.f32.mxu0 0.0
    %1235 = vmatmul.mubr.f32.gmra.mrb[0].mxu0 %v1141
    %v1236 = vpop.f32.mrb[0].mxu0
    %v1237 = vadd.f32 0.0, %v1236
    %v1238 = vpop.f32.mrb[0].mxu0
    %v1239 = vadd.f32 0.0, %v1238
    %1240 = vmatprep.mubr.f32.mxu0 0.0
    %1241 = vmatmul.mubr.f32.gmra.mrb[0].mxu0 %v1144
    %v1242 = vpop.f32.mrb[0].mxu0
    %v1243 = vadd.f32 0.0, %v1242
    %v1244 = vpop.f32.mrb[0].mxu0
    %v1245 = vadd.f32 0.0, %v1244
    %1246 = vmatprep.mubr.f32.mxu0 0.0
    %1247 = vmatmul.mubr.f32.gmra.mrb[0].mxu0 %v1147
    %v1248 = vpop.f32.mrb[0].mxu0
    %v1249 = vadd.f32 0.0, %v1248
    %v1250 = vpop.f32.mrb[0].mxu0
    %v1251 = vadd.f32 0.0, %v1250
    %1252 = vmatprep.mubr.f32.mxu0 0.0
    %1253 = vmatmul.mubr.f32.gmra.mrb[0].mxu0 %v1150
    %v1254 = vpop.f32.mrb[0].mxu0
    %v1255 = vadd.f32 0.0, %v1254
    %v1256 = vpop.f32.mrb[0].mxu0
    %v1257 = vadd.f32 0.0, %v1256
    %1258 = vmatprep.mubr.f32.mxu0 0.0
    %1259 = vmatmul.mubr.f32.gmra.mrb[0].mxu0 %v1153
    %v1260 = vpop.f32.mrb[0].mxu0
    %v1261 = vadd.f32 0.0, %v1260
    %v1262 = vpop.f32.mrb[0].mxu0
    %v1263 = vadd.f32 0.0, %v1262
    %1264 = vmatprep.mubr.f32.mxu0 0.0
    %1265 = vmatmul.mubr.f32.gmra.mrb[0].mxu0 %v1156
    %v1266 = vpop.f32.mrb[0].mxu0
    %v1267 = vadd.f32 0.0, %v1266
    %v1268 = vpop.f32.mrb[0].mxu0
    %v1269 = vadd.f32 0.0, %v1268
    %1270 = vdwg.mxu0
    %v1271 = vadd.f32 %v1101, %v1225
    %v1272 = vadd.f32 %v1102, %v1227
    %v1273 = vadd.f32 %v1103, %v1231
    %v1274 = vadd.f32 %v1104, %v1233
    %v1275 = vadd.f32 %v1105, %v1237
    %v1276 = vadd.f32 %v1106, %v1239
    %v1277 = vadd.f32 %v1107, %v1243
    %v1278 = vadd.f32 %v1108, %v1245
    %v1279 = vadd.f32 %v1109, %v1249
    %v1280 = vadd.f32 %v1110, %v1251
    %v1281 = vadd.f32 %v1111, %v1255
    %v1282 = vadd.f32 %v1112, %v1257
    %v1283 = vadd.f32 %v1113, %v1261
    %v1284 = vadd.f32 %v1114, %v1263
    %v1285 = vadd.f32 %v1115, %v1267
    %v1286 = vadd.f32 %v1116, %v1269
    %s1287 = scalar_lea.vmem %s3, 448
    %v1288 = vld [vmem:[%s1287] sm:$0xff]
    %v1289 = vld [vmem:[%s1287 + $0x8] sm:$0xff]
    %v1290 = vld [vmem:[%s1287 + $0x10] sm:$0xff]
    %v1291 = vld [vmem:[%s1287 + $0x18] sm:$0xff]
    %v1292 = vld [vmem:[%s1287 + $0x20] sm:$0xff]
    %v1293 = vld [vmem:[%s1287 + $0x28] sm:$0xff]
    %v1294 = vld [vmem:[%s1287 + $0x30] sm:$0xff]
    %v1295 = vld [vmem:[%s1287 + $0x38] sm:$0xff]
    %1296 = vrot.lane.b32.xlu0 %v142, 121
    %v1297 = vpop.permute.xlu0 %1296
    %1298 = vrot.lane.b32.xlu0 %v143, 121
    %v1299 = vpop.permute.xlu0 %1298
    %vm1300 = vcmask 990208
    %v1301 = vsel %vm1300, %v1297, %v1299
    %v1305 = vsel %vm42, %v1288, 0
    %v1308 = vsel %vm42, %v1289, 0
    %v1311 = vsel %vm42, %v1290, 0
    %v1314 = vsel %vm42, %v1291, 0
    %v1317 = vsel %vm42, %v1292, 0
    %v1320 = vsel %vm42, %v1293, 0
    %v1323 = vsel %vm42, %v1294, 0
    %v1326 = vsel %vm42, %v1295, 0
    %1328 = vmatprep.subr.mxu0 %v1299
    %1329 = vmatpush1.msra.mxu0 %v1301
    %1330 = vmatprep.subr.mxu0 0.0
    %1331 = vmatpush1.msra.mxu0 0.0
    %1332 = vmatprep.subr.mxu0 0.0
    %1333 = vmatpush1.msra.mxu0 0.0
    %1334 = vmatprep.subr.mxu0 0.0
    %1335 = vmatpush1.msra.mxu0 0.0
    %1336 = vmatprep.subr.mxu0 0.0
    %1337 = vmatpush1.msra.mxu0 0.0
    %1338 = vmatprep.subr.mxu0 0.0
    %1339 = vmatpush1.msra.mxu0 0.0
    %1340 = vmatprep.subr.mxu0 0.0
    %1341 = vmatpush1.msra.mxu0 0.0
    %1342 = vmatprep.subr.mxu0 0.0
    %1343 = vmatpush1.msra.mxu0 0.0
    %1344 = vmatprep.subr.mxu0 0.0
    %1345 = vmatpush1.msra.mxu0 0.0
    %1346 = vmatprep.subr.mxu0 0.0
    %1347 = vmatpush1.msra.mxu0 0.0
    %1348 = vmatprep.subr.mxu0 0.0
    %1349 = vmatpush1.msra.mxu0 0.0
    %1350 = vmatprep.subr.mxu0 0.0
    %1351 = vmatpush1.msra.mxu0 0.0
    %1352 = vmatprep.subr.mxu0 0.0
    %1353 = vmatpush1.msra.mxu0 0.0
    %1354 = vmatprep.subr.mxu0 0.0
    %1355 = vmatpush1.msra.mxu0 0.0
    %1356 = vmatprep.subr.mxu0 0.0
    %1357 = vmatpush1.msra.mxu0 0.0
    %1358 = vmatprep.subr.mxu0 0.0
    %1359 = vmatpush1.msra.mxu0 0.0
    %1360 = vmatprep.subr.mxu0 0.0
    %1361 = vmatpush1.msra.mxu0 0.0
    %1362 = vmatprep.subr.mxu0 0.0
    %1363 = vmatpush1.msra.mxu0 0.0
    %1364 = vmatprep.subr.mxu0 0.0
    %1365 = vmatpush1.msra.mxu0 0.0
    %1366 = vmatprep.subr.mxu0 0.0
    %1367 = vmatpush1.msra.mxu0 0.0
    %1368 = vmatprep.subr.mxu0 0.0
    %1369 = vmatpush1.msra.mxu0 0.0
    %1370 = vmatprep.subr.mxu0 0.0
    %1371 = vmatpush1.msra.mxu0 0.0
    %1372 = vmatprep.subr.mxu0 0.0
    %1373 = vmatpush1.msra.mxu0 0.0
    %1374 = vmatprep.subr.mxu0 0.0
    %1375 = vmatpush1.msra.mxu0 0.0
    %1376 = vmatprep.subr.mxu0 0.0
    %1377 = vmatpush1.msra.mxu0 0.0
    %1378 = vmatprep.subr.mxu0 0.0
    %1379 = vmatpush1.msra.mxu0 0.0
    %1380 = vmatprep.subr.mxu0 0.0
    %1381 = vmatpush1.msra.mxu0 0.0
    %1382 = vmatprep.subr.mxu0 0.0
    %1383 = vmatpush1.msra.mxu0 0.0
    %1384 = vmatprep.subr.mxu0 0.0
    %1385 = vmatpush1.msra.mxu0 0.0
    %1386 = vmatprep.subr.mxu0 0.0
    %1387 = vmatpush1.msra.mxu0 0.0
    %1388 = vmatprep.subr.mxu0 0.0
    %1389 = vmatpush1.msra.mxu0 0.0
    %1390 = vmatprep.subr.mxu0 0.0
    %1391 = vmatpush1.msra.mxu0 0.0
    %1392 = vmatprep.mubr.f32.mxu0 0.0
    %1393 = vmatmul.mubr.f32.gmra.mrb[0].mxu0 %v1305
    %v1394 = vpop.f32.mrb[0].mxu0
    %v1395 = vadd.f32 0.0, %v1394
    %v1396 = vpop.f32.mrb[0].mxu0
    %v1397 = vadd.f32 0.0, %v1396
    %1398 = vmatprep.mubr.f32.mxu0 0.0
    %1399 = vmatmul.mubr.f32.gmra.mrb[0].mxu0 %v1308
    %v1400 = vpop.f32.mrb[0].mxu0
    %v1401 = vadd.f32 0.0, %v1400
    %v1402 = vpop.f32.mrb[0].mxu0
    %v1403 = vadd.f32 0.0, %v1402
    %1404 = vmatprep.mubr.f32.mxu0 0.0
    %1405 = vmatmul.mubr.f32.gmra.mrb[0].mxu0 %v1311
    %v1406 = vpop.f32.mrb[0].mxu0
    %v1407 = vadd.f32 0.0, %v1406
    %v1408 = vpop.f32.mrb[0].mxu0
    %v1409 = vadd.f32 0.0, %v1408
    %1410 = vmatprep.mubr.f32.mxu0 0.0
    %1411 = vmatmul.mubr.f32.gmra.mrb[0].mxu0 %v1314
    %v1412 = vpop.f32.mrb[0].mxu0
    %v1413 = vadd.f32 0.0, %v1412
    %v1414 = vpop.f32.mrb[0].mxu0
    %v1415 = vadd.f32 0.0, %v1414
    %1416 = vmatprep.mubr.f32.mxu0 0.0
    %1417 = vmatmul.mubr.f32.gmra.mrb[0].mxu0 %v1317
    %v1418 = vpop.f32.mrb[0].mxu0
    %v1419 = vadd.f32 0.0, %v1418
    %v1420 = vpop.f32.mrb[0].mxu0
    %v1421 = vadd.f32 0.0, %v1420
    %1422 = vmatprep.mubr.f32.mxu0 0.0
    %1423 = vmatmul.mubr.f32.gmra.mrb[0].mxu0 %v1320
    %v1424 = vpop.f32.mrb[0].mxu0
    %v1425 = vadd.f32 0.0, %v1424
    %v1426 = vpop.f32.mrb[0].mxu0
    %v1427 = vadd.f32 0.0, %v1426
    %1428 = vmatprep.mubr.f32.mxu0 0.0
    %1429 = vmatmul.mubr.f32.gmra.mrb[0].mxu0 %v1323
    %v1430 = vpop.f32.mrb[0].mxu0
    %v1431 = vadd.f32 0.0, %v1430
    %v1432 = vpop.f32.mrb[0].mxu0
    %v1433 = vadd.f32 0.0, %v1432
    %1434 = vmatprep.mubr.f32.mxu0 0.0
    %1435 = vmatmul.mubr.f32.gmra.mrb[0].mxu0 %v1326
    %v1436 = vpop.f32.mrb[0].mxu0
    %v1437 = vadd.f32 0.0, %v1436
    %v1438 = vpop.f32.mrb[0].mxu0
    %v1439 = vadd.f32 0.0, %v1438
    %1440 = vdwg.mxu0
    %v1441 = vadd.f32 %v1271, %v1395
    %v1442 = vadd.f32 %v1272, %v1397
    %v1443 = vadd.f32 %v1273, %v1401
    %v1444 = vadd.f32 %v1274, %v1403
    %v1445 = vadd.f32 %v1275, %v1407
    %v1446 = vadd.f32 %v1276, %v1409
    %v1447 = vadd.f32 %v1277, %v1413
    %v1448 = vadd.f32 %v1278, %v1415
    %v1449 = vadd.f32 %v1279, %v1419
    %v1450 = vadd.f32 %v1280, %v1421
    %v1451 = vadd.f32 %v1281, %v1425
    %v1452 = vadd.f32 %v1282, %v1427
    %v1453 = vadd.f32 %v1283, %v1431
    %v1454 = vadd.f32 %v1284, %v1433
    %v1455 = vadd.f32 %v1285, %v1437
    %v1456 = vadd.f32 %v1286, %v1439
    %v1457 = vld [vmem:[%s4] sm:$0xff]
    %v1458 = vld [vmem:[%s4 + $0x8] sm:$0xff]
    %v1459 = vld [vmem:[%s4 + $0x10] sm:$0xff]
    %v1460 = vld [vmem:[%s4 + $0x18] sm:$0xff]
    %v1461 = vld [vmem:[%s4 + $0x20] sm:$0xff]
    %v1462 = vld [vmem:[%s4 + $0x28] sm:$0xff]
    %v1463 = vld [vmem:[%s4 + $0x30] sm:$0xff]
    %v1464 = vld [vmem:[%s4 + $0x38] sm:$0xff]
    %1466 = vset.pattern.permute.xlu0 0
    %1467 = vperm.xlu0 %1466, %v1457
    %v1468 = vpop.permute.xlu0 %1467
    %1471 = vset.pattern.permute.xlu0 0
    %1472 = vperm.xlu0 %1471, %v1458
    %v1473 = vpop.permute.xlu0 %1472
    %1476 = vset.pattern.permute.xlu0 0
    %1477 = vperm.xlu0 %1476, %v1459
    %v1478 = vpop.permute.xlu0 %1477
    %1481 = vset.pattern.permute.xlu0 0
    %1482 = vperm.xlu0 %1481, %v1460
    %v1483 = vpop.permute.xlu0 %1482
    %1486 = vset.pattern.permute.xlu0 0
    %1487 = vperm.xlu0 %1486, %v1461
    %v1488 = vpop.permute.xlu0 %1487
    %1491 = vset.pattern.permute.xlu0 0
    %1492 = vperm.xlu0 %1491, %v1462
    %v1493 = vpop.permute.xlu0 %1492
    %1496 = vset.pattern.permute.xlu0 0
    %1497 = vperm.xlu0 %1496, %v1463
    %v1498 = vpop.permute.xlu0 %1497
    %1501 = vset.pattern.permute.xlu0 0
    %1502 = vperm.xlu0 %1501, %v1464
    %v1503 = vpop.permute.xlu0 %1502
    %v1505 = vadd.f32 %v1441, %v1468
    %v1506 = vadd.f32 %v1442, %v1468
    %v1507 = vadd.f32 %v1443, %v1473
    %v1508 = vadd.f32 %v1444, %v1473
    %v1509 = vadd.f32 %v1445, %v1478
    %v1510 = vadd.f32 %v1446, %v1478
    %v1511 = vadd.f32 %v1447, %v1483
    %v1512 = vadd.f32 %v1448, %v1483
    %v1513 = vadd.f32 %v1449, %v1488
    %v1514 = vadd.f32 %v1450, %v1488
    %v1515 = vadd.f32 %v1451, %v1493
    %v1516 = vadd.f32 %v1452, %v1493
    %v1517 = vadd.f32 %v1453, %v1498
    %v1518 = vadd.f32 %v1454, %v1498
    %v1519 = vadd.f32 %v1455, %v1503
    %v1520 = vadd.f32 %v1456, %v1503
    %v1521 = vmax.f32 %v1505, 0.0
    %v1522 = vmax.f32 %v1506, 0.0
    %v1523 = vmax.f32 %v1507, 0.0
    %v1524 = vmax.f32 %v1508, 0.0
    %v1525 = vmax.f32 %v1509, 0.0
    %v1526 = vmax.f32 %v1510, 0.0
    %v1527 = vmax.f32 %v1511, 0.0
    %v1528 = vmax.f32 %v1512, 0.0
    %v1529 = vmax.f32 %v1513, 0.0
    %v1530 = vmax.f32 %v1514, 0.0
    %v1531 = vmax.f32 %v1515, 0.0
    %v1532 = vmax.f32 %v1516, 0.0
    %v1533 = vmax.f32 %v1517, 0.0
    %v1534 = vmax.f32 %v1518, 0.0
    %v1535 = vmax.f32 %v1519, 0.0
    %v1536 = vmax.f32 %v1520, 0.0
    %v1537 = vlaneseq
    %v1538 = vshrl.u32 %v1537, 7
    %v1539 = vadd.s32 %v1538, 8
    %v1540 = vadd.s32 %v1538, 16
    %v1541 = vadd.s32 %v1538, 24
    %v1542 = vadd.s32 %v1538, 32
    %v1543 = vadd.s32 %v1538, 40
    %v1544 = vadd.s32 %v1538, 48
    %v1545 = vadd.s32 %v1538, 56
    %v1546 = vadd.s32 %v1538, 64
    %v1547 = vadd.s32 %v1538, 72
    %v1548 = vadd.s32 %v1538, 80
    %v1549 = vadd.s32 %v1538, 88
    %v1550 = vadd.s32 %v1538, 96
    %v1551 = vadd.s32 %v1538, 104
    %v1552 = vadd.s32 %v1538, 112
    %v1553 = vadd.s32 %v1538, 120
    %v1554 = vadd.s32 %v1538, 128
    %v1555 = vadd.s32 %v1538, 136
    %v1556 = vadd.s32 %v1538, 144
    %v1557 = vadd.s32 %v1538, 152
    %v1558 = vadd.s32 %v1538, 160
    %v1559 = vlaneseq
    %v1560 = vand.u32 %v1559, 127
    %v1561 = vmul.u32 %v1560, 2
    %vm1562 = vcmp.eq.s32.totalorder %v1538, %v1561
    %vm1563 = vcmp.eq.s32.totalorder %v1539, %v1561
    %vm1564 = vcmp.eq.s32.totalorder %v1540, %v1561
    %vm1565 = vcmp.eq.s32.totalorder %v1541, %v1561
    %vm1566 = vcmp.eq.s32.totalorder %v1542, %v1561
    %vm1567 = vcmp.eq.s32.totalorder %v1543, %v1561
    %vm1568 = vcmp.eq.s32.totalorder %v1544, %v1561
    %vm1569 = vcmp.eq.s32.totalorder %v1545, %v1561
    %vm1570 = vcmp.eq.s32.totalorder %v1546, %v1561
    %vm1571 = vcmp.eq.s32.totalorder %v1547, %v1561
    %vm1572 = vcmp.eq.s32.totalorder %v1548, %v1561
    %vm1573 = vcmp.eq.s32.totalorder %v1549, %v1561
    %vm1574 = vcmp.eq.s32.totalorder %v1550, %v1561
    %vm1575 = vcmp.eq.s32.totalorder %v1551, %v1561
    %vm1576 = vcmp.eq.s32.totalorder %v1552, %v1561
    %vm1577 = vcmp.eq.s32.totalorder %v1553, %v1561
    %vm1578 = vcmp.eq.s32.totalorder %v1554, %v1561
    %vm1579 = vcmp.eq.s32.totalorder %v1555, %v1561
    %vm1580 = vcmp.eq.s32.totalorder %v1556, %v1561
    %vm1581 = vcmp.eq.s32.totalorder %v1557, %v1561
    %vm1582 = vcmp.eq.s32.totalorder %v1558, %v1561
    %v1583 = vsel %vm1562, 1.0, 0.0
    %v1584 = vsel %vm1563, 1.0, 0.0
    %v1585 = vsel %vm1564, 1.0, 0.0
    %v1586 = vsel %vm1565, 1.0, 0.0
    %v1587 = vsel %vm1566, 1.0, 0.0
    %v1588 = vsel %vm1567, 1.0, 0.0
    %v1589 = vsel %vm1568, 1.0, 0.0
    %v1590 = vsel %vm1569, 1.0, 0.0
    %v1591 = vsel %vm1570, 1.0, 0.0
    %v1592 = vsel %vm1571, 1.0, 0.0
    %v1593 = vsel %vm1572, 1.0, 0.0
    %v1594 = vsel %vm1573, 1.0, 0.0
    %v1595 = vsel %vm1574, 1.0, 0.0
    %v1596 = vsel %vm1575, 1.0, 0.0
    %v1597 = vsel %vm1576, 1.0, 0.0
    %v1598 = vsel %vm1577, 1.0, 0.0
    %v1599 = vsel %vm1578, 1.0, 0.0
    %v1600 = vsel %vm1579, 1.0, 0.0
    %v1601 = vsel %vm1580, 1.0, 0.0
    %v1602 = vsel %vm1581, 1.0, 0.0
    %v1603 = vsel %vm1582, 1.0, 0.0
    %v1604 = vadd.s32 %v1561, 1
    %vm1605 = vcmp.eq.s32.totalorder %v1538, %v1604
    %vm1606 = vcmp.eq.s32.totalorder %v1539, %v1604
    %vm1607 = vcmp.eq.s32.totalorder %v1540, %v1604
    %vm1608 = vcmp.eq.s32.totalorder %v1541, %v1604
    %vm1609 = vcmp.eq.s32.totalorder %v1542, %v1604
    %vm1610 = vcmp.eq.s32.totalorder %v1543, %v1604
    %vm1611 = vcmp.eq.s32.totalorder %v1544, %v1604
    %vm1612 = vcmp.eq.s32.totalorder %v1545, %v1604
    %vm1613 = vcmp.eq.s32.totalorder %v1546, %v1604
    %vm1614 = vcmp.eq.s32.totalorder %v1547, %v1604
    %vm1615 = vcmp.eq.s32.totalorder %v1548, %v1604
    %vm1616 = vcmp.eq.s32.totalorder %v1549, %v1604
    %vm1617 = vcmp.eq.s32.totalorder %v1550, %v1604
    %vm1618 = vcmp.eq.s32.totalorder %v1551, %v1604
    %vm1619 = vcmp.eq.s32.totalorder %v1552, %v1604
    %vm1620 = vcmp.eq.s32.totalorder %v1553, %v1604
    %vm1621 = vcmp.eq.s32.totalorder %v1554, %v1604
    %vm1622 = vcmp.eq.s32.totalorder %v1555, %v1604
    %vm1623 = vcmp.eq.s32.totalorder %v1556, %v1604
    %vm1624 = vcmp.eq.s32.totalorder %v1557, %v1604
    %vm1625 = vcmp.eq.s32.totalorder %v1558, %v1604
    %v1626 = vsel %vm1605, 1.0, 0.0
    %v1627 = vsel %vm1606, 1.0, 0.0
    %v1628 = vsel %vm1607, 1.0, 0.0
    %v1629 = vsel %vm1608, 1.0, 0.0
    %v1630 = vsel %vm1609, 1.0, 0.0
    %v1631 = vsel %vm1610, 1.0, 0.0
    %v1632 = vsel %vm1611, 1.0, 0.0
    %v1633 = vsel %vm1612, 1.0, 0.0
    %v1634 = vsel %vm1613, 1.0, 0.0
    %v1635 = vsel %vm1614, 1.0, 0.0
    %v1636 = vsel %vm1615, 1.0, 0.0
    %v1637 = vsel %vm1616, 1.0, 0.0
    %v1638 = vsel %vm1617, 1.0, 0.0
    %v1639 = vsel %vm1618, 1.0, 0.0
    %v1640 = vsel %vm1619, 1.0, 0.0
    %v1641 = vsel %vm1620, 1.0, 0.0
    %v1642 = vsel %vm1621, 1.0, 0.0
    %v1643 = vsel %vm1622, 1.0, 0.0
    %v1644 = vsel %vm1623, 1.0, 0.0
    %v1645 = vsel %vm1624, 1.0, 0.0
    %v1646 = vsel %vm1625, 1.0, 0.0
    %vm1647 = vcmask 269312
    %v1649 = vsel %vm1647, %v1522, 0
    %v1652 = vsel %vm1647, %v1524, 0
    %v1655 = vsel %vm1647, %v1526, 0
    %v1658 = vsel %vm1647, %v1528, 0
    %v1661 = vsel %vm1647, %v1530, 0
    %v1664 = vsel %vm1647, %v1532, 0
    %v1667 = vsel %vm1647, %v1534, 0
    %v1670 = vsel %vm1647, %v1536, 0
    %vm1672 = vcmask 1040384
    %v1674 = vsel %vm1672, %v1603, 0
    %1676 = vmatprep.subr.mxu0 0.0
    %1677 = vmatpush1.msra.mxu0 %v1583
    %1678 = vmatprep.subr.mxu0 0.0
    %1679 = vmatpush1.msra.mxu0 %v1584
    %1680 = vmatprep.subr.mxu0 0.0
    %1681 = vmatpush1.msra.mxu0 %v1585
    %1682 = vmatprep.subr.mxu0 0.0
    %1683 = vmatpush1.msra.mxu0 %v1586
    %1684 = vmatprep.subr.mxu0 0.0
    %1685 = vmatpush1.msra.mxu0 %v1587
    %1686 = vmatprep.subr.mxu0 0.0
    %1687 = vmatpush1.msra.mxu0 %v1588
    %1688 = vmatprep.subr.mxu0 0.0
    %1689 = vmatpush1.msra.mxu0 %v1589
    %1690 = vmatprep.subr.mxu0 0.0
    %1691 = vmatpush1.msra.mxu0 %v1590
    %1692 = vmatprep.subr.mxu0 0.0
    %1693 = vmatpush1.msra.mxu0 %v1591
    %1694 = vmatprep.subr.mxu0 0.0
    %1695 = vmatpush1.msra.mxu0 %v1592
    %1696 = vmatprep.subr.mxu0 0.0
    %1697 = vmatpush1.msra.mxu0 %v1593
    %1698 = vmatprep.subr.mxu0 0.0
    %1699 = vmatpush1.msra.mxu0 %v1594
    %1700 = vmatprep.subr.mxu0 0.0
    %1701 = vmatpush1.msra.mxu0 %v1595
    %1702 = vmatprep.subr.mxu0 0.0
    %1703 = vmatpush1.msra.mxu0 %v1596
    %1704 = vmatprep.subr.mxu0 0.0
    %1705 = vmatpush1.msra.mxu0 %v1597
    %1706 = vmatprep.subr.mxu0 0.0
    %1707 = vmatpush1.msra.mxu0 %v1598
    %1708 = vmatprep.subr.mxu0 0.0
    %1709 = vmatpush1.msra.mxu0 %v1599
    %1710 = vmatprep.subr.mxu0 0.0
    %1711 = vmatpush1.msra.mxu0 %v1600
    %1712 = vmatprep.subr.mxu0 0.0
    %1713 = vmatpush1.msra.mxu0 %v1601
    %1714 = vmatprep.subr.mxu0 0.0
    %1715 = vmatpush1.msra.mxu0 %v1602
    %1716 = vmatprep.subr.mxu0 0.0
    %1717 = vmatpush1.msra.mxu0 %v1674
    %1718 = vmatprep.subr.mxu0 0.0
    %1719 = vmatpush1.msra.mxu0 0.0
    %1720 = vmatprep.subr.mxu0 0.0
    %1721 = vmatpush1.msra.mxu0 0.0
    %1722 = vmatprep.subr.mxu0 0.0
    %1723 = vmatpush1.msra.mxu0 0.0
    %1724 = vmatprep.subr.mxu0 0.0
    %1725 = vmatpush1.msra.mxu0 0.0
    %1726 = vmatprep.subr.mxu0 0.0
    %1727 = vmatpush1.msra.mxu0 0.0
    %1728 = vmatprep.subr.mxu0 0.0
    %1729 = vmatpush1.msra.mxu0 0.0
    %1730 = vmatprep.subr.mxu0 0.0
    %1731 = vmatpush1.msra.mxu0 0.0
    %1732 = vmatprep.subr.mxu0 0.0
    %1733 = vmatpush1.msra.mxu0 0.0
    %1734 = vmatprep.subr.mxu0 0.0
    %1735 = vmatpush1.msra.mxu0 0.0
    %1736 = vmatprep.subr.mxu0 0.0
    %1737 = vmatpush1.msra.mxu0 0.0
    %1738 = vmatprep.subr.mxu0 0.0
    %1739 = vmatpush1.msra.mxu0 0.0
    %1740 = vmatprep.mubr.f32.mxu0 %v1649
    %1741 = vmatmul.mubr.f32.gmra.mrb[0].mxu0 %v1521
    %v1742 = vpop.f32.mrb[0].mxu0
    %v1743 = vadd.f32 0.0, %v1742
    %v1744 = vpop.f32.mrb[0].mxu0
    %1745 = vmatprep.mubr.f32.mxu0 %v1652
    %1746 = vmatmul.mubr.f32.gmra.mrb[0].mxu0 %v1523
    %v1747 = vpop.f32.mrb[0].mxu0
    %v1748 = vadd.f32 0.0, %v1747
    %v1749 = vpop.f32.mrb[0].mxu0
    %1750 = vmatprep.mubr.f32.mxu0 %v1655
    %1751 = vmatmul.mubr.f32.gmra.mrb[0].mxu0 %v1525
    %v1752 = vpop.f32.mrb[0].mxu0
    %v1753 = vadd.f32 0.0, %v1752
    %v1754 = vpop.f32.mrb[0].mxu0
    %1755 = vmatprep.mubr.f32.mxu0 %v1658
    %1756 = vmatmul.mubr.f32.gmra.mrb[0].mxu0 %v1527
    %v1757 = vpop.f32.mrb[0].mxu0
    %v1758 = vadd.f32 0.0, %v1757
    %v1759 = vpop.f32.mrb[0].mxu0
    %1760 = vmatprep.mubr.f32.mxu0 %v1661
    %1761 = vmatmul.mubr.f32.gmra.mrb[0].mxu0 %v1529
    %v1762 = vpop.f32.mrb[0].mxu0
    %v1763 = vadd.f32 0.0, %v1762
    %v1764 = vpop.f32.mrb[0].mxu0
    %1765 = vmatprep.mubr.f32.mxu0 %v1664
    %1766 = vmatmul.mubr.f32.gmra.mrb[0].mxu0 %v1531
    %v1767 = vpop.f32.mrb[0].mxu0
    %v1768 = vadd.f32 0.0, %v1767
    %v1769 = vpop.f32.mrb[0].mxu0
    %1770 = vmatprep.mubr.f32.mxu0 %v1667
    %1771 = vmatmul.mubr.f32.gmra.mrb[0].mxu0 %v1533
    %v1772 = vpop.f32.mrb[0].mxu0
    %v1773 = vadd.f32 0.0, %v1772
    %v1774 = vpop.f32.mrb[0].mxu0
    %1775 = vmatprep.mubr.f32.mxu0 %v1670
    %1776 = vmatmul.mubr.f32.gmra.mrb[0].mxu0 %v1535
    %v1777 = vpop.f32.mrb[0].mxu0
    %v1778 = vadd.f32 0.0, %v1777
    %v1779 = vpop.f32.mrb[0].mxu0
    %1780 = vdwg.mxu0
    %v1782 = vsel %vm1672, %v1646, 0
    %1784 = vmatprep.subr.mxu0 0.0
    %1785 = vmatpush1.msra.mxu0 %v1626
    %1786 = vmatprep.subr.mxu0 0.0
    %1787 = vmatpush1.msra.mxu0 %v1627
    %1788 = vmatprep.subr.mxu0 0.0
    %1789 = vmatpush1.msra.mxu0 %v1628
    %1790 = vmatprep.subr.mxu0 0.0
    %1791 = vmatpush1.msra.mxu0 %v1629
    %1792 = vmatprep.subr.mxu0 0.0
    %1793 = vmatpush1.msra.mxu0 %v1630
    %1794 = vmatprep.subr.mxu0 0.0
    %1795 = vmatpush1.msra.mxu0 %v1631
    %1796 = vmatprep.subr.mxu0 0.0
    %1797 = vmatpush1.msra.mxu0 %v1632
    %1798 = vmatprep.subr.mxu0 0.0
    %1799 = vmatpush1.msra.mxu0 %v1633
    %1800 = vmatprep.subr.mxu0 0.0
    %1801 = vmatpush1.msra.mxu0 %v1634
    %1802 = vmatprep.subr.mxu0 0.0
    %1803 = vmatpush1.msra.mxu0 %v1635
    %1804 = vmatprep.subr.mxu0 0.0
    %1805 = vmatpush1.msra.mxu0 %v1636
    %1806 = vmatprep.subr.mxu0 0.0
    %1807 = vmatpush1.msra.mxu0 %v1637
    %1808 = vmatprep.subr.mxu0 0.0
    %1809 = vmatpush1.msra.mxu0 %v1638
    %1810 = vmatprep.subr.mxu0 0.0
    %1811 = vmatpush1.msra.mxu0 %v1639
    %1812 = vmatprep.subr.mxu0 0.0
    %1813 = vmatpush1.msra.mxu0 %v1640
    %1814 = vmatprep.subr.mxu0 0.0
    %1815 = vmatpush1.msra.mxu0 %v1641
    %1816 = vmatprep.subr.mxu0 0.0
    %1817 = vmatpush1.msra.mxu0 %v1642
    %1818 = vmatprep.subr.mxu0 0.0
    %1819 = vmatpush1.msra.mxu0 %v1643
    %1820 = vmatprep.subr.mxu0 0.0
    %1821 = vmatpush1.msra.mxu0 %v1644
    %1822 = vmatprep.subr.mxu0 0.0
    %1823 = vmatpush1.msra.mxu0 %v1645
    %1824 = vmatprep.subr.mxu0 0.0
    %1825 = vmatpush1.msra.mxu0 %v1782
    %1826 = vmatprep.subr.mxu0 0.0
    %1827 = vmatpush1.msra.mxu0 0.0
    %1828 = vmatprep.subr.mxu0 0.0
    %1829 = vmatpush1.msra.mxu0 0.0
    %1830 = vmatprep.subr.mxu0 0.0
    %1831 = vmatpush1.msra.mxu0 0.0
    %1832 = vmatprep.subr.mxu0 0.0
    %1833 = vmatpush1.msra.mxu0 0.0
    %1834 = vmatprep.subr.mxu0 0.0
    %1835 = vmatpush1.msra.mxu0 0.0
    %1836 = vmatprep.subr.mxu0 0.0
    %1837 = vmatpush1.msra.mxu0 0.0
    %1838 = vmatprep.subr.mxu0 0.0
    %1839 = vmatpush1.msra.mxu0 0.0
    %1840 = vmatprep.subr.mxu0 0.0
    %1841 = vmatpush1.msra.mxu0 0.0
    %1842 = vmatprep.subr.mxu0 0.0
    %1843 = vmatpush1.msra.mxu0 0.0
    %1844 = vmatprep.subr.mxu0 0.0
    %1845 = vmatpush1.msra.mxu0 0.0
    %1846 = vmatprep.subr.mxu0 0.0
    %1847 = vmatpush1.msra.mxu0 0.0
    %1848 = vmatprep.mubr.f32.mxu0 %v1649
    %1849 = vmatmul.mubr.f32.gmra.mrb[0].mxu0 %v1521
    %v1850 = vpop.f32.mrb[0].mxu0
    %v1851 = vadd.f32 0.0, %v1850
    %v1852 = vpop.f32.mrb[0].mxu0
    %1853 = vmatprep.mubr.f32.mxu0 %v1652
    %1854 = vmatmul.mubr.f32.gmra.mrb[0].mxu0 %v1523
    %v1855 = vpop.f32.mrb[0].mxu0
    %v1856 = vadd.f32 0.0, %v1855
    %v1857 = vpop.f32.mrb[0].mxu0
    %1858 = vmatprep.mubr.f32.mxu0 %v1655
    %1859 = vmatmul.mubr.f32.gmra.mrb[0].mxu0 %v1525
    %v1860 = vpop.f32.mrb[0].mxu0
    %v1861 = vadd.f32 0.0, %v1860
    %v1862 = vpop.f32.mrb[0].mxu0
    %1863 = vmatprep.mubr.f32.mxu0 %v1658
    %1864 = vmatmul.mubr.f32.gmra.mrb[0].mxu0 %v1527
    %v1865 = vpop.f32.mrb[0].mxu0
    %v1866 = vadd.f32 0.0, %v1865
    %v1867 = vpop.f32.mrb[0].mxu0
    %1868 = vmatprep.mubr.f32.mxu0 %v1661
    %1869 = vmatmul.mubr.f32.gmra.mrb[0].mxu0 %v1529
    %v1870 = vpop.f32.mrb[0].mxu0
    %v1871 = vadd.f32 0.0, %v1870
    %v1872 = vpop.f32.mrb[0].mxu0
    %1873 = vmatprep.mubr.f32.mxu0 %v1664
    %1874 = vmatmul.mubr.f32.gmra.mrb[0].mxu0 %v1531
    %v1875 = vpop.f32.mrb[0].mxu0
    %v1876 = vadd.f32 0.0, %v1875
    %v1877 = vpop.f32.mrb[0].mxu0
    %1878 = vmatprep.mubr.f32.mxu0 %v1667
    %1879 = vmatmul.mubr.f32.gmra.mrb[0].mxu0 %v1533
    %v1880 = vpop.f32.mrb[0].mxu0
    %v1881 = vadd.f32 0.0, %v1880
    %v1882 = vpop.f32.mrb[0].mxu0
    %1883 = vmatprep.mubr.f32.mxu0 %v1670
    %1884 = vmatmul.mubr.f32.gmra.mrb[0].mxu0 %v1535
    %v1885 = vpop.f32.mrb[0].mxu0
    %v1886 = vadd.f32 0.0, %v1885
    %v1887 = vpop.f32.mrb[0].mxu0
    %1888 = vdwg.mxu0
    %v1889 = vmax.f32 %v1743, %v1851
    %v1890 = vmax.f32 %v1748, %v1856
    %v1891 = vmax.f32 %v1753, %v1861
    %v1892 = vmax.f32 %v1758, %v1866
    %v1893 = vmax.f32 %v1763, %v1871
    %v1894 = vmax.f32 %v1768, %v1876
    %v1895 = vmax.f32 %v1773, %v1881
    %v1896 = vmax.f32 %v1778, %v1886
    %vm1897 = vcmask 719872
    %1898 = vst.msk [vmem:[#allocation3] sm:$0xff] %vm1897, 0.0
    %1899 = vst.msk [vmem:[#allocation3 + $0x8] sm:$0xff] %vm1897, 0.0
    %1900 = vst.msk [vmem:[#allocation3 + $0x10] sm:$0xff] %vm1897, 0.0
    %1901 = vst.msk [vmem:[#allocation3 + $0x18] sm:$0xff] %vm1897, 0.0
    %1902 = vst.msk [vmem:[#allocation3 + $0x20] sm:$0xff] %vm1897, 0.0
    %1903 = vst.msk [vmem:[#allocation3 + $0x28] sm:$0xff] %vm1897, 0.0
    %1904 = vst.msk [vmem:[#allocation3 + $0x30] sm:$0xff] %vm1897, 0.0
    %1905 = vst.msk [vmem:[#allocation3 + $0x38] sm:$0xff] %vm1897, 0.0
    %1914 = vrot.lane.b32.xlu0 %v1889, 4
    %v1915 = vpop.permute.xlu0 %1914
    %1916 = vrot.lane.b32.xlu0 %v1890, 4
    %v1917 = vpop.permute.xlu0 %1916
    %1918 = vrot.lane.b32.xlu0 %v1891, 4
    %v1919 = vpop.permute.xlu0 %1918
    %1920 = vrot.lane.b32.xlu0 %v1892, 4
    %v1921 = vpop.permute.xlu0 %1920
    %1922 = vrot.lane.b32.xlu0 %v1893, 4
    %v1923 = vpop.permute.xlu0 %1922
    %1924 = vrot.lane.b32.xlu0 %v1894, 4
    %v1925 = vpop.permute.xlu0 %1924
    %1926 = vrot.lane.b32.xlu0 %v1895, 4
    %v1927 = vpop.permute.xlu0 %1926
    %1928 = vrot.lane.b32.xlu0 %v1896, 4
    %v1929 = vpop.permute.xlu0 %1928
    %vm1938 = vcmask 687136
    %1939 = vst.msk [vmem:[#allocation3] sm:$0xff] %vm1938, %v1915
    %1940 = vst.msk [vmem:[#allocation3 + $0x8] sm:$0xff] %vm1938, %v1917
    %1941 = vst.msk [vmem:[#allocation3 + $0x10] sm:$0xff] %vm1938, %v1919
    %1942 = vst.msk [vmem:[#allocation3 + $0x18] sm:$0xff] %vm1938, %v1921
    %1943 = vst.msk [vmem:[#allocation3 + $0x20] sm:$0xff] %vm1938, %v1923
    %1944 = vst.msk [vmem:[#allocation3 + $0x28] sm:$0xff] %vm1938, %v1925
    %1945 = vst.msk [vmem:[#allocation3 + $0x30] sm:$0xff] %vm1938, %v1927
    %1946 = vst.msk [vmem:[#allocation3 + $0x38] sm:$0xff] %vm1938, %v1929
    %v1947 = vld [vmem:[%s5] sm:$0xff]
    %v1948 = vld [vmem:[%s5 + $0x8] sm:$0xff]
    %v1949 = vld [vmem:[%s5 + $0x10] sm:$0xff]
    %v1950 = vld [vmem:[%s5 + $0x18] sm:$0xff]
    %v1951 = vld [vmem:[%s5 + $0x20] sm:$0xff]
    %v1952 = vld [vmem:[%s5 + $0x28] sm:$0xff]
    %v1953 = vld [vmem:[%s5 + $0x30] sm:$0xff]
    %v1954 = vld [vmem:[%s5 + $0x38] sm:$0xff]
    %v1955 = vld [vmem:[#allocation3] sm:$0xff]
    %v1956 = vld [vmem:[#allocation3 + $0x8] sm:$0xff]
    %v1957 = vld [vmem:[#allocation3 + $0x10] sm:$0xff]
    %v1958 = vld [vmem:[#allocation3 + $0x18] sm:$0xff]
    %v1959 = vld [vmem:[#allocation3 + $0x20] sm:$0xff]
    %v1960 = vld [vmem:[#allocation3 + $0x28] sm:$0xff]
    %v1961 = vld [vmem:[#allocation3 + $0x30] sm:$0xff]
    %v1962 = vld [vmem:[#allocation3 + $0x38] sm:$0xff]
    %s1963 = scalar_lea.vmem %s5, 64
    %v1964 = vld [vmem:[%s1963] sm:$0xff]
    %v1965 = vld [vmem:[%s1963 + $0x8] sm:$0xff]
    %v1966 = vld [vmem:[%s1963 + $0x10] sm:$0xff]
    %v1967 = vld [vmem:[%s1963 + $0x18] sm:$0xff]
    %v1968 = vld [vmem:[%s1963 + $0x20] sm:$0xff]
    %v1969 = vld [vmem:[%s1963 + $0x28] sm:$0xff]
    %v1970 = vld [vmem:[%s1963 + $0x30] sm:$0xff]
    %v1971 = vld [vmem:[%s1963 + $0x38] sm:$0xff]
    %1980 = vrot.lane.b32.xlu0 %v1955, 127
    %v1981 = vpop.permute.xlu0 %1980
    %1982 = vrot.lane.b32.xlu0 %v1956, 127
    %v1983 = vpop.permute.xlu0 %1982
    %1984 = vrot.lane.b32.xlu0 %v1957, 127
    %v1985 = vpop.permute.xlu0 %1984
    %1986 = vrot.lane.b32.xlu0 %v1958, 127
    %v1987 = vpop.permute.xlu0 %1986
    %1988 = vrot.lane.b32.xlu0 %v1959, 127
    %v1989 = vpop.permute.xlu0 %1988
    %1990 = vrot.lane.b32.xlu0 %v1960, 127
    %v1991 = vpop.permute.xlu0 %1990
    %1992 = vrot.lane.b32.xlu0 %v1961, 127
    %v1993 = vpop.permute.xlu0 %1992
    %1994 = vrot.lane.b32.xlu0 %v1962, 127
    %v1995 = vpop.permute.xlu0 %1994
    %vm2004 = vcmask 523264
    %v2006 = vsel %vm2004, %v1964, 0
    %v2009 = vsel %vm2004, %v1965, 0
    %v2012 = vsel %vm2004, %v1966, 0
    %v2015 = vsel %vm2004, %v1967, 0
    %v2018 = vsel %vm2004, %v1968, 0
    %v2021 = vsel %vm2004, %v1969, 0
    %v2024 = vsel %vm2004, %v1970, 0
    %v2027 = vsel %vm2004, %v1971, 0
    %2029 = vmatprep.subr.mxu0 0.0
    %2030 = vmatpush1.msra.mxu0 %v1981
    %2031 = vmatprep.subr.mxu0 0.0
    %2032 = vmatpush1.msra.mxu0 %v1983
    %2033 = vmatprep.subr.mxu0 0.0
    %2034 = vmatpush1.msra.mxu0 %v1985
    %2035 = vmatprep.subr.mxu0 0.0
    %2036 = vmatpush1.msra.mxu0 %v1987
    %2037 = vmatprep.subr.mxu0 0.0
    %2038 = vmatpush1.msra.mxu0 %v1989
    %2039 = vmatprep.subr.mxu0 0.0
    %2040 = vmatpush1.msra.mxu0 %v1991
    %2041 = vmatprep.subr.mxu0 0.0
    %2042 = vmatpush1.msra.mxu0 %v1993
    %2043 = vmatprep.subr.mxu0 0.0
    %2044 = vmatpush1.msra.mxu0 %v1995
    %2045 = vmatprep.subr.mxu0 0.0
    %2046 = vmatpush1.msra.mxu0 0.0
    %2047 = vmatprep.subr.mxu0 0.0
    %2048 = vmatpush1.msra.mxu0 0.0
    %2049 = vmatprep.subr.mxu0 0.0
    %2050 = vmatpush1.msra.mxu0 0.0
    %2051 = vmatprep.subr.mxu0 0.0
    %2052 = vmatpush1.msra.mxu0 0.0
    %2053 = vmatprep.subr.mxu0 0.0
    %2054 = vmatpush1.msra.mxu0 0.0
    %2055 = vmatprep.subr.mxu0 0.0
    %2056 = vmatpush1.msra.mxu0 0.0
    %2057 = vmatprep.subr.mxu0 0.0
    %2058 = vmatpush1.msra.mxu0 0.0
    %2059 = vmatprep.subr.mxu0 0.0
    %2060 = vmatpush1.msra.mxu0 0.0
    %2061 = vmatprep.subr.mxu0 0.0
    %2062 = vmatpush1.msra.mxu0 0.0
    %2063 = vmatprep.subr.mxu0 0.0
    %2064 = vmatpush1.msra.mxu0 0.0
    %2065 = vmatprep.subr.mxu0 0.0
    %2066 = vmatpush1.msra.mxu0 0.0
    %2067 = vmatprep.subr.mxu0 0.0
    %2068 = vmatpush1.msra.mxu0 0.0
    %2069 = vmatprep.subr.mxu0 0.0
    %2070 = vmatpush1.msra.mxu0 0.0
    %2071 = vmatprep.subr.mxu0 0.0
    %2072 = vmatpush1.msra.mxu0 0.0
    %2073 = vmatprep.subr.mxu0 0.0
    %2074 = vmatpush1.msra.mxu0 0.0
    %2075 = vmatprep.subr.mxu0 0.0
    %2076 = vmatpush1.msra.mxu0 0.0
    %2077 = vmatprep.subr.mxu0 0.0
    %2078 = vmatpush1.msra.mxu0 0.0
    %2079 = vmatprep.subr.mxu0 0.0
    %2080 = vmatpush1.msra.mxu0 0.0
    %2081 = vmatprep.subr.mxu0 0.0
    %2082 = vmatpush1.msra.mxu0 0.0
    %2083 = vmatprep.subr.mxu0 0.0
    %2084 = vmatpush1.msra.mxu0 0.0
    %2085 = vmatprep.subr.mxu0 0.0
    %2086 = vmatpush1.msra.mxu0 0.0
    %2087 = vmatprep.subr.mxu0 0.0
    %2088 = vmatpush1.msra.mxu0 0.0
    %2089 = vmatprep.subr.mxu0 0.0
    %2090 = vmatpush1.msra.mxu0 0.0
    %2091 = vmatprep.subr.mxu0 0.0
    %2092 = vmatpush1.msra.mxu0 0.0
    %2093 = vmatprep.mubr.f32.mxu0 0.0
    %2094 = vmatmul.mubr.f32.gmra.mrb[0].mxu0 %v2006
    %v2095 = vpop.f32.mrb[0].mxu0
    %v2096 = vadd.f32 0.0, %v2095
    %v2097 = vpop.f32.mrb[0].mxu0
    %2098 = vmatprep.mubr.f32.mxu0 0.0
    %2099 = vmatmul.mubr.f32.gmra.mrb[0].mxu0 %v2009
    %v2100 = vpop.f32.mrb[0].mxu0
    %v2101 = vadd.f32 0.0, %v2100
    %v2102 = vpop.f32.mrb[0].mxu0
    %2103 = vmatprep.mubr.f32.mxu0 0.0
    %2104 = vmatmul.mubr.f32.gmra.mrb[0].mxu0 %v2012
    %v2105 = vpop.f32.mrb[0].mxu0
    %v2106 = vadd.f32 0.0, %v2105
    %v2107 = vpop.f32.mrb[0].mxu0
    %2108 = vmatprep.mubr.f32.mxu0 0.0
    %2109 = vmatmul.mubr.f32.gmra.mrb[0].mxu0 %v2015
    %v2110 = vpop.f32.mrb[0].mxu0
    %v2111 = vadd.f32 0.0, %v2110
    %v2112 = vpop.f32.mrb[0].mxu0
    %2113 = vmatprep.mubr.f32.mxu0 0.0
    %2114 = vmatmul.mubr.f32.gmra.mrb[0].mxu0 %v2018
    %v2115 = vpop.f32.mrb[0].mxu0
    %v2116 = vadd.f32 0.0, %v2115
    %v2117 = vpop.f32.mrb[0].mxu0
    %2118 = vmatprep.mubr.f32.mxu0 0.0
    %2119 = vmatmul.mubr.f32.gmra.mrb[0].mxu0 %v2021
    %v2120 = vpop.f32.mrb[0].mxu0
    %v2121 = vadd.f32 0.0, %v2120
    %v2122 = vpop.f32.mrb[0].mxu0
    %2123 = vmatprep.mubr.f32.mxu0 0.0
    %2124 = vmatmul.mubr.f32.gmra.mrb[0].mxu0 %v2024
    %v2125 = vpop.f32.mrb[0].mxu0
    %v2126 = vadd.f32 0.0, %v2125
    %v2127 = vpop.f32.mrb[0].mxu0
    %2128 = vmatprep.mubr.f32.mxu0 0.0
    %2129 = vmatmul.mubr.f32.gmra.mrb[0].mxu0 %v2027
    %v2130 = vpop.f32.mrb[0].mxu0
    %v2131 = vadd.f32 0.0, %v2130
    %v2132 = vpop.f32.mrb[0].mxu0
    %2133 = vdwg.mxu0
    %v2135 = vsel %vm2004, %v1947, 0
    %v2138 = vsel %vm2004, %v1948, 0
    %v2141 = vsel %vm2004, %v1949, 0
    %v2144 = vsel %vm2004, %v1950, 0
    %v2147 = vsel %vm2004, %v1951, 0
    %v2150 = vsel %vm2004, %v1952, 0
    %v2153 = vsel %vm2004, %v1953, 0
    %v2156 = vsel %vm2004, %v1954, 0
    %2158 = vmatprep.subr.mxu0 0.0
    %2159 = vmatpush1.msra.mxu0 %v1955
    %2160 = vmatprep.subr.mxu0 0.0
    %2161 = vmatpush1.msra.mxu0 %v1956
    %2162 = vmatprep.subr.mxu0 0.0
    %2163 = vmatpush1.msra.mxu0 %v1957
    %2164 = vmatprep.subr.mxu0 0.0
    %2165 = vmatpush1.msra.mxu0 %v1958
    %2166 = vmatprep.subr.mxu0 0.0
    %2167 = vmatpush1.msra.mxu0 %v1959
    %2168 = vmatprep.subr.mxu0 0.0
    %2169 = vmatpush1.msra.mxu0 %v1960
    %2170 = vmatprep.subr.mxu0 0.0
    %2171 = vmatpush1.msra.mxu0 %v1961
    %2172 = vmatprep.subr.mxu0 0.0
    %2173 = vmatpush1.msra.mxu0 %v1962
    %2174 = vmatprep.subr.mxu0 0.0
    %2175 = vmatpush1.msra.mxu0 0.0
    %2176 = vmatprep.subr.mxu0 0.0
    %2177 = vmatpush1.msra.mxu0 0.0
    %2178 = vmatprep.subr.mxu0 0.0
    %2179 = vmatpush1.msra.mxu0 0.0
    %2180 = vmatprep.subr.mxu0 0.0
    %2181 = vmatpush1.msra.mxu0 0.0
    %2182 = vmatprep.subr.mxu0 0.0
    %2183 = vmatpush1.msra.mxu0 0.0
    %2184 = vmatprep.subr.mxu0 0.0
    %2185 = vmatpush1.msra.mxu0 0.0
    %2186 = vmatprep.subr.mxu0 0.0
    %2187 = vmatpush1.msra.mxu0 0.0
    %2188 = vmatprep.subr.mxu0 0.0
    %2189 = vmatpush1.msra.mxu0 0.0
    %2190 = vmatprep.subr.mxu0 0.0
    %2191 = vmatpush1.msra.mxu0 0.0
    %2192 = vmatprep.subr.mxu0 0.0
    %2193 = vmatpush1.msra.mxu0 0.0
    %2194 = vmatprep.subr.mxu0 0.0
    %2195 = vmatpush1.msra.mxu0 0.0
    %2196 = vmatprep.subr.mxu0 0.0
    %2197 = vmatpush1.msra.mxu0 0.0
    %2198 = vmatprep.subr.mxu0 0.0
    %2199 = vmatpush1.msra.mxu0 0.0
    %2200 = vmatprep.subr.mxu0 0.0
    %2201 = vmatpush1.msra.mxu0 0.0
    %2202 = vmatprep.subr.mxu0 0.0
    %2203 = vmatpush1.msra.mxu0 0.0
    %2204 = vmatprep.subr.mxu0 0.0
    %2205 = vmatpush1.msra.mxu0 0.0
    %2206 = vmatprep.subr.mxu0 0.0
    %2207 = vmatpush1.msra.mxu0 0.0
    %2208 = vmatprep.subr.mxu0 0.0
    %2209 = vmatpush1.msra.mxu0 0.0
    %2210 = vmatprep.subr.mxu0 0.0
    %2211 = vmatpush1.msra.mxu0 0.0
    %2212 = vmatprep.subr.mxu0 0.0
    %2213 = vmatpush1.msra.mxu0 0.0
    %2214 = vmatprep.subr.mxu0 0.0
    %2215 = vmatpush1.msra.mxu0 0.0
    %2216 = vmatprep.subr.mxu0 0.0
    %2217 = vmatpush1.msra.mxu0 0.0
    %2218 = vmatprep.subr.mxu0 0.0
    %2219 = vmatpush1.msra.mxu0 0.0
    %2220 = vmatprep.subr.mxu0 0.0
    %2221 = vmatpush1.msra.mxu0 0.0
    %2222 = vmatprep.mubr.f32.mxu0 0.0
    %2223 = vmatmul.mubr.f32.gmra.mrb[0].mxu0 %v2135
    %v2224 = vpop.f32.mrb[0].mxu0
    %v2225 = vadd.f32 %v2096, %v2224
    %v2226 = vpop.f32.mrb[0].mxu0
    %2227 = vmatprep.mubr.f32.mxu0 0.0
    %2228 = vmatmul.mubr.f32.gmra.mrb[0].mxu0 %v2138
    %v2229 = vpop.f32.mrb[0].mxu0
    %v2230 = vadd.f32 %v2101, %v2229
    %v2231 = vpop.f32.mrb[0].mxu0
    %2232 = vmatprep.mubr.f32.mxu0 0.0
    %2233 = vmatmul.mubr.f32.gmra.mrb[0].mxu0 %v2141
    %v2234 = vpop.f32.mrb[0].mxu0
    %v2235 = vadd.f32 %v2106, %v2234
    %v2236 = vpop.f32.mrb[0].mxu0
    %2237 = vmatprep.mubr.f32.mxu0 0.0
    %2238 = vmatmul.mubr.f32.gmra.mrb[0].mxu0 %v2144
    %v2239 = vpop.f32.mrb[0].mxu0
    %v2240 = vadd.f32 %v2111, %v2239
    %v2241 = vpop.f32.mrb[0].mxu0
    %2242 = vmatprep.mubr.f32.mxu0 0.0
    %2243 = vmatmul.mubr.f32.gmra.mrb[0].mxu0 %v2147
    %v2244 = vpop.f32.mrb[0].mxu0
    %v2245 = vadd.f32 %v2116, %v2244
    %v2246 = vpop.f32.mrb[0].mxu0
    %2247 = vmatprep.mubr.f32.mxu0 0.0
    %2248 = vmatmul.mubr.f32.gmra.mrb[0].mxu0 %v2150
    %v2249 = vpop.f32.mrb[0].mxu0
    %v2250 = vadd.f32 %v2121, %v2249
    %v2251 = vpop.f32.mrb[0].mxu0
    %2252 = vmatprep.mubr.f32.mxu0 0.0
    %2253 = vmatmul.mubr.f32.gmra.mrb[0].mxu0 %v2153
    %v2254 = vpop.f32.mrb[0].mxu0
    %v2255 = vadd.f32 %v2126, %v2254
    %v2256 = vpop.f32.mrb[0].mxu0
    %2257 = vmatprep.mubr.f32.mxu0 0.0
    %2258 = vmatmul.mubr.f32.gmra.mrb[0].mxu0 %v2156
    %v2259 = vpop.f32.mrb[0].mxu0
    %v2260 = vadd.f32 %v2131, %v2259
    %v2261 = vpop.f32.mrb[0].mxu0
    %2262 = vdwg.mxu0
    %s2263 = scalar_lea.vmem %s5, 128
    %v2264 = vld [vmem:[%s2263] sm:$0xff]
    %v2265 = vld [vmem:[%s2263 + $0x8] sm:$0xff]
    %v2266 = vld [vmem:[%s2263 + $0x10] sm:$0xff]
    %v2267 = vld [vmem:[%s2263 + $0x18] sm:$0xff]
    %v2268 = vld [vmem:[%s2263 + $0x20] sm:$0xff]
    %v2269 = vld [vmem:[%s2263 + $0x28] sm:$0xff]
    %v2270 = vld [vmem:[%s2263 + $0x30] sm:$0xff]
    %v2271 = vld [vmem:[%s2263 + $0x38] sm:$0xff]
    %2272 = vrot.lane.b32.xlu0 %v1955, 126
    %v2273 = vpop.permute.xlu0 %2272
    %2274 = vrot.lane.b32.xlu0 %v1956, 126
    %v2275 = vpop.permute.xlu0 %2274
    %2276 = vrot.lane.b32.xlu0 %v1957, 126
    %v2277 = vpop.permute.xlu0 %2276
    %2278 = vrot.lane.b32.xlu0 %v1958, 126
    %v2279 = vpop.permute.xlu0 %2278
    %2280 = vrot.lane.b32.xlu0 %v1959, 126
    %v2281 = vpop.permute.xlu0 %2280
    %2282 = vrot.lane.b32.xlu0 %v1960, 126
    %v2283 = vpop.permute.xlu0 %2282
    %2284 = vrot.lane.b32.xlu0 %v1961, 126
    %v2285 = vpop.permute.xlu0 %2284
    %2286 = vrot.lane.b32.xlu0 %v1962, 126
    %v2287 = vpop.permute.xlu0 %2286
    %v2297 = vsel %vm2004, %v2264, 0
    %v2300 = vsel %vm2004, %v2265, 0
    %v2303 = vsel %vm2004, %v2266, 0
    %v2306 = vsel %vm2004, %v2267, 0
    %v2309 = vsel %vm2004, %v2268, 0
    %v2312 = vsel %vm2004, %v2269, 0
    %v2315 = vsel %vm2004, %v2270, 0
    %v2318 = vsel %vm2004, %v2271, 0
    %2320 = vmatprep.subr.mxu0 0.0
    %2321 = vmatpush1.msra.mxu0 %v2273
    %2322 = vmatprep.subr.mxu0 0.0
    %2323 = vmatpush1.msra.mxu0 %v2275
    %2324 = vmatprep.subr.mxu0 0.0
    %2325 = vmatpush1.msra.mxu0 %v2277
    %2326 = vmatprep.subr.mxu0 0.0
    %2327 = vmatpush1.msra.mxu0 %v2279
    %2328 = vmatprep.subr.mxu0 0.0
    %2329 = vmatpush1.msra.mxu0 %v2281
    %2330 = vmatprep.subr.mxu0 0.0
    %2331 = vmatpush1.msra.mxu0 %v2283
    %2332 = vmatprep.subr.mxu0 0.0
    %2333 = vmatpush1.msra.mxu0 %v2285
    %2334 = vmatprep.subr.mxu0 0.0
    %2335 = vmatpush1.msra.mxu0 %v2287
    %2336 = vmatprep.subr.mxu0 0.0
    %2337 = vmatpush1.msra.mxu0 0.0
    %2338 = vmatprep.subr.mxu0 0.0
    %2339 = vmatpush1.msra.mxu0 0.0
    %2340 = vmatprep.subr.mxu0 0.0
    %2341 = vmatpush1.msra.mxu0 0.0
    %2342 = vmatprep.subr.mxu0 0.0
    %2343 = vmatpush1.msra.mxu0 0.0
    %2344 = vmatprep.subr.mxu0 0.0
    %2345 = vmatpush1.msra.mxu0 0.0
    %2346 = vmatprep.subr.mxu0 0.0
    %2347 = vmatpush1.msra.mxu0 0.0
    %2348 = vmatprep.subr.mxu0 0.0
    %2349 = vmatpush1.msra.mxu0 0.0
    %2350 = vmatprep.subr.mxu0 0.0
    %2351 = vmatpush1.msra.mxu0 0.0
    %2352 = vmatprep.subr.mxu0 0.0
    %2353 = vmatpush1.msra.mxu0 0.0
    %2354 = vmatprep.subr.mxu0 0.0
    %2355 = vmatpush1.msra.mxu0 0.0
    %2356 = vmatprep.subr.mxu0 0.0
    %2357 = vmatpush1.msra.mxu0 0.0
    %2358 = vmatprep.subr.mxu0 0.0
    %2359 = vmatpush1.msra.mxu0 0.0
    %2360 = vmatprep.subr.mxu0 0.0
    %2361 = vmatpush1.msra.mxu0 0.0
    %2362 = vmatprep.subr.mxu0 0.0
    %2363 = vmatpush1.msra.mxu0 0.0
    %2364 = vmatprep.subr.mxu0 0.0
    %2365 = vmatpush1.msra.mxu0 0.0
    %2366 = vmatprep.subr.mxu0 0.0
    %2367 = vmatpush1.msra.mxu0 0.0
    %2368 = vmatprep.subr.mxu0 0.0
    %2369 = vmatpush1.msra.mxu0 0.0
    %2370 = vmatprep.subr.mxu0 0.0
    %2371 = vmatpush1.msra.mxu0 0.0
    %2372 = vmatprep.subr.mxu0 0.0
    %2373 = vmatpush1.msra.mxu0 0.0
    %2374 = vmatprep.subr.mxu0 0.0
    %2375 = vmatpush1.msra.mxu0 0.0
    %2376 = vmatprep.subr.mxu0 0.0
    %2377 = vmatpush1.msra.mxu0 0.0
    %2378 = vmatprep.subr.mxu0 0.0
    %2379 = vmatpush1.msra.mxu0 0.0
    %2380 = vmatprep.subr.mxu0 0.0
    %2381 = vmatpush1.msra.mxu0 0.0
    %2382 = vmatprep.subr.mxu0 0.0
    %2383 = vmatpush1.msra.mxu0 0.0
    %2384 = vmatprep.mubr.f32.mxu0 0.0
    %2385 = vmatmul.mubr.f32.gmra.mrb[0].mxu0 %v2297
    %v2386 = vpop.f32.mrb[0].mxu0
    %v2387 = vadd.f32 0.0, %v2386
    %v2388 = vpop.f32.mrb[0].mxu0
    %2389 = vmatprep.mubr.f32.mxu0 0.0
    %2390 = vmatmul.mubr.f32.gmra.mrb[0].mxu0 %v2300
    %v2391 = vpop.f32.mrb[0].mxu0
    %v2392 = vadd.f32 0.0, %v2391
    %v2393 = vpop.f32.mrb[0].mxu0
    %2394 = vmatprep.mubr.f32.mxu0 0.0
    %2395 = vmatmul.mubr.f32.gmra.mrb[0].mxu0 %v2303
    %v2396 = vpop.f32.mrb[0].mxu0
    %v2397 = vadd.f32 0.0, %v2396
    %v2398 = vpop.f32.mrb[0].mxu0
    %2399 = vmatprep.mubr.f32.mxu0 0.0
    %2400 = vmatmul.mubr.f32.gmra.mrb[0].mxu0 %v2306
    %v2401 = vpop.f32.mrb[0].mxu0
    %v2402 = vadd.f32 0.0, %v2401
    %v2403 = vpop.f32.mrb[0].mxu0
    %2404 = vmatprep.mubr.f32.mxu0 0.0
    %2405 = vmatmul.mubr.f32.gmra.mrb[0].mxu0 %v2309
    %v2406 = vpop.f32.mrb[0].mxu0
    %v2407 = vadd.f32 0.0, %v2406
    %v2408 = vpop.f32.mrb[0].mxu0
    %2409 = vmatprep.mubr.f32.mxu0 0.0
    %2410 = vmatmul.mubr.f32.gmra.mrb[0].mxu0 %v2312
    %v2411 = vpop.f32.mrb[0].mxu0
    %v2412 = vadd.f32 0.0, %v2411
    %v2413 = vpop.f32.mrb[0].mxu0
    %2414 = vmatprep.mubr.f32.mxu0 0.0
    %2415 = vmatmul.mubr.f32.gmra.mrb[0].mxu0 %v2315
    %v2416 = vpop.f32.mrb[0].mxu0
    %v2417 = vadd.f32 0.0, %v2416
    %v2418 = vpop.f32.mrb[0].mxu0
    %2419 = vmatprep.mubr.f32.mxu0 0.0
    %2420 = vmatmul.mubr.f32.gmra.mrb[0].mxu0 %v2318
    %v2421 = vpop.f32.mrb[0].mxu0
    %v2422 = vadd.f32 0.0, %v2421
    %v2423 = vpop.f32.mrb[0].mxu0
    %2424 = vdwg.mxu0
    %v2425 = vadd.f32 %v2225, %v2387
    %v2426 = vadd.f32 %v2230, %v2392
    %v2427 = vadd.f32 %v2235, %v2397
    %v2428 = vadd.f32 %v2240, %v2402
    %v2429 = vadd.f32 %v2245, %v2407
    %v2430 = vadd.f32 %v2250, %v2412
    %v2431 = vadd.f32 %v2255, %v2417
    %v2432 = vadd.f32 %v2260, %v2422
    %s2433 = scalar_lea.vmem %s5, 192
    %v2434 = vld [vmem:[%s2433] sm:$0xff]
    %v2435 = vld [vmem:[%s2433 + $0x8] sm:$0xff]
    %v2436 = vld [vmem:[%s2433 + $0x10] sm:$0xff]
    %v2437 = vld [vmem:[%s2433 + $0x18] sm:$0xff]
    %v2438 = vld [vmem:[%s2433 + $0x20] sm:$0xff]
    %v2439 = vld [vmem:[%s2433 + $0x28] sm:$0xff]
    %v2440 = vld [vmem:[%s2433 + $0x30] sm:$0xff]
    %v2441 = vld [vmem:[%s2433 + $0x38] sm:$0xff]
    %2442 = vrot.lane.b32.xlu0 %v1955, 125
    %v2443 = vpop.permute.xlu0 %2442
    %2444 = vrot.lane.b32.xlu0 %v1956, 125
    %v2445 = vpop.permute.xlu0 %2444
    %2446 = vrot.lane.b32.xlu0 %v1957, 125
    %v2447 = vpop.permute.xlu0 %2446
    %2448 = vrot.lane.b32.xlu0 %v1958, 125
    %v2449 = vpop.permute.xlu0 %2448
    %2450 = vrot.lane.b32.xlu0 %v1959, 125
    %v2451 = vpop.permute.xlu0 %2450
    %2452 = vrot.lane.b32.xlu0 %v1960, 125
    %v2453 = vpop.permute.xlu0 %2452
    %2454 = vrot.lane.b32.xlu0 %v1961, 125
    %v2455 = vpop.permute.xlu0 %2454
    %2456 = vrot.lane.b32.xlu0 %v1962, 125
    %v2457 = vpop.permute.xlu0 %2456
    %v2467 = vsel %vm2004, %v2434, 0
    %v2470 = vsel %vm2004, %v2435, 0
    %v2473 = vsel %vm2004, %v2436, 0
    %v2476 = vsel %vm2004, %v2437, 0
    %v2479 = vsel %vm2004, %v2438, 0
    %v2482 = vsel %vm2004, %v2439, 0
    %v2485 = vsel %vm2004, %v2440, 0
    %v2488 = vsel %vm2004, %v2441, 0
    %2490 = vmatprep.subr.mxu0 0.0
    %2491 = vmatpush1.msra.mxu0 %v2443
    %2492 = vmatprep.subr.mxu0 0.0
    %2493 = vmatpush1.msra.mxu0 %v2445
    %2494 = vmatprep.subr.mxu0 0.0
    %2495 = vmatpush1.msra.mxu0 %v2447
    %2496 = vmatprep.subr.mxu0 0.0
    %2497 = vmatpush1.msra.mxu0 %v2449
    %2498 = vmatprep.subr.mxu0 0.0
    %2499 = vmatpush1.msra.mxu0 %v2451
    %2500 = vmatprep.subr.mxu0 0.0
    %2501 = vmatpush1.msra.mxu0 %v2453
    %2502 = vmatprep.subr.mxu0 0.0
    %2503 = vmatpush1.msra.mxu0 %v2455
    %2504 = vmatprep.subr.mxu0 0.0
    %2505 = vmatpush1.msra.mxu0 %v2457
    %2506 = vmatprep.subr.mxu0 0.0
    %2507 = vmatpush1.msra.mxu0 0.0
    %2508 = vmatprep.subr.mxu0 0.0
    %2509 = vmatpush1.msra.mxu0 0.0
    %2510 = vmatprep.subr.mxu0 0.0
    %2511 = vmatpush1.msra.mxu0 0.0
    %2512 = vmatprep.subr.mxu0 0.0
    %2513 = vmatpush1.msra.mxu0 0.0
    %2514 = vmatprep.subr.mxu0 0.0
    %2515 = vmatpush1.msra.mxu0 0.0
    %2516 = vmatprep.subr.mxu0 0.0
    %2517 = vmatpush1.msra.mxu0 0.0
    %2518 = vmatprep.subr.mxu0 0.0
    %2519 = vmatpush1.msra.mxu0 0.0
    %2520 = vmatprep.subr.mxu0 0.0
    %2521 = vmatpush1.msra.mxu0 0.0
    %2522 = vmatprep.subr.mxu0 0.0
    %2523 = vmatpush1.msra.mxu0 0.0
    %2524 = vmatprep.subr.mxu0 0.0
    %2525 = vmatpush1.msra.mxu0 0.0
    %2526 = vmatprep.subr.mxu0 0.0
    %2527 = vmatpush1.msra.mxu0 0.0
    %2528 = vmatprep.subr.mxu0 0.0
    %2529 = vmatpush1.msra.mxu0 0.0
    %2530 = vmatprep.subr.mxu0 0.0
    %2531 = vmatpush1.msra.mxu0 0.0
    %2532 = vmatprep.subr.mxu0 0.0
    %2533 = vmatpush1.msra.mxu0 0.0
    %2534 = vmatprep.subr.mxu0 0.0
    %2535 = vmatpush1.msra.mxu0 0.0
    %2536 = vmatprep.subr.mxu0 0.0
    %2537 = vmatpush1.msra.mxu0 0.0
    %2538 = vmatprep.subr.mxu0 0.0
    %2539 = vmatpush1.msra.mxu0 0.0
    %2540 = vmatprep.subr.mxu0 0.0
    %2541 = vmatpush1.msra.mxu0 0.0
    %2542 = vmatprep.subr.mxu0 0.0
    %2543 = vmatpush1.msra.mxu0 0.0
    %2544 = vmatprep.subr.mxu0 0.0
    %2545 = vmatpush1.msra.mxu0 0.0
    %2546 = vmatprep.subr.mxu0 0.0
    %2547 = vmatpush1.msra.mxu0 0.0
    %2548 = vmatprep.subr.mxu0 0.0
    %2549 = vmatpush1.msra.mxu0 0.0
    %2550 = vmatprep.subr.mxu0 0.0
    %2551 = vmatpush1.msra.mxu0 0.0
    %2552 = vmatprep.subr.mxu0 0.0
    %2553 = vmatpush1.msra.mxu0 0.0
    %2554 = vmatprep.mubr.f32.mxu0 0.0
    %2555 = vmatmul.mubr.f32.gmra.mrb[0].mxu0 %v2467
    %v2556 = vpop.f32.mrb[0].mxu0
    %v2557 = vadd.f32 0.0, %v2556
    %v2558 = vpop.f32.mrb[0].mxu0
    %2559 = vmatprep.mubr.f32.mxu0 0.0
    %2560 = vmatmul.mubr.f32.gmra.mrb[0].mxu0 %v2470
    %v2561 = vpop.f32.mrb[0].mxu0
    %v2562 = vadd.f32 0.0, %v2561
    %v2563 = vpop.f32.mrb[0].mxu0
    %2564 = vmatprep.mubr.f32.mxu0 0.0
    %2565 = vmatmul.mubr.f32.gmra.mrb[0].mxu0 %v2473
    %v2566 = vpop.f32.mrb[0].mxu0
    %v2567 = vadd.f32 0.0, %v2566
    %v2568 = vpop.f32.mrb[0].mxu0
    %2569 = vmatprep.mubr.f32.mxu0 0.0
    %2570 = vmatmul.mubr.f32.gmra.mrb[0].mxu0 %v2476
    %v2571 = vpop.f32.mrb[0].mxu0
    %v2572 = vadd.f32 0.0, %v2571
    %v2573 = vpop.f32.mrb[0].mxu0
    %2574 = vmatprep.mubr.f32.mxu0 0.0
    %2575 = vmatmul.mubr.f32.gmra.mrb[0].mxu0 %v2479
    %v2576 = vpop.f32.mrb[0].mxu0
    %v2577 = vadd.f32 0.0, %v2576
    %v2578 = vpop.f32.mrb[0].mxu0
    %2579 = vmatprep.mubr.f32.mxu0 0.0
    %2580 = vmatmul.mubr.f32.gmra.mrb[0].mxu0 %v2482
    %v2581 = vpop.f32.mrb[0].mxu0
    %v2582 = vadd.f32 0.0, %v2581
    %v2583 = vpop.f32.mrb[0].mxu0
    %2584 = vmatprep.mubr.f32.mxu0 0.0
    %2585 = vmatmul.mubr.f32.gmra.mrb[0].mxu0 %v2485
    %v2586 = vpop.f32.mrb[0].mxu0
    %v2587 = vadd.f32 0.0, %v2586
    %v2588 = vpop.f32.mrb[0].mxu0
    %2589 = vmatprep.mubr.f32.mxu0 0.0
    %2590 = vmatmul.mubr.f32.gmra.mrb[0].mxu0 %v2488
    %v2591 = vpop.f32.mrb[0].mxu0
    %v2592 = vadd.f32 0.0, %v2591
    %v2593 = vpop.f32.mrb[0].mxu0
    %2594 = vdwg.mxu0
    %v2595 = vadd.f32 %v2425, %v2557
    %v2596 = vadd.f32 %v2426, %v2562
    %v2597 = vadd.f32 %v2427, %v2567
    %v2598 = vadd.f32 %v2428, %v2572
    %v2599 = vadd.f32 %v2429, %v2577
    %v2600 = vadd.f32 %v2430, %v2582
    %v2601 = vadd.f32 %v2431, %v2587
    %v2602 = vadd.f32 %v2432, %v2592
    %s2603 = scalar_lea.vmem %s5, 256
    %v2604 = vld [vmem:[%s2603] sm:$0xff]
    %v2605 = vld [vmem:[%s2603 + $0x8] sm:$0xff]
    %v2606 = vld [vmem:[%s2603 + $0x10] sm:$0xff]
    %v2607 = vld [vmem:[%s2603 + $0x18] sm:$0xff]
    %v2608 = vld [vmem:[%s2603 + $0x20] sm:$0xff]
    %v2609 = vld [vmem:[%s2603 + $0x28] sm:$0xff]
    %v2610 = vld [vmem:[%s2603 + $0x30] sm:$0xff]
    %v2611 = vld [vmem:[%s2603 + $0x38] sm:$0xff]
    %2612 = vrot.lane.b32.xlu0 %v1955, 124
    %v2613 = vpop.permute.xlu0 %2612
    %2614 = vrot.lane.b32.xlu0 %v1956, 124
    %v2615 = vpop.permute.xlu0 %2614
    %2616 = vrot.lane.b32.xlu0 %v1957, 124
    %v2617 = vpop.permute.xlu0 %2616
    %2618 = vrot.lane.b32.xlu0 %v1958, 124
    %v2619 = vpop.permute.xlu0 %2618
    %2620 = vrot.lane.b32.xlu0 %v1959, 124
    %v2621 = vpop.permute.xlu0 %2620
    %2622 = vrot.lane.b32.xlu0 %v1960, 124
    %v2623 = vpop.permute.xlu0 %2622
    %2624 = vrot.lane.b32.xlu0 %v1961, 124
    %v2625 = vpop.permute.xlu0 %2624
    %2626 = vrot.lane.b32.xlu0 %v1962, 124
    %v2627 = vpop.permute.xlu0 %2626
    %v2637 = vsel %vm2004, %v2604, 0
    %v2640 = vsel %vm2004, %v2605, 0
    %v2643 = vsel %vm2004, %v2606, 0
    %v2646 = vsel %vm2004, %v2607, 0
    %v2649 = vsel %vm2004, %v2608, 0
    %v2652 = vsel %vm2004, %v2609, 0
    %v2655 = vsel %vm2004, %v2610, 0
    %v2658 = vsel %vm2004, %v2611, 0
    %2660 = vmatprep.subr.mxu0 0.0
    %2661 = vmatpush1.msra.mxu0 %v2613
    %2662 = vmatprep.subr.mxu0 0.0
    %2663 = vmatpush1.msra.mxu0 %v2615
    %2664 = vmatprep.subr.mxu0 0.0
    %2665 = vmatpush1.msra.mxu0 %v2617
    %2666 = vmatprep.subr.mxu0 0.0
    %2667 = vmatpush1.msra.mxu0 %v2619
    %2668 = vmatprep.subr.mxu0 0.0
    %2669 = vmatpush1.msra.mxu0 %v2621
    %2670 = vmatprep.subr.mxu0 0.0
    %2671 = vmatpush1.msra.mxu0 %v2623
    %2672 = vmatprep.subr.mxu0 0.0
    %2673 = vmatpush1.msra.mxu0 %v2625
    %2674 = vmatprep.subr.mxu0 0.0
    %2675 = vmatpush1.msra.mxu0 %v2627
    %2676 = vmatprep.subr.mxu0 0.0
    %2677 = vmatpush1.msra.mxu0 0.0
    %2678 = vmatprep.subr.mxu0 0.0
    %2679 = vmatpush1.msra.mxu0 0.0
    %2680 = vmatprep.subr.mxu0 0.0
    %2681 = vmatpush1.msra.mxu0 0.0
    %2682 = vmatprep.subr.mxu0 0.0
    %2683 = vmatpush1.msra.mxu0 0.0
    %2684 = vmatprep.subr.mxu0 0.0
    %2685 = vmatpush1.msra.mxu0 0.0
    %2686 = vmatprep.subr.mxu0 0.0
    %2687 = vmatpush1.msra.mxu0 0.0
    %2688 = vmatprep.subr.mxu0 0.0
    %2689 = vmatpush1.msra.mxu0 0.0
    %2690 = vmatprep.subr.mxu0 0.0
    %2691 = vmatpush1.msra.mxu0 0.0
    %2692 = vmatprep.subr.mxu0 0.0
    %2693 = vmatpush1.msra.mxu0 0.0
    %2694 = vmatprep.subr.mxu0 0.0
    %2695 = vmatpush1.msra.mxu0 0.0
    %2696 = vmatprep.subr.mxu0 0.0
    %2697 = vmatpush1.msra.mxu0 0.0
    %2698 = vmatprep.subr.mxu0 0.0
    %2699 = vmatpush1.msra.mxu0 0.0
    %2700 = vmatprep.subr.mxu0 0.0
    %2701 = vmatpush1.msra.mxu0 0.0
    %2702 = vmatprep.subr.mxu0 0.0
    %2703 = vmatpush1.msra.mxu0 0.0
    %2704 = vmatprep.subr.mxu0 0.0
    %2705 = vmatpush1.msra.mxu0 0.0
    %2706 = vmatprep.subr.mxu0 0.0
    %2707 = vmatpush1.msra.mxu0 0.0
    %2708 = vmatprep.subr.mxu0 0.0
    %2709 = vmatpush1.msra.mxu0 0.0
    %2710 = vmatprep.subr.mxu0 0.0
    %2711 = vmatpush1.msra.mxu0 0.0
    %2712 = vmatprep.subr.mxu0 0.0
    %2713 = vmatpush1.msra.mxu0 0.0
    %2714 = vmatprep.subr.mxu0 0.0
    %2715 = vmatpush1.msra.mxu0 0.0
    %2716 = vmatprep.subr.mxu0 0.0
    %2717 = vmatpush1.msra.mxu0 0.0
    %2718 = vmatprep.subr.mxu0 0.0
    %2719 = vmatpush1.msra.mxu0 0.0
    %2720 = vmatprep.subr.mxu0 0.0
    %2721 = vmatpush1.msra.mxu0 0.0
    %2722 = vmatprep.subr.mxu0 0.0
    %2723 = vmatpush1.msra.mxu0 0.0
    %2724 = vmatprep.mubr.f32.mxu0 0.0
    %2725 = vmatmul.mubr.f32.gmra.mrb[0].mxu0 %v2637
    %v2726 = vpop.f32.mrb[0].mxu0
    %v2727 = vadd.f32 0.0, %v2726
    %v2728 = vpop.f32.mrb[0].mxu0
    %2729 = vmatprep.mubr.f32.mxu0 0.0
    %2730 = vmatmul.mubr.f32.gmra.mrb[0].mxu0 %v2640
    %v2731 = vpop.f32.mrb[0].mxu0
    %v2732 = vadd.f32 0.0, %v2731
    %v2733 = vpop.f32.mrb[0].mxu0
    %2734 = vmatprep.mubr.f32.mxu0 0.0
    %2735 = vmatmul.mubr.f32.gmra.mrb[0].mxu0 %v2643
    %v2736 = vpop.f32.mrb[0].mxu0
    %v2737 = vadd.f32 0.0, %v2736
    %v2738 = vpop.f32.mrb[0].mxu0
    %2739 = vmatprep.mubr.f32.mxu0 0.0
    %2740 = vmatmul.mubr.f32.gmra.mrb[0].mxu0 %v2646
    %v2741 = vpop.f32.mrb[0].mxu0
    %v2742 = vadd.f32 0.0, %v2741
    %v2743 = vpop.f32.mrb[0].mxu0
    %2744 = vmatprep.mubr.f32.mxu0 0.0
    %2745 = vmatmul.mubr.f32.gmra.mrb[0].mxu0 %v2649
    %v2746 = vpop.f32.mrb[0].mxu0
    %v2747 = vadd.f32 0.0, %v2746
    %v2748 = vpop.f32.mrb[0].mxu0
    %2749 = vmatprep.mubr.f32.mxu0 0.0
    %2750 = vmatmul.mubr.f32.gmra.mrb[0].mxu0 %v2652
    %v2751 = vpop.f32.mrb[0].mxu0
    %v2752 = vadd.f32 0.0, %v2751
    %v2753 = vpop.f32.mrb[0].mxu0
    %2754 = vmatprep.mubr.f32.mxu0 0.0
    %2755 = vmatmul.mubr.f32.gmra.mrb[0].mxu0 %v2655
    %v2756 = vpop.f32.mrb[0].mxu0
    %v2757 = vadd.f32 0.0, %v2756
    %v2758 = vpop.f32.mrb[0].mxu0
    %2759 = vmatprep.mubr.f32.mxu0 0.0
    %2760 = vmatmul.mubr.f32.gmra.mrb[0].mxu0 %v2658
    %v2761 = vpop.f32.mrb[0].mxu0
    %v2762 = vadd.f32 0.0, %v2761
    %v2763 = vpop.f32.mrb[0].mxu0
    %2764 = vdwg.mxu0
    %v2765 = vadd.f32 %v2595, %v2727
    %v2766 = vadd.f32 %v2596, %v2732
    %v2767 = vadd.f32 %v2597, %v2737
    %v2768 = vadd.f32 %v2598, %v2742
    %v2769 = vadd.f32 %v2599, %v2747
    %v2770 = vadd.f32 %v2600, %v2752
    %v2771 = vadd.f32 %v2601, %v2757
    %v2772 = vadd.f32 %v2602, %v2762
    %s2773 = scalar_lea.vmem %s5, 320
    %v2774 = vld [vmem:[%s2773] sm:$0xff]
    %v2775 = vld [vmem:[%s2773 + $0x8] sm:$0xff]
    %v2776 = vld [vmem:[%s2773 + $0x10] sm:$0xff]
    %v2777 = vld [vmem:[%s2773 + $0x18] sm:$0xff]
    %v2778 = vld [vmem:[%s2773 + $0x20] sm:$0xff]
    %v2779 = vld [vmem:[%s2773 + $0x28] sm:$0xff]
    %v2780 = vld [vmem:[%s2773 + $0x30] sm:$0xff]
    %v2781 = vld [vmem:[%s2773 + $0x38] sm:$0xff]
    %2782 = vrot.lane.b32.xlu0 %v1955, 123
    %v2783 = vpop.permute.xlu0 %2782
    %2784 = vrot.lane.b32.xlu0 %v1956, 123
    %v2785 = vpop.permute.xlu0 %2784
    %2786 = vrot.lane.b32.xlu0 %v1957, 123
    %v2787 = vpop.permute.xlu0 %2786
    %2788 = vrot.lane.b32.xlu0 %v1958, 123
    %v2789 = vpop.permute.xlu0 %2788
    %2790 = vrot.lane.b32.xlu0 %v1959, 123
    %v2791 = vpop.permute.xlu0 %2790
    %2792 = vrot.lane.b32.xlu0 %v1960, 123
    %v2793 = vpop.permute.xlu0 %2792
    %2794 = vrot.lane.b32.xlu0 %v1961, 123
    %v2795 = vpop.permute.xlu0 %2794
    %2796 = vrot.lane.b32.xlu0 %v1962, 123
    %v2797 = vpop.permute.xlu0 %2796
    %v2807 = vsel %vm2004, %v2774, 0
    %v2810 = vsel %vm2004, %v2775, 0
    %v2813 = vsel %vm2004, %v2776, 0
    %v2816 = vsel %vm2004, %v2777, 0
    %v2819 = vsel %vm2004, %v2778, 0
    %v2822 = vsel %vm2004, %v2779, 0
    %v2825 = vsel %vm2004, %v2780, 0
    %v2828 = vsel %vm2004, %v2781, 0
    %2830 = vmatprep.subr.mxu0 0.0
    %2831 = vmatpush1.msra.mxu0 %v2783
    %2832 = vmatprep.subr.mxu0 0.0
    %2833 = vmatpush1.msra.mxu0 %v2785
    %2834 = vmatprep.subr.mxu0 0.0
    %2835 = vmatpush1.msra.mxu0 %v2787
    %2836 = vmatprep.subr.mxu0 0.0
    %2837 = vmatpush1.msra.mxu0 %v2789
    %2838 = vmatprep.subr.mxu0 0.0
    %2839 = vmatpush1.msra.mxu0 %v2791
    %2840 = vmatprep.subr.mxu0 0.0
    %2841 = vmatpush1.msra.mxu0 %v2793
    %2842 = vmatprep.subr.mxu0 0.0
    %2843 = vmatpush1.msra.mxu0 %v2795
    %2844 = vmatprep.subr.mxu0 0.0
    %2845 = vmatpush1.msra.mxu0 %v2797
    %2846 = vmatprep.subr.mxu0 0.0
    %2847 = vmatpush1.msra.mxu0 0.0
    %2848 = vmatprep.subr.mxu0 0.0
    %2849 = vmatpush1.msra.mxu0 0.0
    %2850 = vmatprep.subr.mxu0 0.0
    %2851 = vmatpush1.msra.mxu0 0.0
    %2852 = vmatprep.subr.mxu0 0.0
    %2853 = vmatpush1.msra.mxu0 0.0
    %2854 = vmatprep.subr.mxu0 0.0
    %2855 = vmatpush1.msra.mxu0 0.0
    %2856 = vmatprep.subr.mxu0 0.0
    %2857 = vmatpush1.msra.mxu0 0.0
    %2858 = vmatprep.subr.mxu0 0.0
    %2859 = vmatpush1.msra.mxu0 0.0
    %2860 = vmatprep.subr.mxu0 0.0
    %2861 = vmatpush1.msra.mxu0 0.0
    %2862 = vmatprep.subr.mxu0 0.0
    %2863 = vmatpush1.msra.mxu0 0.0
    %2864 = vmatprep.subr.mxu0 0.0
    %2865 = vmatpush1.msra.mxu0 0.0
    %2866 = vmatprep.subr.mxu0 0.0
    %2867 = vmatpush1.msra.mxu0 0.0
    %2868 = vmatprep.subr.mxu0 0.0
    %2869 = vmatpush1.msra.mxu0 0.0
    %2870 = vmatprep.subr.mxu0 0.0
    %2871 = vmatpush1.msra.mxu0 0.0
    %2872 = vmatprep.subr.mxu0 0.0
    %2873 = vmatpush1.msra.mxu0 0.0
    %2874 = vmatprep.subr.mxu0 0.0
    %2875 = vmatpush1.msra.mxu0 0.0
    %2876 = vmatprep.subr.mxu0 0.0
    %2877 = vmatpush1.msra.mxu0 0.0
    %2878 = vmatprep.subr.mxu0 0.0
    %2879 = vmatpush1.msra.mxu0 0.0
    %2880 = vmatprep.subr.mxu0 0.0
    %2881 = vmatpush1.msra.mxu0 0.0
    %2882 = vmatprep.subr.mxu0 0.0
    %2883 = vmatpush1.msra.mxu0 0.0
    %2884 = vmatprep.subr.mxu0 0.0
    %2885 = vmatpush1.msra.mxu0 0.0
    %2886 = vmatprep.subr.mxu0 0.0
    %2887 = vmatpush1.msra.mxu0 0.0
    %2888 = vmatprep.subr.mxu0 0.0
    %2889 = vmatpush1.msra.mxu0 0.0
    %2890 = vmatprep.subr.mxu0 0.0
    %2891 = vmatpush1.msra.mxu0 0.0
    %2892 = vmatprep.subr.mxu0 0.0
    %2893 = vmatpush1.msra.mxu0 0.0
    %2894 = vmatprep.mubr.f32.mxu0 0.0
    %2895 = vmatmul.mubr.f32.gmra.mrb[0].mxu0 %v2807
    %v2896 = vpop.f32.mrb[0].mxu0
    %v2897 = vadd.f32 0.0, %v2896
    %v2898 = vpop.f32.mrb[0].mxu0
    %2899 = vmatprep.mubr.f32.mxu0 0.0
    %2900 = vmatmul.mubr.f32.gmra.mrb[0].mxu0 %v2810
    %v2901 = vpop.f32.mrb[0].mxu0
    %v2902 = vadd.f32 0.0, %v2901
    %v2903 = vpop.f32.mrb[0].mxu0
    %2904 = vmatprep.mubr.f32.mxu0 0.0
    %2905 = vmatmul.mubr.f32.gmra.mrb[0].mxu0 %v2813
    %v2906 = vpop.f32.mrb[0].mxu0
    %v2907 = vadd.f32 0.0, %v2906
    %v2908 = vpop.f32.mrb[0].mxu0
    %2909 = vmatprep.mubr.f32.mxu0 0.0
    %2910 = vmatmul.mubr.f32.gmra.mrb[0].mxu0 %v2816
    %v2911 = vpop.f32.mrb[0].mxu0
    %v2912 = vadd.f32 0.0, %v2911
    %v2913 = vpop.f32.mrb[0].mxu0
    %2914 = vmatprep.mubr.f32.mxu0 0.0
    %2915 = vmatmul.mubr.f32.gmra.mrb[0].mxu0 %v2819
    %v2916 = vpop.f32.mrb[0].mxu0
    %v2917 = vadd.f32 0.0, %v2916
    %v2918 = vpop.f32.mrb[0].mxu0
    %2919 = vmatprep.mubr.f32.mxu0 0.0
    %2920 = vmatmul.mubr.f32.gmra.mrb[0].mxu0 %v2822
    %v2921 = vpop.f32.mrb[0].mxu0
    %v2922 = vadd.f32 0.0, %v2921
    %v2923 = vpop.f32.mrb[0].mxu0
    %2924 = vmatprep.mubr.f32.mxu0 0.0
    %2925 = vmatmul.mubr.f32.gmra.mrb[0].mxu0 %v2825
    %v2926 = vpop.f32.mrb[0].mxu0
    %v2927 = vadd.f32 0.0, %v2926
    %v2928 = vpop.f32.mrb[0].mxu0
    %2929 = vmatprep.mubr.f32.mxu0 0.0
    %2930 = vmatmul.mubr.f32.gmra.mrb[0].mxu0 %v2828
    %v2931 = vpop.f32.mrb[0].mxu0
    %v2932 = vadd.f32 0.0, %v2931
    %v2933 = vpop.f32.mrb[0].mxu0
    %2934 = vdwg.mxu0
    %v2935 = vadd.f32 %v2765, %v2897
    %v2936 = vadd.f32 %v2766, %v2902
    %v2937 = vadd.f32 %v2767, %v2907
    %v2938 = vadd.f32 %v2768, %v2912
    %v2939 = vadd.f32 %v2769, %v2917
    %v2940 = vadd.f32 %v2770, %v2922
    %v2941 = vadd.f32 %v2771, %v2927
    %v2942 = vadd.f32 %v2772, %v2932
    %s2943 = scalar_lea.vmem %s5, 384
    %v2944 = vld [vmem:[%s2943] sm:$0xff]
    %v2945 = vld [vmem:[%s2943 + $0x8] sm:$0xff]
    %v2946 = vld [vmem:[%s2943 + $0x10] sm:$0xff]
    %v2947 = vld [vmem:[%s2943 + $0x18] sm:$0xff]
    %v2948 = vld [vmem:[%s2943 + $0x20] sm:$0xff]
    %v2949 = vld [vmem:[%s2943 + $0x28] sm:$0xff]
    %v2950 = vld [vmem:[%s2943 + $0x30] sm:$0xff]
    %v2951 = vld [vmem:[%s2943 + $0x38] sm:$0xff]
    %2952 = vrot.lane.b32.xlu0 %v1955, 122
    %v2953 = vpop.permute.xlu0 %2952
    %2954 = vrot.lane.b32.xlu0 %v1956, 122
    %v2955 = vpop.permute.xlu0 %2954
    %2956 = vrot.lane.b32.xlu0 %v1957, 122
    %v2957 = vpop.permute.xlu0 %2956
    %2958 = vrot.lane.b32.xlu0 %v1958, 122
    %v2959 = vpop.permute.xlu0 %2958
    %2960 = vrot.lane.b32.xlu0 %v1959, 122
    %v2961 = vpop.permute.xlu0 %2960
    %2962 = vrot.lane.b32.xlu0 %v1960, 122
    %v2963 = vpop.permute.xlu0 %2962
    %2964 = vrot.lane.b32.xlu0 %v1961, 122
    %v2965 = vpop.permute.xlu0 %2964
    %2966 = vrot.lane.b32.xlu0 %v1962, 122
    %v2967 = vpop.permute.xlu0 %2966
    %v2977 = vsel %vm2004, %v2944, 0
    %v2980 = vsel %vm2004, %v2945, 0
    %v2983 = vsel %vm2004, %v2946, 0
    %v2986 = vsel %vm2004, %v2947, 0
    %v2989 = vsel %vm2004, %v2948, 0
    %v2992 = vsel %vm2004, %v2949, 0
    %v2995 = vsel %vm2004, %v2950, 0
    %v2998 = vsel %vm2004, %v2951, 0
    %3000 = vmatprep.subr.mxu0 0.0
    %3001 = vmatpush1.msra.mxu0 %v2953
    %3002 = vmatprep.subr.mxu0 0.0
    %3003 = vmatpush1.msra.mxu0 %v2955
    %3004 = vmatprep.subr.mxu0 0.0
    %3005 = vmatpush1.msra.mxu0 %v2957
    %3006 = vmatprep.subr.mxu0 0.0
    %3007 = vmatpush1.msra.mxu0 %v2959
    %3008 = vmatprep.subr.mxu0 0.0
    %3009 = vmatpush1.msra.mxu0 %v2961
    %3010 = vmatprep.subr.mxu0 0.0
    %3011 = vmatpush1.msra.mxu0 %v2963
    %3012 = vmatprep.subr.mxu0 0.0
    %3013 = vmatpush1.msra.mxu0 %v2965
    %3014 = vmatprep.subr.mxu0 0.0
    %3015 = vmatpush1.msra.mxu0 %v2967
    %3016 = vmatprep.subr.mxu0 0.0
    %3017 = vmatpush1.msra.mxu0 0.0
    %3018 = vmatprep.subr.mxu0 0.0
    %3019 = vmatpush1.msra.mxu0 0.0
    %3020 = vmatprep.subr.mxu0 0.0
    %3021 = vmatpush1.msra.mxu0 0.0
    %3022 = vmatprep.subr.mxu0 0.0
    %3023 = vmatpush1.msra.mxu0 0.0
    %3024 = vmatprep.subr.mxu0 0.0
    %3025 = vmatpush1.msra.mxu0 0.0
    %3026 = vmatprep.subr.mxu0 0.0
    %3027 = vmatpush1.msra.mxu0 0.0
    %3028 = vmatprep.subr.mxu0 0.0
    %3029 = vmatpush1.msra.mxu0 0.0
    %3030 = vmatprep.subr.mxu0 0.0
    %3031 = vmatpush1.msra.mxu0 0.0
    %3032 = vmatprep.subr.mxu0 0.0
    %3033 = vmatpush1.msra.mxu0 0.0
    %3034 = vmatprep.subr.mxu0 0.0
    %3035 = vmatpush1.msra.mxu0 0.0
    %3036 = vmatprep.subr.mxu0 0.0
    %3037 = vmatpush1.msra.mxu0 0.0
    %3038 = vmatprep.subr.mxu0 0.0
    %3039 = vmatpush1.msra.mxu0 0.0
    %3040 = vmatprep.subr.mxu0 0.0
    %3041 = vmatpush1.msra.mxu0 0.0
    %3042 = vmatprep.subr.mxu0 0.0
    %3043 = vmatpush1.msra.mxu0 0.0
    %3044 = vmatprep.subr.mxu0 0.0
    %3045 = vmatpush1.msra.mxu0 0.0
    %3046 = vmatprep.subr.mxu0 0.0
    %3047 = vmatpush1.msra.mxu0 0.0
    %3048 = vmatprep.subr.mxu0 0.0
    %3049 = vmatpush1.msra.mxu0 0.0
    %3050 = vmatprep.subr.mxu0 0.0
    %3051 = vmatpush1.msra.mxu0 0.0
    %3052 = vmatprep.subr.mxu0 0.0
    %3053 = vmatpush1.msra.mxu0 0.0
    %3054 = vmatprep.subr.mxu0 0.0
    %3055 = vmatpush1.msra.mxu0 0.0
    %3056 = vmatprep.subr.mxu0 0.0
    %3057 = vmatpush1.msra.mxu0 0.0
    %3058 = vmatprep.subr.mxu0 0.0
    %3059 = vmatpush1.msra.mxu0 0.0
    %3060 = vmatprep.subr.mxu0 0.0
    %3061 = vmatpush1.msra.mxu0 0.0
    %3062 = vmatprep.subr.mxu0 0.0
    %3063 = vmatpush1.msra.mxu0 0.0
    %3064 = vmatprep.mubr.f32.mxu0 0.0
    %3065 = vmatmul.mubr.f32.gmra.mrb[0].mxu0 %v2977
    %v3066 = vpop.f32.mrb[0].mxu0
    %v3067 = vadd.f32 0.0, %v3066
    %v3068 = vpop.f32.mrb[0].mxu0
    %3069 = vmatprep.mubr.f32.mxu0 0.0
    %3070 = vmatmul.mubr.f32.gmra.mrb[0].mxu0 %v2980
    %v3071 = vpop.f32.mrb[0].mxu0
    %v3072 = vadd.f32 0.0, %v3071
    %v3073 = vpop.f32.mrb[0].mxu0
    %3074 = vmatprep.mubr.f32.mxu0 0.0
    %3075 = vmatmul.mubr.f32.gmra.mrb[0].mxu0 %v2983
    %v3076 = vpop.f32.mrb[0].mxu0
    %v3077 = vadd.f32 0.0, %v3076
    %v3078 = vpop.f32.mrb[0].mxu0
    %3079 = vmatprep.mubr.f32.mxu0 0.0
    %3080 = vmatmul.mubr.f32.gmra.mrb[0].mxu0 %v2986
    %v3081 = vpop.f32.mrb[0].mxu0
    %v3082 = vadd.f32 0.0, %v3081
    %v3083 = vpop.f32.mrb[0].mxu0
    %3084 = vmatprep.mubr.f32.mxu0 0.0
    %3085 = vmatmul.mubr.f32.gmra.mrb[0].mxu0 %v2989
    %v3086 = vpop.f32.mrb[0].mxu0
    %v3087 = vadd.f32 0.0, %v3086
    %v3088 = vpop.f32.mrb[0].mxu0
    %3089 = vmatprep.mubr.f32.mxu0 0.0
    %3090 = vmatmul.mubr.f32.gmra.mrb[0].mxu0 %v2992
    %v3091 = vpop.f32.mrb[0].mxu0
    %v3092 = vadd.f32 0.0, %v3091
    %v3093 = vpop.f32.mrb[0].mxu0
    %3094 = vmatprep.mubr.f32.mxu0 0.0
    %3095 = vmatmul.mubr.f32.gmra.mrb[0].mxu0 %v2995
    %v3096 = vpop.f32.mrb[0].mxu0
    %v3097 = vadd.f32 0.0, %v3096
    %v3098 = vpop.f32.mrb[0].mxu0
    %3099 = vmatprep.mubr.f32.mxu0 0.0
    %3100 = vmatmul.mubr.f32.gmra.mrb[0].mxu0 %v2998
    %v3101 = vpop.f32.mrb[0].mxu0
    %v3102 = vadd.f32 0.0, %v3101
    %v3103 = vpop.f32.mrb[0].mxu0
    %3104 = vdwg.mxu0
    %v3105 = vadd.f32 %v2935, %v3067
    %v3106 = vadd.f32 %v2936, %v3072
    %v3107 = vadd.f32 %v2937, %v3077
    %v3108 = vadd.f32 %v2938, %v3082
    %v3109 = vadd.f32 %v2939, %v3087
    %v3110 = vadd.f32 %v2940, %v3092
    %v3111 = vadd.f32 %v2941, %v3097
    %v3112 = vadd.f32 %v2942, %v3102
    %s3113 = scalar_lea.vmem %s5, 448
    %v3114 = vld [vmem:[%s3113] sm:$0xff]
    %v3115 = vld [vmem:[%s3113 + $0x8] sm:$0xff]
    %v3116 = vld [vmem:[%s3113 + $0x10] sm:$0xff]
    %v3117 = vld [vmem:[%s3113 + $0x18] sm:$0xff]
    %v3118 = vld [vmem:[%s3113 + $0x20] sm:$0xff]
    %v3119 = vld [vmem:[%s3113 + $0x28] sm:$0xff]
    %v3120 = vld [vmem:[%s3113 + $0x30] sm:$0xff]
    %v3121 = vld [vmem:[%s3113 + $0x38] sm:$0xff]
    %3122 = vrot.lane.b32.xlu0 %v1955, 121
    %v3123 = vpop.permute.xlu0 %3122
    %3124 = vrot.lane.b32.xlu0 %v1956, 121
    %v3125 = vpop.permute.xlu0 %3124
    %3126 = vrot.lane.b32.xlu0 %v1957, 121
    %v3127 = vpop.permute.xlu0 %3126
    %3128 = vrot.lane.b32.xlu0 %v1958, 121
    %v3129 = vpop.permute.xlu0 %3128
    %3130 = vrot.lane.b32.xlu0 %v1959, 121
    %v3131 = vpop.permute.xlu0 %3130
    %3132 = vrot.lane.b32.xlu0 %v1960, 121
    %v3133 = vpop.permute.xlu0 %3132
    %3134 = vrot.lane.b32.xlu0 %v1961, 121
    %v3135 = vpop.permute.xlu0 %3134
    %3136 = vrot.lane.b32.xlu0 %v1962, 121
    %v3137 = vpop.permute.xlu0 %3136
    %v3147 = vsel %vm2004, %v3114, 0
    %v3150 = vsel %vm2004, %v3115, 0
    %v3153 = vsel %vm2004, %v3116, 0
    %v3156 = vsel %vm2004, %v3117, 0
    %v3159 = vsel %vm2004, %v3118, 0
    %v3162 = vsel %vm2004, %v3119, 0
    %v3165 = vsel %vm2004, %v3120, 0
    %v3168 = vsel %vm2004, %v3121, 0
    %3170 = vmatprep.subr.mxu0 0.0
    %3171 = vmatpush1.msra.mxu0 %v3123
    %3172 = vmatprep.subr.mxu0 0.0
    %3173 = vmatpush1.msra.mxu0 %v3125
    %3174 = vmatprep.subr.mxu0 0.0
    %3175 = vmatpush1.msra.mxu0 %v3127
    %3176 = vmatprep.subr.mxu0 0.0
    %3177 = vmatpush1.msra.mxu0 %v3129
    %3178 = vmatprep.subr.mxu0 0.0
    %3179 = vmatpush1.msra.mxu0 %v3131
    %3180 = vmatprep.subr.mxu0 0.0
    %3181 = vmatpush1.msra.mxu0 %v3133
    %3182 = vmatprep.subr.mxu0 0.0
    %3183 = vmatpush1.msra.mxu0 %v3135
    %3184 = vmatprep.subr.mxu0 0.0
    %3185 = vmatpush1.msra.mxu0 %v3137
    %3186 = vmatprep.subr.mxu0 0.0
    %3187 = vmatpush1.msra.mxu0 0.0
    %3188 = vmatprep.subr.mxu0 0.0
    %3189 = vmatpush1.msra.mxu0 0.0
    %3190 = vmatprep.subr.mxu0 0.0
    %3191 = vmatpush1.msra.mxu0 0.0
    %3192 = vmatprep.subr.mxu0 0.0
    %3193 = vmatpush1.msra.mxu0 0.0
    %3194 = vmatprep.subr.mxu0 0.0
    %3195 = vmatpush1.msra.mxu0 0.0
    %3196 = vmatprep.subr.mxu0 0.0
    %3197 = vmatpush1.msra.mxu0 0.0
    %3198 = vmatprep.subr.mxu0 0.0
    %3199 = vmatpush1.msra.mxu0 0.0
    %3200 = vmatprep.subr.mxu0 0.0
    %3201 = vmatpush1.msra.mxu0 0.0
    %3202 = vmatprep.subr.mxu0 0.0
    %3203 = vmatpush1.msra.mxu0 0.0
    %3204 = vmatprep.subr.mxu0 0.0
    %3205 = vmatpush1.msra.mxu0 0.0
    %3206 = vmatprep.subr.mxu0 0.0
    %3207 = vmatpush1.msra.mxu0 0.0
    %3208 = vmatprep.subr.mxu0 0.0
    %3209 = vmatpush1.msra.mxu0 0.0
    %3210 = vmatprep.subr.mxu0 0.0
    %3211 = vmatpush1.msra.mxu0 0.0
    %3212 = vmatprep.subr.mxu0 0.0
    %3213 = vmatpush1.msra.mxu0 0.0
    %3214 = vmatprep.subr.mxu0 0.0
    %3215 = vmatpush1.msra.mxu0 0.0
    %3216 = vmatprep.subr.mxu0 0.0
    %3217 = vmatpush1.msra.mxu0 0.0
    %3218 = vmatprep.subr.mxu0 0.0
    %3219 = vmatpush1.msra.mxu0 0.0
    %3220 = vmatprep.subr.mxu0 0.0
    %3221 = vmatpush1.msra.mxu0 0.0
    %3222 = vmatprep.subr.mxu0 0.0
    %3223 = vmatpush1.msra.mxu0 0.0
    %3224 = vmatprep.subr.mxu0 0.0
    %3225 = vmatpush1.msra.mxu0 0.0
    %3226 = vmatprep.subr.mxu0 0.0
    %3227 = vmatpush1.msra.mxu0 0.0
    %3228 = vmatprep.subr.mxu0 0.0
    %3229 = vmatpush1.msra.mxu0 0.0
    %3230 = vmatprep.subr.mxu0 0.0
    %3231 = vmatpush1.msra.mxu0 0.0
    %3232 = vmatprep.subr.mxu0 0.0
    %3233 = vmatpush1.msra.mxu0 0.0
    %3234 = vmatprep.mubr.f32.mxu0 0.0
    %3235 = vmatmul.mubr.f32.gmra.mrb[0].mxu0 %v3147
    %v3236 = vpop.f32.mrb[0].mxu0
    %v3237 = vadd.f32 0.0, %v3236
    %v3238 = vpop.f32.mrb[0].mxu0
    %3239 = vmatprep.mubr.f32.mxu0 0.0
    %3240 = vmatmul.mubr.f32.gmra.mrb[0].mxu0 %v3150
    %v3241 = vpop.f32.mrb[0].mxu0
    %v3242 = vadd.f32 0.0, %v3241
    %v3243 = vpop.f32.mrb[0].mxu0
    %3244 = vmatprep.mubr.f32.mxu0 0.0
    %3245 = vmatmul.mubr.f32.gmra.mrb[0].mxu0 %v3153
    %v3246 = vpop.f32.mrb[0].mxu0
    %v3247 = vadd.f32 0.0, %v3246
    %v3248 = vpop.f32.mrb[0].mxu0
    %3249 = vmatprep.mubr.f32.mxu0 0.0
    %3250 = vmatmul.mubr.f32.gmra.mrb[0].mxu0 %v3156
    %v3251 = vpop.f32.mrb[0].mxu0
    %v3252 = vadd.f32 0.0, %v3251
    %v3253 = vpop.f32.mrb[0].mxu0
    %3254 = vmatprep.mubr.f32.mxu0 0.0
    %3255 = vmatmul.mubr.f32.gmra.mrb[0].mxu0 %v3159
    %v3256 = vpop.f32.mrb[0].mxu0
    %v3257 = vadd.f32 0.0, %v3256
    %v3258 = vpop.f32.mrb[0].mxu0
    %3259 = vmatprep.mubr.f32.mxu0 0.0
    %3260 = vmatmul.mubr.f32.gmra.mrb[0].mxu0 %v3162
    %v3261 = vpop.f32.mrb[0].mxu0
    %v3262 = vadd.f32 0.0, %v3261
    %v3263 = vpop.f32.mrb[0].mxu0
    %3264 = vmatprep.mubr.f32.mxu0 0.0
    %3265 = vmatmul.mubr.f32.gmra.mrb[0].mxu0 %v3165
    %v3266 = vpop.f32.mrb[0].mxu0
    %v3267 = vadd.f32 0.0, %v3266
    %v3268 = vpop.f32.mrb[0].mxu0
    %3269 = vmatprep.mubr.f32.mxu0 0.0
    %3270 = vmatmul.mubr.f32.gmra.mrb[0].mxu0 %v3168
    %v3271 = vpop.f32.mrb[0].mxu0
    %v3272 = vadd.f32 0.0, %v3271
    %v3273 = vpop.f32.mrb[0].mxu0
    %3274 = vdwg.mxu0
    %v3275 = vadd.f32 %v3105, %v3237
    %v3276 = vadd.f32 %v3106, %v3242
    %v3277 = vadd.f32 %v3107, %v3247
    %v3278 = vadd.f32 %v3108, %v3252
    %v3279 = vadd.f32 %v3109, %v3257
    %v3280 = vadd.f32 %v3110, %v3262
    %v3281 = vadd.f32 %v3111, %v3267
    %v3282 = vadd.f32 %v3112, %v3272
    %v3283 = vld [vmem:[%s6] sm:$0xff]
    %v3284 = vld [vmem:[%s6 + $0x8] sm:$0xff]
    %v3285 = vld [vmem:[%s6 + $0x10] sm:$0xff]
    %v3286 = vld [vmem:[%s6 + $0x18] sm:$0xff]
    %v3287 = vld [vmem:[%s6 + $0x20] sm:$0xff]
    %v3288 = vld [vmem:[%s6 + $0x28] sm:$0xff]
    %v3289 = vld [vmem:[%s6 + $0x30] sm:$0xff]
    %v3290 = vld [vmem:[%s6 + $0x38] sm:$0xff]
    %3292 = vset.pattern.permute.xlu0 0
    %3293 = vperm.xlu0 %3292, %v3283
    %v3294 = vpop.permute.xlu0 %3293
    %3297 = vset.pattern.permute.xlu0 0
    %3298 = vperm.xlu0 %3297, %v3284
    %v3299 = vpop.permute.xlu0 %3298
    %3302 = vset.pattern.permute.xlu0 0
    %3303 = vperm.xlu0 %3302, %v3285
    %v3304 = vpop.permute.xlu0 %3303
    %3307 = vset.pattern.permute.xlu0 0
    %3308 = vperm.xlu0 %3307, %v3286
    %v3309 = vpop.permute.xlu0 %3308
    %3312 = vset.pattern.permute.xlu0 0
    %3313 = vperm.xlu0 %3312, %v3287
    %v3314 = vpop.permute.xlu0 %3313
    %3317 = vset.pattern.permute.xlu0 0
    %3318 = vperm.xlu0 %3317, %v3288
    %v3319 = vpop.permute.xlu0 %3318
    %3322 = vset.pattern.permute.xlu0 0
    %3323 = vperm.xlu0 %3322, %v3289
    %v3324 = vpop.permute.xlu0 %3323
    %3327 = vset.pattern.permute.xlu0 0
    %3328 = vperm.xlu0 %3327, %v3290
    %v3329 = vpop.permute.xlu0 %3328
    %v3331 = vadd.f32 %v3275, %v3294
    %v3332 = vadd.f32 %v3276, %v3299
    %v3333 = vadd.f32 %v3277, %v3304
    %v3334 = vadd.f32 %v3278, %v3309
    %v3335 = vadd.f32 %v3279, %v3314
    %v3336 = vadd.f32 %v3280, %v3319
    %v3337 = vadd.f32 %v3281, %v3324
    %v3338 = vadd.f32 %v3282, %v3329
    %v3339 = vmax.f32 %v3331, 0.0
    %v3340 = vmax.f32 %v3332, 0.0
    %v3341 = vmax.f32 %v3333, 0.0
    %v3342 = vmax.f32 %v3334, 0.0
    %v3343 = vmax.f32 %v3335, 0.0
    %v3344 = vmax.f32 %v3336, 0.0
    %v3345 = vmax.f32 %v3337, 0.0
    %v3346 = vmax.f32 %v3338, 0.0
    %vm3347 = vcmask 662528
    %v3349 = vsel %vm3347, %v3339, 0
    %v3352 = vsel %vm3347, %v3340, 0
    %v3355 = vsel %vm3347, %v3341, 0
    %v3358 = vsel %vm3347, %v3342, 0
    %v3361 = vsel %vm3347, %v3343, 0
    %v3364 = vsel %vm3347, %v3344, 0
    %v3367 = vsel %vm3347, %v3345, 0
    %v3370 = vsel %vm3347, %v3346, 0
    %v3373 = vsel %vm1672, %v1593, 0
    %3375 = vmatprep.subr.mxu0 0.0
    %3376 = vmatpush1.msra.mxu0 %v1583
    %3377 = vmatprep.subr.mxu0 0.0
    %3378 = vmatpush1.msra.mxu0 %v1584
    %3379 = vmatprep.subr.mxu0 0.0
    %3380 = vmatpush1.msra.mxu0 %v1585
    %3381 = vmatprep.subr.mxu0 0.0
    %3382 = vmatpush1.msra.mxu0 %v1586
    %3383 = vmatprep.subr.mxu0 0.0
    %3384 = vmatpush1.msra.mxu0 %v1587
    %3385 = vmatprep.subr.mxu0 0.0
    %3386 = vmatpush1.msra.mxu0 %v1588
    %3387 = vmatprep.subr.mxu0 0.0
    %3388 = vmatpush1.msra.mxu0 %v1589
    %3389 = vmatprep.subr.mxu0 0.0
    %3390 = vmatpush1.msra.mxu0 %v1590
    %3391 = vmatprep.subr.mxu0 0.0
    %3392 = vmatpush1.msra.mxu0 %v1591
    %3393 = vmatprep.subr.mxu0 0.0
    %3394 = vmatpush1.msra.mxu0 %v1592
    %3395 = vmatprep.subr.mxu0 0.0
    %3396 = vmatpush1.msra.mxu0 %v3373
    %3397 = vmatprep.subr.mxu0 0.0
    %3398 = vmatpush1.msra.mxu0 0.0
    %3399 = vmatprep.subr.mxu0 0.0
    %3400 = vmatpush1.msra.mxu0 0.0
    %3401 = vmatprep.subr.mxu0 0.0
    %3402 = vmatpush1.msra.mxu0 0.0
    %3403 = vmatprep.subr.mxu0 0.0
    %3404 = vmatpush1.msra.mxu0 0.0
    %3405 = vmatprep.subr.mxu0 0.0
    %3406 = vmatpush1.msra.mxu0 0.0
    %3407 = vmatprep.subr.mxu0 0.0
    %3408 = vmatpush1.msra.mxu0 0.0
    %3409 = vmatprep.subr.mxu0 0.0
    %3410 = vmatpush1.msra.mxu0 0.0
    %3411 = vmatprep.subr.mxu0 0.0
    %3412 = vmatpush1.msra.mxu0 0.0
    %3413 = vmatprep.subr.mxu0 0.0
    %3414 = vmatpush1.msra.mxu0 0.0
    %3415 = vmatprep.subr.mxu0 0.0
    %3416 = vmatpush1.msra.mxu0 0.0
    %3417 = vmatprep.subr.mxu0 0.0
    %3418 = vmatpush1.msra.mxu0 0.0
    %3419 = vmatprep.subr.mxu0 0.0
    %3420 = vmatpush1.msra.mxu0 0.0
    %3421 = vmatprep.subr.mxu0 0.0
    %3422 = vmatpush1.msra.mxu0 0.0
    %3423 = vmatprep.subr.mxu0 0.0
    %3424 = vmatpush1.msra.mxu0 0.0
    %3425 = vmatprep.subr.mxu0 0.0
    %3426 = vmatpush1.msra.mxu0 0.0
    %3427 = vmatprep.subr.mxu0 0.0
    %3428 = vmatpush1.msra.mxu0 0.0
    %3429 = vmatprep.subr.mxu0 0.0
    %3430 = vmatpush1.msra.mxu0 0.0
    %3431 = vmatprep.subr.mxu0 0.0
    %3432 = vmatpush1.msra.mxu0 0.0
    %3433 = vmatprep.subr.mxu0 0.0
    %3434 = vmatpush1.msra.mxu0 0.0
    %3435 = vmatprep.subr.mxu0 0.0
    %3436 = vmatpush1.msra.mxu0 0.0
    %3437 = vmatprep.subr.mxu0 0.0
    %3438 = vmatpush1.msra.mxu0 0.0
    %3439 = vmatprep.mubr.f32.mxu0 0.0
    %3440 = vmatmul.mubr.f32.gmra.mrb[0].mxu0 %v3349
    %v3441 = vpop.f32.mrb[0].mxu0
    %v3442 = vadd.f32 0.0, %v3441
    %v3443 = vpop.f32.mrb[0].mxu0
    %3444 = vmatprep.mubr.f32.mxu0 0.0
    %3445 = vmatmul.mubr.f32.gmra.mrb[0].mxu0 %v3352
    %v3446 = vpop.f32.mrb[0].mxu0
    %v3447 = vadd.f32 0.0, %v3446
    %v3448 = vpop.f32.mrb[0].mxu0
    %3449 = vmatprep.mubr.f32.mxu0 0.0
    %3450 = vmatmul.mubr.f32.gmra.mrb[0].mxu0 %v3355
    %v3451 = vpop.f32.mrb[0].mxu0
    %v3452 = vadd.f32 0.0, %v3451
    %v3453 = vpop.f32.mrb[0].mxu0
    %3454 = vmatprep.mubr.f32.mxu0 0.0
    %3455 = vmatmul.mubr.f32.gmra.mrb[0].mxu0 %v3358
    %v3456 = vpop.f32.mrb[0].mxu0
    %v3457 = vadd.f32 0.0, %v3456
    %v3458 = vpop.f32.mrb[0].mxu0
    %3459 = vmatprep.mubr.f32.mxu0 0.0
    %3460 = vmatmul.mubr.f32.gmra.mrb[0].mxu0 %v3361
    %v3461 = vpop.f32.mrb[0].mxu0
    %v3462 = vadd.f32 0.0, %v3461
    %v3463 = vpop.f32.mrb[0].mxu0
    %3464 = vmatprep.mubr.f32.mxu0 0.0
    %3465 = vmatmul.mubr.f32.gmra.mrb[0].mxu0 %v3364
    %v3466 = vpop.f32.mrb[0].mxu0
    %v3467 = vadd.f32 0.0, %v3466
    %v3468 = vpop.f32.mrb[0].mxu0
    %3469 = vmatprep.mubr.f32.mxu0 0.0
    %3470 = vmatmul.mubr.f32.gmra.mrb[0].mxu0 %v3367
    %v3471 = vpop.f32.mrb[0].mxu0
    %v3472 = vadd.f32 0.0, %v3471
    %v3473 = vpop.f32.mrb[0].mxu0
    %3474 = vmatprep.mubr.f32.mxu0 0.0
    %3475 = vmatmul.mubr.f32.gmra.mrb[0].mxu0 %v3370
    %v3476 = vpop.f32.mrb[0].mxu0
    %v3477 = vadd.f32 0.0, %v3476
    %v3478 = vpop.f32.mrb[0].mxu0
    %3479 = vdwg.mxu0
    %v3481 = vsel %vm1672, %v1636, 0
    %3483 = vmatprep.subr.mxu0 0.0
    %3484 = vmatpush1.msra.mxu0 %v1626
    %3485 = vmatprep.subr.mxu0 0.0
    %3486 = vmatpush1.msra.mxu0 %v1627
    %3487 = vmatprep.subr.mxu0 0.0
    %3488 = vmatpush1.msra.mxu0 %v1628
    %3489 = vmatprep.subr.mxu0 0.0
    %3490 = vmatpush1.msra.mxu0 %v1629
    %3491 = vmatprep.subr.mxu0 0.0
    %3492 = vmatpush1.msra.mxu0 %v1630
    %3493 = vmatprep.subr.mxu0 0.0
    %3494 = vmatpush1.msra.mxu0 %v1631
    %3495 = vmatprep.subr.mxu0 0.0
    %3496 = vmatpush1.msra.mxu0 %v1632
    %3497 = vmatprep.subr.mxu0 0.0
    %3498 = vmatpush1.msra.mxu0 %v1633
    %3499 = vmatprep.subr.mxu0 0.0
    %3500 = vmatpush1.msra.mxu0 %v1634
    %3501 = vmatprep.subr.mxu0 0.0
    %3502 = vmatpush1.msra.mxu0 %v1635
    %3503 = vmatprep.subr.mxu0 0.0
    %3504 = vmatpush1.msra.mxu0 %v3481
    %3505 = vmatprep.subr.mxu0 0.0
    %3506 = vmatpush1.msra.mxu0 0.0
    %3507 = vmatprep.subr.mxu0 0.0
    %3508 = vmatpush1.msra.mxu0 0.0
    %3509 = vmatprep.subr.mxu0 0.0
    %3510 = vmatpush1.msra.mxu0 0.0
    %3511 = vmatprep.subr.mxu0 0.0
    %3512 = vmatpush1.msra.mxu0 0.0
    %3513 = vmatprep.subr.mxu0 0.0
    %3514 = vmatpush1.msra.mxu0 0.0
    %3515 = vmatprep.subr.mxu0 0.0
    %3516 = vmatpush1.msra.mxu0 0.0
    %3517 = vmatprep.subr.mxu0 0.0
    %3518 = vmatpush1.msra.mxu0 0.0
    %3519 = vmatprep.subr.mxu0 0.0
    %3520 = vmatpush1.msra.mxu0 0.0
    %3521 = vmatprep.subr.mxu0 0.0
    %3522 = vmatpush1.msra.mxu0 0.0
    %3523 = vmatprep.subr.mxu0 0.0
    %3524 = vmatpush1.msra.mxu0 0.0
    %3525 = vmatprep.subr.mxu0 0.0
    %3526 = vmatpush1.msra.mxu0 0.0
    %3527 = vmatprep.subr.mxu0 0.0
    %3528 = vmatpush1.msra.mxu0 0.0
    %3529 = vmatprep.subr.mxu0 0.0
    %3530 = vmatpush1.msra.mxu0 0.0
    %3531 = vmatprep.subr.mxu0 0.0
    %3532 = vmatpush1.msra.mxu0 0.0
    %3533 = vmatprep.subr.mxu0 0.0
    %3534 = vmatpush1.msra.mxu0 0.0
    %3535 = vmatprep.subr.mxu0 0.0
    %3536 = vmatpush1.msra.mxu0 0.0
    %3537 = vmatprep.subr.mxu0 0.0
    %3538 = vmatpush1.msra.mxu0 0.0
    %3539 = vmatprep.subr.mxu0 0.0
    %3540 = vmatpush1.msra.mxu0 0.0
    %3541 = vmatprep.subr.mxu0 0.0
    %3542 = vmatpush1.msra.mxu0 0.0
    %3543 = vmatprep.subr.mxu0 0.0
    %3544 = vmatpush1.msra.mxu0 0.0
    %3545 = vmatprep.subr.mxu0 0.0
    %3546 = vmatpush1.msra.mxu0 0.0
    %3547 = vmatprep.mubr.f32.mxu0 0.0
    %3548 = vmatmul.mubr.f32.gmra.mrb[0].mxu0 %v3349
    %v3549 = vpop.f32.mrb[0].mxu0
    %v3550 = vadd.f32 0.0, %v3549
    %v3551 = vpop.f32.mrb[0].mxu0
    %3552 = vmatprep.mubr.f32.mxu0 0.0
    %3553 = vmatmul.mubr.f32.gmra.mrb[0].mxu0 %v3352
    %v3554 = vpop.f32.mrb[0].mxu0
    %v3555 = vadd.f32 0.0, %v3554
    %v3556 = vpop.f32.mrb[0].mxu0
    %3557 = vmatprep.mubr.f32.mxu0 0.0
    %3558 = vmatmul.mubr.f32.gmra.mrb[0].mxu0 %v3355
    %v3559 = vpop.f32.mrb[0].mxu0
    %v3560 = vadd.f32 0.0, %v3559
    %v3561 = vpop.f32.mrb[0].mxu0
    %3562 = vmatprep.mubr.f32.mxu0 0.0
    %3563 = vmatmul.mubr.f32.gmra.mrb[0].mxu0 %v3358
    %v3564 = vpop.f32.mrb[0].mxu0
    %v3565 = vadd.f32 0.0, %v3564
    %v3566 = vpop.f32.mrb[0].mxu0
    %3567 = vmatprep.mubr.f32.mxu0 0.0
    %3568 = vmatmul.mubr.f32.gmra.mrb[0].mxu0 %v3361
    %v3569 = vpop.f32.mrb[0].mxu0
    %v3570 = vadd.f32 0.0, %v3569
    %v3571 = vpop.f32.mrb[0].mxu0
    %3572 = vmatprep.mubr.f32.mxu0 0.0
    %3573 = vmatmul.mubr.f32.gmra.mrb[0].mxu0 %v3364
    %v3574 = vpop.f32.mrb[0].mxu0
    %v3575 = vadd.f32 0.0, %v3574
    %v3576 = vpop.f32.mrb[0].mxu0
    %3577 = vmatprep.mubr.f32.mxu0 0.0
    %3578 = vmatmul.mubr.f32.gmra.mrb[0].mxu0 %v3367
    %v3579 = vpop.f32.mrb[0].mxu0
    %v3580 = vadd.f32 0.0, %v3579
    %v3581 = vpop.f32.mrb[0].mxu0
    %3582 = vmatprep.mubr.f32.mxu0 0.0
    %3583 = vmatmul.mubr.f32.gmra.mrb[0].mxu0 %v3370
    %v3584 = vpop.f32.mrb[0].mxu0
    %v3585 = vadd.f32 0.0, %v3584
    %v3586 = vpop.f32.mrb[0].mxu0
    %3587 = vdwg.mxu0
    %v3588 = vmax.f32 %v3442, %v3550
    %v3589 = vmax.f32 %v3447, %v3555
    %v3590 = vmax.f32 %v3452, %v3560
    %v3591 = vmax.f32 %v3457, %v3565
    %v3592 = vmax.f32 %v3462, %v3570
    %v3593 = vmax.f32 %v3467, %v3575
    %v3594 = vmax.f32 %v3472, %v3580
    %v3595 = vmax.f32 %v3477, %v3585
    %v3596 = vld [vmem:[%s7] sm:$0xff]
    %v3597 = vld [vmem:[%s7 + $0x8] sm:$0xff]
    %v3598 = vld [vmem:[%s7 + $0x10] sm:$0xff]
    %v3599 = vld [vmem:[%s7 + $0x18] sm:$0xff]
    %v3600 = vld [vmem:[%s7 + $0x20] sm:$0xff]
    %v3601 = vld [vmem:[%s7 + $0x28] sm:$0xff]
    %v3602 = vld [vmem:[%s7 + $0x30] sm:$0xff]
    %v3603 = vld [vmem:[%s7 + $0x38] sm:$0xff]
    %v3604 = vld [vmem:[%s7 + $0x40] sm:$0xff]
    %v3605 = vld [vmem:[%s7 + $0x48] sm:$0xff]
    %v3607 = vsel %vm118, %v3588, 0
    %v3610 = vsel %vm118, %v3589, 0
    %v3613 = vsel %vm118, %v3590, 0
    %v3616 = vsel %vm118, %v3591, 0
    %v3619 = vsel %vm118, %v3592, 0
    %v3622 = vsel %vm118, %v3593, 0
    %v3625 = vsel %vm118, %v3594, 0
    %v3628 = vsel %vm118, %v3595, 0
    %3630 = vmatprep.subr.mxu0 %v3597
    %3631 = vmatpush1.msra.mxu0 %v3596
    %3632 = vmatprep.subr.mxu0 %v3599
    %3633 = vmatpush1.msra.mxu0 %v3598
    %3634 = vmatprep.subr.mxu0 %v3601
    %3635 = vmatpush1.msra.mxu0 %v3600
    %3636 = vmatprep.subr.mxu0 %v3603
    %3637 = vmatpush1.msra.mxu0 %v3602
    %3638 = vmatprep.subr.mxu0 %v3605
    %3639 = vmatpush1.msra.mxu0 %v3604
    %3640 = vmatprep.subr.mxu0 0.0
    %3641 = vmatpush1.msra.mxu0 0.0
    %3642 = vmatprep.subr.mxu0 0.0
    %3643 = vmatpush1.msra.mxu0 0.0
    %3644 = vmatprep.subr.mxu0 0.0
    %3645 = vmatpush1.msra.mxu0 0.0
    %3646 = vmatprep.subr.mxu0 0.0
    %3647 = vmatpush1.msra.mxu0 0.0
    %3648 = vmatprep.subr.mxu0 0.0
    %3649 = vmatpush1.msra.mxu0 0.0
    %3650 = vmatprep.subr.mxu0 0.0
    %3651 = vmatpush1.msra.mxu0 0.0
    %3652 = vmatprep.subr.mxu0 0.0
    %3653 = vmatpush1.msra.mxu0 0.0
    %3654 = vmatprep.subr.mxu0 0.0
    %3655 = vmatpush1.msra.mxu0 0.0
    %3656 = vmatprep.subr.mxu0 0.0
    %3657 = vmatpush1.msra.mxu0 0.0
    %3658 = vmatprep.subr.mxu0 0.0
    %3659 = vmatpush1.msra.mxu0 0.0
    %3660 = vmatprep.subr.mxu0 0.0
    %3661 = vmatpush1.msra.mxu0 0.0
    %3662 = vmatprep.subr.mxu0 0.0
    %3663 = vmatpush1.msra.mxu0 0.0
    %3664 = vmatprep.subr.mxu0 0.0
    %3665 = vmatpush1.msra.mxu0 0.0
    %3666 = vmatprep.subr.mxu0 0.0
    %3667 = vmatpush1.msra.mxu0 0.0
    %3668 = vmatprep.subr.mxu0 0.0
    %3669 = vmatpush1.msra.mxu0 0.0
    %3670 = vmatprep.subr.mxu0 0.0
    %3671 = vmatpush1.msra.mxu0 0.0
    %3672 = vmatprep.subr.mxu0 0.0
    %3673 = vmatpush1.msra.mxu0 0.0
    %3674 = vmatprep.subr.mxu0 0.0
    %3675 = vmatpush1.msra.mxu0 0.0
    %3676 = vmatprep.subr.mxu0 0.0
    %3677 = vmatpush1.msra.mxu0 0.0
    %3678 = vmatprep.subr.mxu0 0.0
    %3679 = vmatpush1.msra.mxu0 0.0
    %3680 = vmatprep.subr.mxu0 0.0
    %3681 = vmatpush1.msra.mxu0 0.0
    %3682 = vmatprep.subr.mxu0 0.0
    %3683 = vmatpush1.msra.mxu0 0.0
    %3684 = vmatprep.subr.mxu0 0.0
    %3685 = vmatpush1.msra.mxu0 0.0
    %3686 = vmatprep.subr.mxu0 0.0
    %3687 = vmatpush1.msra.mxu0 0.0
    %3688 = vmatprep.subr.mxu0 0.0
    %3689 = vmatpush1.msra.mxu0 0.0
    %3690 = vmatprep.subr.mxu0 0.0
    %3691 = vmatpush1.msra.mxu0 0.0
    %3692 = vmatprep.subr.mxu0 0.0
    %3693 = vmatpush1.msra.mxu0 0.0
    %3694 = vmatprep.mubr.f32.mxu0 0.0
    %3695 = vmatmul.mubr.f32.gmra.mrb[0].mxu0 %v3607
    %v3696 = vpop.f32.mrb[0].mxu0
    %v3697 = vadd.f32 0.0, %v3696
    %v3698 = vpop.f32.mrb[0].mxu0
    %v3699 = vadd.f32 0.0, %v3698
    %3700 = vmatprep.mubr.f32.mxu0 0.0
    %3701 = vmatmul.mubr.f32.gmra.mrb[0].mxu0 %v3610
    %v3702 = vpop.f32.mrb[0].mxu0
    %v3703 = vadd.f32 0.0, %v3702
    %v3704 = vpop.f32.mrb[0].mxu0
    %v3705 = vadd.f32 0.0, %v3704
    %3706 = vmatprep.mubr.f32.mxu0 0.0
    %3707 = vmatmul.mubr.f32.gmra.mrb[0].mxu0 %v3613
    %v3708 = vpop.f32.mrb[0].mxu0
    %v3709 = vadd.f32 0.0, %v3708
    %v3710 = vpop.f32.mrb[0].mxu0
    %v3711 = vadd.f32 0.0, %v3710
    %3712 = vmatprep.mubr.f32.mxu0 0.0
    %3713 = vmatmul.mubr.f32.gmra.mrb[0].mxu0 %v3616
    %v3714 = vpop.f32.mrb[0].mxu0
    %v3715 = vadd.f32 0.0, %v3714
    %v3716 = vpop.f32.mrb[0].mxu0
    %v3717 = vadd.f32 0.0, %v3716
    %3718 = vmatprep.mubr.f32.mxu0 0.0
    %3719 = vmatmul.mubr.f32.gmra.mrb[0].mxu0 %v3619
    %v3720 = vpop.f32.mrb[0].mxu0
    %v3721 = vadd.f32 0.0, %v3720
    %v3722 = vpop.f32.mrb[0].mxu0
    %v3723 = vadd.f32 0.0, %v3722
    %3724 = vmatprep.mubr.f32.mxu0 0.0
    %3725 = vmatmul.mubr.f32.gmra.mrb[0].mxu0 %v3622
    %v3726 = vpop.f32.mrb[0].mxu0
    %v3727 = vadd.f32 0.0, %v3726
    %v3728 = vpop.f32.mrb[0].mxu0
    %v3729 = vadd.f32 0.0, %v3728
    %3730 = vmatprep.mubr.f32.mxu0 0.0
    %3731 = vmatmul.mubr.f32.gmra.mrb[0].mxu0 %v3625
    %v3732 = vpop.f32.mrb[0].mxu0
    %v3733 = vadd.f32 0.0, %v3732
    %v3734 = vpop.f32.mrb[0].mxu0
    %v3735 = vadd.f32 0.0, %v3734
    %3736 = vmatprep.mubr.f32.mxu0 0.0
    %3737 = vmatmul.mubr.f32.gmra.mrb[0].mxu0 %v3628
    %v3738 = vpop.f32.mrb[0].mxu0
    %v3739 = vadd.f32 0.0, %v3738
    %v3740 = vpop.f32.mrb[0].mxu0
    %v3741 = vadd.f32 0.0, %v3740
    %3742 = vdwg.mxu0
    %v3743 = vadd.s32 %v1560, 128
    %v3744 = vand.u32 %v1538, 31
    %v3745 = vand.u32 %v1539, 31
    %v3746 = vand.u32 %v1540, 31
    %v3747 = vand.u32 %v1541, 31
    %v3748 = vand.u32 %v1542, 31
    %v3749 = vand.u32 %v1543, 31
    %v3750 = vand.u32 %v1544, 31
    %v3751 = vand.u32 %v1545, 31
    %v3752 = vand.u32 %v1560, 31
    %v3753 = vand.u32 %v3743, 31
    %vm3754 = vcmp.eq.s32.totalorder %v3744, %v3752
    %vm3755 = vcmp.eq.s32.totalorder %v3744, %v3753
    %vm3756 = vcmp.eq.s32.totalorder %v3745, %v3752
    %vm3757 = vcmp.eq.s32.totalorder %v3745, %v3753
    %vm3758 = vcmp.eq.s32.totalorder %v3746, %v3752
    %vm3759 = vcmp.eq.s32.totalorder %v3746, %v3753
    %vm3760 = vcmp.eq.s32.totalorder %v3747, %v3752
    %vm3761 = vcmp.eq.s32.totalorder %v3747, %v3753
    %vm3762 = vcmp.eq.s32.totalorder %v3748, %v3752
    %vm3763 = vcmp.eq.s32.totalorder %v3748, %v3753
    %vm3764 = vcmp.eq.s32.totalorder %v3749, %v3752
    %vm3765 = vcmp.eq.s32.totalorder %v3749, %v3753
    %vm3766 = vcmp.eq.s32.totalorder %v3750, %v3752
    %vm3767 = vcmp.eq.s32.totalorder %v3750, %v3753
    %vm3768 = vcmp.eq.s32.totalorder %v3751, %v3752
    %vm3769 = vcmp.eq.s32.totalorder %v3751, %v3753
    %v3770 = vsel %vm3754, 1.0, 0.0
    %v3771 = vsel %vm3755, 1.0, 0.0
    %v3772 = vsel %vm3756, 1.0, 0.0
    %v3773 = vsel %vm3757, 1.0, 0.0
    %v3774 = vsel %vm3758, 1.0, 0.0
    %v3775 = vsel %vm3759, 1.0, 0.0
    %v3776 = vsel %vm3760, 1.0, 0.0
    %v3777 = vsel %vm3761, 1.0, 0.0
    %v3778 = vsel %vm3762, 1.0, 0.0
    %v3779 = vsel %vm3763, 1.0, 0.0
    %v3780 = vsel %vm3764, 1.0, 0.0
    %v3781 = vsel %vm3765, 1.0, 0.0
    %v3782 = vsel %vm3766, 1.0, 0.0
    %v3783 = vsel %vm3767, 1.0, 0.0
    %v3784 = vsel %vm3768, 1.0, 0.0
    %v3785 = vsel %vm3769, 1.0, 0.0
    %v3786 = vmul.f32 %v3697, %v3770
    %v3787 = vmul.f32 %v3699, %v3771
    %v3788 = vmul.f32 %v3703, %v3772
    %v3789 = vmul.f32 %v3705, %v3773
    %v3790 = vmul.f32 %v3709, %v3774
    %v3791 = vmul.f32 %v3711, %v3775
    %v3792 = vmul.f32 %v3715, %v3776
    %v3793 = vmul.f32 %v3717, %v3777
    %v3794 = vmul.f32 %v3721, %v3778
    %v3795 = vmul.f32 %v3723, %v3779
    %v3796 = vmul.f32 %v3727, %v3780
    %v3797 = vmul.f32 %v3729, %v3781
    %v3798 = vmul.f32 %v3733, %v3782
    %v3799 = vmul.f32 %v3735, %v3783
    %v3800 = vmul.f32 %v3739, %v3784
    %v3801 = vmul.f32 %v3741, %v3785
    %v3802 = vmul.u32 %v1538, 32
    %vm3803 = vcmp.ge.s32.totalorder %v1560, %v3802
    %v3804 = vadd.s32 %v1538, 1
    %v3805 = vmul.u32 %v3804, 32
    %vm3806 = vcmp.lt.s32.totalorder %v1560, %v3805
    %vm3807 = vmand %vm3803, %vm3806
    %v3808 = vsel %vm3807, 1.0, 0.0
    %v3809 = vmul.u32 %v1560, 32
    %vm3810 = vcmp.ge.s32.totalorder %v1538, %v3809
    %vm3811 = vcmp.ge.s32.totalorder %v1539, %v3809
    %vm3812 = vcmp.ge.s32.totalorder %v1540, %v3809
    %vm3813 = vcmp.ge.s32.totalorder %v1541, %v3809
    %vm3814 = vcmp.ge.s32.totalorder %v1542, %v3809
    %vm3815 = vcmp.ge.s32.totalorder %v1543, %v3809
    %vm3816 = vcmp.ge.s32.totalorder %v1544, %v3809
    %vm3817 = vcmp.ge.s32.totalorder %v1545, %v3809
    %vm3818 = vcmp.ge.s32.totalorder %v1546, %v3809
    %vm3819 = vcmp.ge.s32.totalorder %v1547, %v3809
    %vm3820 = vcmp.ge.s32.totalorder %v1548, %v3809
    %vm3821 = vcmp.ge.s32.totalorder %v1549, %v3809
    %vm3822 = vcmp.ge.s32.totalorder %v1550, %v3809
    %vm3823 = vcmp.ge.s32.totalorder %v1551, %v3809
    %vm3824 = vcmp.ge.s32.totalorder %v1552, %v3809
    %vm3825 = vcmp.ge.s32.totalorder %v1553, %v3809
    %vm3826 = vcmp.ge.s32.totalorder %v1554, %v3809
    %vm3827 = vcmp.ge.s32.totalorder %v1555, %v3809
    %vm3828 = vcmp.ge.s32.totalorder %v1556, %v3809
    %vm3829 = vcmp.ge.s32.totalorder %v1557, %v3809
    %v3830 = vadd.s32 %v1560, 1
    %v3831 = vmul.u32 %v3830, 32
    %vm3832 = vcmp.lt.s32.totalorder %v1538, %v3831
    %vm3833 = vcmp.lt.s32.totalorder %v1539, %v3831
    %vm3834 = vcmp.lt.s32.totalorder %v1540, %v3831
    %vm3835 = vcmp.lt.s32.totalorder %v1541, %v3831
    %vm3836 = vcmp.lt.s32.totalorder %v1542, %v3831
    %vm3837 = vcmp.lt.s32.totalorder %v1543, %v3831
    %vm3838 = vcmp.lt.s32.totalorder %v1544, %v3831
    %vm3839 = vcmp.lt.s32.totalorder %v1545, %v3831
    %vm3840 = vcmp.lt.s32.totalorder %v1546, %v3831
    %vm3841 = vcmp.lt.s32.totalorder %v1547, %v3831
    %vm3842 = vcmp.lt.s32.totalorder %v1548, %v3831
    %vm3843 = vcmp.lt.s32.totalorder %v1549, %v3831
    %vm3844 = vcmp.lt.s32.totalorder %v1550, %v3831
    %vm3845 = vcmp.lt.s32.totalorder %v1551, %v3831
    %vm3846 = vcmp.lt.s32.totalorder %v1552, %v3831
    %vm3847 = vcmp.lt.s32.totalorder %v1553, %v3831
    %vm3848 = vcmp.lt.s32.totalorder %v1554, %v3831
    %vm3849 = vcmp.lt.s32.totalorder %v1555, %v3831
    %vm3850 = vcmp.lt.s32.totalorder %v1556, %v3831
    %vm3851 = vcmp.lt.s32.totalorder %v1557, %v3831
    %vm3852 = vmand %vm3810, %vm3832
    %vm3853 = vmand %vm3811, %vm3833
    %vm3854 = vmand %vm3812, %vm3834
    %vm3855 = vmand %vm3813, %vm3835
    %vm3856 = vmand %vm3814, %vm3836
    %vm3857 = vmand %vm3815, %vm3837
    %vm3858 = vmand %vm3816, %vm3838
    %vm3859 = vmand %vm3817, %vm3839
    %vm3860 = vmand %vm3818, %vm3840
    %vm3861 = vmand %vm3819, %vm3841
    %vm3862 = vmand %vm3820, %vm3842
    %vm3863 = vmand %vm3821, %vm3843
    %vm3864 = vmand %vm3822, %vm3844
    %vm3865 = vmand %vm3823, %vm3845
    %vm3866 = vmand %vm3824, %vm3846
    %vm3867 = vmand %vm3825, %vm3847
    %vm3868 = vmand %vm3826, %vm3848
    %vm3869 = vmand %vm3827, %vm3849
    %vm3870 = vmand %vm3828, %vm3850
    %vm3871 = vmand %vm3829, %vm3851
    %v3872 = vsel %vm3852, 1.0, 0.0
    %v3873 = vsel %vm3853, 1.0, 0.0
    %v3874 = vsel %vm3854, 1.0, 0.0
    %v3875 = vsel %vm3855, 1.0, 0.0
    %v3876 = vsel %vm3856, 1.0, 0.0
    %v3877 = vsel %vm3857, 1.0, 0.0
    %v3878 = vsel %vm3858, 1.0, 0.0
    %v3879 = vsel %vm3859, 1.0, 0.0
    %v3880 = vsel %vm3860, 1.0, 0.0
    %v3881 = vsel %vm3861, 1.0, 0.0
    %v3882 = vsel %vm3862, 1.0, 0.0
    %v3883 = vsel %vm3863, 1.0, 0.0
    %v3884 = vsel %vm3864, 1.0, 0.0
    %v3885 = vsel %vm3865, 1.0, 0.0
    %v3886 = vsel %vm3866, 1.0, 0.0
    %v3887 = vsel %vm3867, 1.0, 0.0
    %v3888 = vsel %vm3868, 1.0, 0.0
    %v3889 = vsel %vm3869, 1.0, 0.0
    %v3890 = vsel %vm3870, 1.0, 0.0
    %v3891 = vsel %vm3871, 1.0, 0.0
    %v3893 = vsel %vm2004, %v3808, 0
    %3895 = vmatprep.subr.mxu0 %v3787
    %3896 = vmatpush1.msra.mxu0 %v3786
    %3897 = vmatprep.subr.mxu0 %v3789
    %3898 = vmatpush1.msra.mxu0 %v3788
    %3899 = vmatprep.subr.mxu0 %v3791
    %3900 = vmatpush1.msra.mxu0 %v3790
    %3901 = vmatprep.subr.mxu0 %v3793
    %3902 = vmatpush1.msra.mxu0 %v3792
    %3903 = vmatprep.subr.mxu0 %v3795
    %3904 = vmatpush1.msra.mxu0 %v3794
    %3905 = vmatprep.subr.mxu0 %v3797
    %3906 = vmatpush1.msra.mxu0 %v3796
    %3907 = vmatprep.subr.mxu0 %v3799
    %3908 = vmatpush1.msra.mxu0 %v3798
    %3909 = vmatprep.subr.mxu0 %v3801
    %3910 = vmatpush1.msra.mxu0 %v3800
    %3911 = vmatprep.subr.mxu0 0.0
    %3912 = vmatpush1.msra.mxu0 0.0
    %3913 = vmatprep.subr.mxu0 0.0
    %3914 = vmatpush1.msra.mxu0 0.0
    %3915 = vmatprep.subr.mxu0 0.0
    %3916 = vmatpush1.msra.mxu0 0.0
    %3917 = vmatprep.subr.mxu0 0.0
    %3918 = vmatpush1.msra.mxu0 0.0
    %3919 = vmatprep.subr.mxu0 0.0
    %3920 = vmatpush1.msra.mxu0 0.0
    %3921 = vmatprep.subr.mxu0 0.0
    %3922 = vmatpush1.msra.mxu0 0.0
    %3923 = vmatprep.subr.mxu0 0.0
    %3924 = vmatpush1.msra.mxu0 0.0
    %3925 = vmatprep.subr.mxu0 0.0
    %3926 = vmatpush1.msra.mxu0 0.0
    %3927 = vmatprep.subr.mxu0 0.0
    %3928 = vmatpush1.msra.mxu0 0.0
    %3929 = vmatprep.subr.mxu0 0.0
    %3930 = vmatpush1.msra.mxu0 0.0
    %3931 = vmatprep.subr.mxu0 0.0
    %3932 = vmatpush1.msra.mxu0 0.0
    %3933 = vmatprep.subr.mxu0 0.0
    %3934 = vmatpush1.msra.mxu0 0.0
    %3935 = vmatprep.subr.mxu0 0.0
    %3936 = vmatpush1.msra.mxu0 0.0
    %3937 = vmatprep.subr.mxu0 0.0
    %3938 = vmatpush1.msra.mxu0 0.0
    %3939 = vmatprep.subr.mxu0 0.0
    %3940 = vmatpush1.msra.mxu0 0.0
    %3941 = vmatprep.subr.mxu0 0.0
    %3942 = vmatpush1.msra.mxu0 0.0
    %3943 = vmatprep.subr.mxu0 0.0
    %3944 = vmatpush1.msra.mxu0 0.0
    %3945 = vmatprep.subr.mxu0 0.0
    %3946 = vmatpush1.msra.mxu0 0.0
    %3947 = vmatprep.subr.mxu0 0.0
    %3948 = vmatpush1.msra.mxu0 0.0
    %3949 = vmatprep.subr.mxu0 0.0
    %3950 = vmatpush1.msra.mxu0 0.0
    %3951 = vmatprep.subr.mxu0 0.0
    %3952 = vmatpush1.msra.mxu0 0.0
    %3953 = vmatprep.subr.mxu0 0.0
    %3954 = vmatpush1.msra.mxu0 0.0
    %3955 = vmatprep.subr.mxu0 0.0
    %3956 = vmatpush1.msra.mxu0 0.0
    %3957 = vmatprep.subr.mxu0 0.0
    %3958 = vmatpush1.msra.mxu0 0.0
    %3959 = vmatprep.mubr.f32.mxu0 0.0
    %3960 = vmatmul.mubr.f32.gmra.mrb[0].mxu0 %v3893
    %v3961 = vpop.f32.mrb[0].mxu0
    %v3962 = vadd.f32 0.0, %v3961
    %v3963 = vpop.f32.mrb[0].mxu0
    %v3964 = vadd.f32 0.0, %v3963
    %3965 = vdwg.mxu0
    %v3966 = vld [vmem:[%s8] sm:$0x1]
    %v3968 = vlaneseq
    %v3969 = vshrl.u32 %v3968, 7
    %v3970 = vsub.s32 0, %v3969
    %v3971 = vrot.slane %v3966, %v3970
    %vm3973 = vcmask 261120
    %v3975 = vsel %vm3973, %v3964, 0
    %3977 = vmatprep.subr.mxu0 0.0
    %3978 = vmatpush1.msra.mxu0 %v3872
    %3979 = vmatprep.subr.mxu0 0.0
    %3980 = vmatpush1.msra.mxu0 %v3873
    %3981 = vmatprep.subr.mxu0 0.0
    %3982 = vmatpush1.msra.mxu0 %v3874
    %3983 = vmatprep.subr.mxu0 0.0
    %3984 = vmatpush1.msra.mxu0 %v3875
    %3985 = vmatprep.subr.mxu0 0.0
    %3986 = vmatpush1.msra.mxu0 %v3876
    %3987 = vmatprep.subr.mxu0 0.0
    %3988 = vmatpush1.msra.mxu0 %v3877
    %3989 = vmatprep.subr.mxu0 0.0
    %3990 = vmatpush1.msra.mxu0 %v3878
    %3991 = vmatprep.subr.mxu0 0.0
    %3992 = vmatpush1.msra.mxu0 %v3879
    %3993 = vmatprep.subr.mxu0 0.0
    %3994 = vmatpush1.msra.mxu0 %v3880
    %3995 = vmatprep.subr.mxu0 0.0
    %3996 = vmatpush1.msra.mxu0 %v3881
    %3997 = vmatprep.subr.mxu0 0.0
    %3998 = vmatpush1.msra.mxu0 %v3882
    %3999 = vmatprep.subr.mxu0 0.0
    %4000 = vmatpush1.msra.mxu0 %v3883
    %4001 = vmatprep.subr.mxu0 0.0
    %4002 = vmatpush1.msra.mxu0 %v3884
    %4003 = vmatprep.subr.mxu0 0.0
    %4004 = vmatpush1.msra.mxu0 %v3885
    %4005 = vmatprep.subr.mxu0 0.0
    %4006 = vmatpush1.msra.mxu0 %v3886
    %4007 = vmatprep.subr.mxu0 0.0
    %4008 = vmatpush1.msra.mxu0 %v3887
    %4009 = vmatprep.subr.mxu0 0.0
    %4010 = vmatpush1.msra.mxu0 %v3888
    %4011 = vmatprep.subr.mxu0 0.0
    %4012 = vmatpush1.msra.mxu0 %v3889
    %4013 = vmatprep.subr.mxu0 0.0
    %4014 = vmatpush1.msra.mxu0 %v3890
    %4015 = vmatprep.subr.mxu0 0.0
    %4016 = vmatpush1.msra.mxu0 %v3891
    %4017 = vmatprep.subr.mxu0 0.0
    %4018 = vmatpush1.msra.mxu0 0.0
    %4019 = vmatprep.subr.mxu0 0.0
    %4020 = vmatpush1.msra.mxu0 0.0
    %4021 = vmatprep.subr.mxu0 0.0
    %4022 = vmatpush1.msra.mxu0 0.0
    %4023 = vmatprep.subr.mxu0 0.0
    %4024 = vmatpush1.msra.mxu0 0.0
    %4025 = vmatprep.subr.mxu0 0.0
    %4026 = vmatpush1.msra.mxu0 0.0
    %4027 = vmatprep.subr.mxu0 0.0
    %4028 = vmatpush1.msra.mxu0 0.0
    %4029 = vmatprep.subr.mxu0 0.0
    %4030 = vmatpush1.msra.mxu0 0.0
    %4031 = vmatprep.subr.mxu0 0.0
    %4032 = vmatpush1.msra.mxu0 0.0
    %4033 = vmatprep.subr.mxu0 0.0
    %4034 = vmatpush1.msra.mxu0 0.0
    %4035 = vmatprep.subr.mxu0 0.0
    %4036 = vmatpush1.msra.mxu0 0.0
    %4037 = vmatprep.subr.mxu0 0.0
    %4038 = vmatpush1.msra.mxu0 0.0
    %4039 = vmatprep.subr.mxu0 0.0
    %4040 = vmatpush1.msra.mxu0 0.0
    %4041 = vmatprep.mubr.f32.mxu0 %v3975
    %4042 = vmatmul.mubr.f32.gmra.mrb[0].mxu0 %v3962
    %v4043 = vpop.f32.mrb[0].mxu0
    %v4044 = vadd.f32 %v3971, %v4043
    %v4045 = vpop.f32.mrb[0].mxu0
    %4046 = vdwg.mxu0
    %4047 = vst [vmem:[#allocation4] sm:$0x3] %v4044
    // Predicated region
    $region38: #{stagernet_forward.1} parent=1 // pred_check
      _
    $region39: #{stagernet_forward.1} parent=1 // pred_check_branch
      %4049 = sbr.rel (0) target = $region41
    $region40: #{stagernet_forward.1} parent=1 // pred_region
      %s4051 = ssub.s32 32, 32
      %4052 = vsyncadd [#allocation5], %s4051
      %s4054 = sshll.u32 [#allocation4], 4
      %s4055 = int_to_ptr.vmem [resolvable:$true] %s4054
      %4057 = dma.vmem_to_hbm [thread:$0]  %s4055, 32, %s9, [#allocation5]
    $region41: #{stagernet_forward.1} parent=1 // pred_fallthru
      _
    // Predicated region
    $region42: #{stagernet_forward.1} parent=1 // pred_check
      _
    $region43: #{stagernet_forward.1} parent=1 // pred_check_branch
      %4059 = sbr.rel (0) target = $region45
    $region44: #{stagernet_forward.1} parent=1 // pred_region
      %4060 = dma.done [#allocation5], 32
    $region45: #{stagernet_forward.1} parent=1 // pred_fallthru
      _
    %4061 = vsyncpa [#allocation5], 1

</llo_original>
